<compile_context>
chip_gen: v7x
topology: tpu7x:2x2x1
jax: 0.10.0
libtpu: 0.0.40
codegen_flags: <defaults>
</compile_context>

<pallas_src>
import functools

import jax
import jax.numpy as jnp
from jax.experimental import pallas as pl

# ---- scaled-down BERT config (bert-base shapes replaced by small synthetic ones) ----
VOCAB = 100
HIDDEN = 32
NUM_HEADS = 2
HEAD_DIM = HIDDEN // NUM_HEADS
INTERMEDIATE = 64
NUM_LAYERS = 2
MAX_POS = 16
NUM_CLASSES = 1
LN_EPS = 1e-12


# --------------------------- in-kernel helpers ---------------------------

def _ln(x, g, b, eps):
    """LayerNorm over the last (lane) axis. x:(M,H) g,b:(1,H)."""
    mu = jnp.mean(x, axis=-1, keepdims=True)
    xc = x - mu
    var = jnp.mean(xc * xc, axis=-1, keepdims=True)
    return xc * jax.lax.rsqrt(var + eps) * g + b


def _gelu(y):
    # TODO(synk): HF BERT default 'gelu' is the exact erf form; tanh approximation kept
    # (tiny numeric drift, EUP tanh overlaps the following matmul for free).
    return 0.5 * y * (1.0 + jnp.tanh(0.7978845608028654 * (y + 0.044715 * y * y * y)))


# --------------------------- the single fused kernel ---------------------------

def _forward_kernel(emb_ref, mask_ref, emb_ln_ref,
                    w_qkv_ref, b_qkv_ref, w_o_ref,
                    w_i_ref, b_i_ref, w_o2_ref, vec_ref,
                    pool_w_ref, pool_b_ref, fc_w_ref, fc_b_ref,
                    o_ref,
                    *, num_layers, num_heads, head_dim, batch, seq, eps):
    """Whole SentimentClassifier forward on one (B*S, H) slab.

    emb:(B*S,H) mask:(B*S,B*S) additive block-diag; emb_ln:(2,H) [gamma;beta];
    w_qkv:(L*3*NH,H,Dh) b_qkv:(L*3*NH,1,Dh) w_o:(L*NH,Dh,H);
    w_i:(L,H,I) b_i:(L,1,I) w_o2:(L,I,H);
    vec:(L,8,H) rows=[bo, ln1_g, ln1_b, bo2, ln2_g, ln2_b, pad, pad];
    pool_w:(H,H) pool_b:(1,H) fc_w:(H,C) fc_b:(1,C); o:(B,C).
    """
    scale = 1.0 / (head_dim ** 0.5)

    # -- embedding LayerNorm --
    emb_ln = emb_ln_ref[...]                                       # (2, H)
    x = _ln(emb_ref[...].astype(jnp.float32), emb_ln[0:1], emb_ln[1:2], eps)

    amask = mask_ref[...]                                          # (B*S, B*S) additive

    for l in range(num_layers):
        vec = vec_ref[l]                                           # (8, H)
        bo, ln1_g, ln1_b = vec[0:1], vec[1:2], vec[2:3]
        bo2, ln2_g, ln2_b = vec[3:4], vec[4:5], vec[5:6]

        # ---- multi-head self-attention; batch handled by the block-diag mask ----
        attn = None
        for h in range(num_heads):
            qi = (l * 3 + 0) * num_heads + h
            ki = (l * 3 + 1) * num_heads + h
            vi = (l * 3 + 2) * num_heads + h
            q = jnp.dot(x, w_qkv_ref[qi], preferred_element_type=jnp.float32) + b_qkv_ref[qi]
            k = jnp.dot(x, w_qkv_ref[ki], preferred_element_type=jnp.float32) + b_qkv_ref[ki]
            v = jnp.dot(x, w_qkv_ref[vi], preferred_element_type=jnp.float32) + b_qkv_ref[vi]
            s = jnp.einsum("qd,kd->qk", q, k,
                           preferred_element_type=jnp.float32) * scale + amask
            s = s - jnp.max(s, axis=-1, keepdims=True)
            p = jnp.exp(s)
            p = p * pl.reciprocal(jnp.sum(p, axis=-1, keepdims=True), approx=True)
            ctx = jnp.dot(p, v, preferred_element_type=jnp.float32)            # (M, Dh)
            part = jnp.dot(ctx, w_o_ref[l * num_heads + h],
                           preferred_element_type=jnp.float32)                 # (M, H)
            attn = part if attn is None else attn + part
        attn = attn + bo

        # ---- residual + LayerNorm 1 ----
        h1 = _ln(x + attn, ln1_g, ln1_b, eps)

        # ---- FFN (wi + GELU + wo2), intermediate never leaves VMEM ----
        ffn = jnp.dot(h1, w_i_ref[l], preferred_element_type=jnp.float32) + b_i_ref[l]
        ffn = _gelu(ffn)
        ffn = jnp.dot(ffn, w_o2_ref[l], preferred_element_type=jnp.float32) + bo2

        # ---- residual + LayerNorm 2 ----
        x = _ln(h1 + ffn, ln2_g, ln2_b, eps)

    # ---- pooler (Linear + tanh) + Dropout(identity @ eval) + classifier ----
    # Computed on the full slab (keeps M=B*S aligned matmuls); only [CLS] rows are stored.
    pooled = jnp.tanh(jnp.dot(x, pool_w_ref[...], preferred_element_type=jnp.float32)
                      + pool_b_ref[...])
    logits = jnp.dot(pooled, fc_w_ref[...], preferred_element_type=jnp.float32) + fc_b_ref[...]
    for b in range(batch):
        o_ref[b:b + 1, :] = logits[b * seq:b * seq + 1, :].astype(o_ref.dtype)


# --------------------------- parameters (packed slabs) ---------------------------

def init_params(key):
    def w(k, shape):
        return 0.02 * jax.random.normal(k, shape, dtype=jnp.float32)

    keys = iter(jax.random.split(key, 64))
    zeros_h = jnp.zeros((HIDDEN,), jnp.float32)
    ones_h = jnp.ones((HIDDEN,), jnp.float32)

    w_qkv, b_qkv, w_o, w_i, b_i, w_o2, vec = [], [], [], [], [], [], []
    for _ in range(NUM_LAYERS):
        wq = w(next(keys), (HIDDEN, HIDDEN))
        wk = w(next(keys), (HIDDEN, HIDDEN))
        wv = w(next(keys), (HIDDEN, HIDDEN))
        wo = w(next(keys), (HIDDEN, HIDDEN))
        # pre-split per head: Q/K/V by columns, output projection by rows
        for mat in (wq, wk, wv):
            for h in range(NUM_HEADS):
                w_qkv.append(mat[:, h * HEAD_DIM:(h + 1) * HEAD_DIM])
                b_qkv.append(jnp.zeros((1, HEAD_DIM), jnp.float32))
        for h in range(NUM_HEADS):
            w_o.append(wo[h * HEAD_DIM:(h + 1) * HEAD_DIM, :])
        w_i.append(w(next(keys), (HIDDEN, INTERMEDIATE)))
        b_i.append(jnp.zeros((1, INTERMEDIATE), jnp.float32))
        w_o2.append(w(next(keys), (INTERMEDIATE, HIDDEN)))
        # packed bias/LN slab: [bo, ln1_g, ln1_b, bo2, ln2_g, ln2_b, pad, pad]
        vec.append(jnp.stack([zeros_h, ones_h, zeros_h,
                              zeros_h, ones_h, zeros_h,
                              zeros_h, zeros_h], axis=0))

    return {
        "word_emb": w(next(keys), (VOCAB, HIDDEN)),
        "pos_emb": w(next(keys), (MAX_POS, HIDDEN)),
        "type_emb": w(next(keys), (2, HIDDEN)),
        "emb_ln": jnp.stack([ones_h, zeros_h], axis=0),            # (2, H): gamma; beta
        "w_qkv": jnp.stack(w_qkv, axis=0),                         # (L*3*NH, H, Dh)
        "b_qkv": jnp.stack(b_qkv, axis=0),                         # (L*3*NH, 1, Dh)
        "w_o": jnp.stack(w_o, axis=0),                             # (L*NH, Dh, H)
        "w_i": jnp.stack(w_i, axis=0),                             # (L, H, I)
        "b_i": jnp.stack(b_i, axis=0),                             # (L, 1, I)
        "w_o2": jnp.stack(w_o2, axis=0),                           # (L, I, H)
        "vec": jnp.stack(vec, axis=0),                             # (L, 8, H)
        "pool_w": w(next(keys), (HIDDEN, HIDDEN)),
        "pool_b": jnp.zeros((1, HIDDEN), jnp.float32),
        "fc_w": w(next(keys), (HIDDEN, NUM_CLASSES)),
        "fc_b": jnp.zeros((1, NUM_CLASSES), jnp.float32),
    }


# --------------------------- forward pass ---------------------------

def sentiment_classifier_forward(params, input_ids, attention_mask):
    B, S = input_ids.shape

    # Embedding gathers stay in plain JAX (glue); everything after is ONE Pallas call.
    emb = (params["word_emb"][input_ids]
           + params["pos_emb"][None, :S, :]
           + params["type_emb"][0][None, None, :]).reshape(B * S, HIDDEN)

    # Block-diagonal additive attention mask (B*S, B*S):
    # 0 where query/key belong to the same batch element AND the key is attended,
    # -10000 otherwise (reproduces per-batch attention exactly, no per-batch loop).
    key_ok = attention_mask.astype(jnp.float32)                       # (B, S)
    same_b = jnp.eye(B, dtype=jnp.float32)                            # (B, B)
    allow = same_b[:, None, :, None] * key_ok[None, None, :, :]       # (B, 1, B, S)
    allow = jnp.broadcast_to(allow, (B, S, B, S)).reshape(B * S, B * S)
    add_mask = (1.0 - allow) * -10000.0

    kernel = functools.partial(
        _forward_kernel, num_layers=NUM_LAYERS, num_heads=NUM_HEADS,
        head_dim=HEAD_DIM, batch=B, seq=S, eps=LN_EPS)

    # Single pallas_call, no grid, single TensorCore: all inputs are whole-array
    # VMEM-resident blocks (<100 KiB total).
    return pl.pallas_call(
        kernel,
        out_shape=jax.ShapeDtypeStruct((B, NUM_CLASSES), jnp.float32),
    )(emb, add_mask, params["emb_ln"],
      params["w_qkv"], params["b_qkv"], params["w_o"],
      params["w_i"], params["b_i"], params["w_o2"], params["vec"],
      params["pool_w"], params["pool_b"], params["fc_w"], params["fc_b"])


# --------------------------- main ---------------------------

if __name__ == "__main__":
    key = jax.random.PRNGKey(0)
    pkey, ikey = jax.random.split(key)
    params = init_params(pkey)

    B, S = 2, 8
    input_ids = jax.random.randint(ikey, (B, S), 0, VOCAB, dtype=jnp.int32)
    attention_mask = jnp.array([[1, 1, 1, 1, 1, 1, 1, 1],
                                [1, 1, 1, 1, 1, 0, 0, 0]], dtype=jnp.int32)

    fwd = jax.jit(sentiment_classifier_forward)
    logits = fwd(params, input_ids, attention_mask)
    jax.block_until_ready(logits)
    assert logits.shape == (B, NUM_CLASSES)
    assert bool(jnp.all(jnp.isfinite(logits)))
    print("KERNEL_OK")
</pallas_src>

<mosaic_0001>
module attributes {stable_mosaic.version = 11 : i64} {
  func.func @_forward_kernel(%arg0: memref<16x32xf32, #tpu.memory_space<vmem>>, %arg1: memref<16x16xf32, #tpu.memory_space<vmem>>, %arg2: memref<2x32xf32, #tpu.memory_space<vmem>>, %arg3: memref<12x32x16xf32, #tpu.memory_space<vmem>>, %arg4: memref<12x1x16xf32, #tpu.memory_space<vmem>>, %arg5: memref<4x16x32xf32, #tpu.memory_space<vmem>>, %arg6: memref<2x32x64xf32, #tpu.memory_space<vmem>>, %arg7: memref<2x1x64xf32, #tpu.memory_space<vmem>>, %arg8: memref<2x64x32xf32, #tpu.memory_space<vmem>>, %arg9: memref<2x8x32xf32, #tpu.memory_space<vmem>>, %arg10: memref<32x32xf32, #tpu.memory_space<vmem>>, %arg11: memref<1x32xf32, #tpu.memory_space<vmem>>, %arg12: memref<32x1xf32, #tpu.memory_space<vmem>>, %arg13: memref<1x1xf32, #tpu.memory_space<vmem>>, %arg14: memref<2x1xf32, #tpu.memory_space<vmem>>) attributes {dimension_semantics = [], scalar_prefetch = 0 : i64, scratch_operands = 0 : i64, tpu.core_type = #tpu.core_type<tc>} {
    %c0 = arith.constant 0 : index
    %c0_0 = arith.constant 0 : index
    %0 = vector.load %arg2[%c0, %c0_0] : memref<2x32xf32, #tpu.memory_space<vmem>>, vector<2x32xf32>
    %c0_1 = arith.constant 0 : index
    %c0_2 = arith.constant 0 : index
    %1 = vector.load %arg0[%c0_1, %c0_2] : memref<16x32xf32, #tpu.memory_space<vmem>>, vector<16x32xf32>
    %2 = vector.extract_strided_slice %0 {offsets = [0, 0], sizes = [1, 32], strides = [1, 1]} : vector<2x32xf32> to vector<1x32xf32>
    %3 = vector.extract_strided_slice %0 {offsets = [1, 0], sizes = [1, 32], strides = [1, 1]} : vector<2x32xf32> to vector<1x32xf32>
    %cst = arith.constant dense<0.000000e+00> : vector<16xf32>
    %4 = vector.multi_reduction <add>, %1, %cst [1] : vector<16x32xf32> to vector<16xf32>
    %5 = vector.shape_cast %4 : vector<16xf32> to vector<16x1xf32>
    %cst_3 = arith.constant 3.200000e+01 : f32
    %6 = vector.broadcast %cst_3 : f32 to vector<16x1xf32>
    %7 = arith.divf %5, %6 : vector<16x1xf32>
    %8 = vector.broadcast %7 : vector<16x1xf32> to vector<16x32xf32>
    %9 = arith.subf %1, %8 : vector<16x32xf32>
    %10 = arith.mulf %9, %9 : vector<16x32xf32>
    %cst_4 = arith.constant dense<0.000000e+00> : vector<16xf32>
    %11 = vector.multi_reduction <add>, %10, %cst_4 [1] : vector<16x32xf32> to vector<16xf32>
    %12 = vector.shape_cast %11 : vector<16xf32> to vector<16x1xf32>
    %cst_5 = arith.constant 3.200000e+01 : f32
    %13 = vector.broadcast %cst_5 : f32 to vector<16x1xf32>
    %14 = arith.divf %12, %13 : vector<16x1xf32>
    %cst_6 = arith.constant 9.99999996E-13 : f32
    %15 = vector.broadcast %cst_6 : f32 to vector<16x1xf32>
    %16 = arith.addf %14, %15 : vector<16x1xf32>
    %17 = math.rsqrt %16 : vector<16x1xf32>
    %18 = vector.broadcast %17 : vector<16x1xf32> to vector<16x32xf32>
    %19 = arith.mulf %9, %18 : vector<16x32xf32>
    %20 = vector.broadcast %2 : vector<1x32xf32> to vector<16x32xf32>
    %21 = arith.mulf %19, %20 : vector<16x32xf32>
    %22 = vector.broadcast %3 : vector<1x32xf32> to vector<16x32xf32>
    %23 = arith.addf %21, %22 : vector<16x32xf32>
    %c0_7 = arith.constant 0 : index
    %c0_8 = arith.constant 0 : index
    %24 = vector.load %arg1[%c0_7, %c0_8] : memref<16x16xf32, #tpu.memory_space<vmem>>, vector<16x16xf32>
    %c0_9 = arith.constant 0 : index
    %c0_10 = arith.constant 0 : index
    %c0_11 = arith.constant 0 : index
    %25 = vector.load %arg9[%c0_9, %c0_10, %c0_11] : memref<2x8x32xf32, #tpu.memory_space<vmem>>, vector<1x8x32xf32>
    %26 = vector.shape_cast %25 : vector<1x8x32xf32> to vector<8x32xf32>
    %27 = vector.extract_strided_slice %26 {offsets = [0, 0], sizes = [1, 32], strides = [1, 1]} : vector<8x32xf32> to vector<1x32xf32>
    %28 = vector.extract_strided_slice %26 {offsets = [1, 0], sizes = [1, 32], strides = [1, 1]} : vector<8x32xf32> to vector<1x32xf32>
    %29 = vector.extract_strided_slice %26 {offsets = [2, 0], sizes = [1, 32], strides = [1, 1]} : vector<8x32xf32> to vector<1x32xf32>
    %30 = vector.extract_strided_slice %26 {offsets = [3, 0], sizes = [1, 32], strides = [1, 1]} : vector<8x32xf32> to vector<1x32xf32>
    %31 = vector.extract_strided_slice %26 {offsets = [4, 0], sizes = [1, 32], strides = [1, 1]} : vector<8x32xf32> to vector<1x32xf32>
    %32 = vector.extract_strided_slice %26 {offsets = [5, 0], sizes = [1, 32], strides = [1, 1]} : vector<8x32xf32> to vector<1x32xf32>
    %c0_12 = arith.constant 0 : index
    %c0_13 = arith.constant 0 : index
    %c0_14 = arith.constant 0 : index
    %33 = vector.load %arg3[%c0_12, %c0_13, %c0_14] : memref<12x32x16xf32, #tpu.memory_space<vmem>>, vector<1x32x16xf32>
    %34 = vector.shape_cast %33 : vector<1x32x16xf32> to vector<32x16xf32>
    %cst_15 = arith.constant dense<0.000000e+00> : vector<16x16xf32>
    %35 = tpu.matmul %23, %34, %cst_15 {dimension_numbers = #tpu.dot_dimension_numbers<[1], [0], [0], [1], [0, 0, 1, 1], [], []>} : vector<16x32xf32>, vector<32x16xf32>, vector<16x16xf32> -> vector<16x16xf32>
    %c0_16 = arith.constant 0 : index
    %c0_17 = arith.constant 0 : index
    %c0_18 = arith.constant 0 : index
    %36 = vector.load %arg4[%c0_16, %c0_17, %c0_18] : memref<12x1x16xf32, #tpu.memory_space<vmem>>, vector<1x1x16xf32>
    %37 = vector.shape_cast %36 : vector<1x1x16xf32> to vector<1x16xf32>
    %38 = vector.broadcast %37 : vector<1x16xf32> to vector<16x16xf32>
    %39 = arith.addf %35, %38 : vector<16x16xf32>
    %c2 = arith.constant 2 : index
    %c0_19 = arith.constant 0 : index
    %c0_20 = arith.constant 0 : index
    %40 = vector.load %arg3[%c2, %c0_19, %c0_20] : memref<12x32x16xf32, #tpu.memory_space<vmem>>, vector<1x32x16xf32>
    %41 = vector.shape_cast %40 : vector<1x32x16xf32> to vector<32x16xf32>
    %cst_21 = arith.constant dense<0.000000e+00> : vector<16x16xf32>
    %42 = tpu.matmul %23, %41, %cst_21 {dimension_numbers = #tpu.dot_dimension_numbers<[1], [0], [0], [1], [0, 0, 1, 1], [], []>} : vector<16x32xf32>, vector<32x16xf32>, vector<16x16xf32> -> vector<16x16xf32>
    %c2_22 = arith.constant 2 : index
    %c0_23 = arith.constant 0 : index
    %c0_24 = arith.constant 0 : index
    %43 = vector.load %arg4[%c2_22, %c0_23, %c0_24] : memref<12x1x16xf32, #tpu.memory_space<vmem>>, vector<1x1x16xf32>
    %44 = vector.shape_cast %43 : vector<1x1x16xf32> to vector<1x16xf32>
    %45 = vector.broadcast %44 : vector<1x16xf32> to vector<16x16xf32>
    %46 = arith.addf %42, %45 : vector<16x16xf32>
    %c4 = arith.constant 4 : index
    %c0_25 = arith.constant 0 : index
    %c0_26 = arith.constant 0 : index
    %47 = vector.load %arg3[%c4, %c0_25, %c0_26] : memref<12x32x16xf32, #tpu.memory_space<vmem>>, vector<1x32x16xf32>
    %48 = vector.shape_cast %47 : vector<1x32x16xf32> to vector<32x16xf32>
    %cst_27 = arith.constant dense<0.000000e+00> : vector<16x16xf32>
    %49 = tpu.matmul %23, %48, %cst_27 {dimension_numbers = #tpu.dot_dimension_numbers<[1], [0], [0], [1], [0, 0, 1, 1], [], []>} : vector<16x32xf32>, vector<32x16xf32>, vector<16x16xf32> -> vector<16x16xf32>
    %c4_28 = arith.constant 4 : index
    %c0_29 = arith.constant 0 : index
    %c0_30 = arith.constant 0 : index
    %50 = vector.load %arg4[%c4_28, %c0_29, %c0_30] : memref<12x1x16xf32, #tpu.memory_space<vmem>>, vector<1x1x16xf32>
    %51 = vector.shape_cast %50 : vector<1x1x16xf32> to vector<1x16xf32>
    %52 = vector.broadcast %51 : vector<1x16xf32> to vector<16x16xf32>
    %53 = arith.addf %49, %52 : vector<16x16xf32>
    "tpu.trace_start"() <{level = 10 : i32, message = "qd,kd->qk"}> : () -> ()
    %cst_31 = arith.constant dense<0.000000e+00> : vector<16x16xf32>
    %54 = tpu.matmul %39, %46, %cst_31 {dimension_numbers = #tpu.dot_dimension_numbers<[1], [1], [0], [0], [0, 0, 1, 0], [], []>} : vector<16x16xf32>, vector<16x16xf32>, vector<16x16xf32> -> vector<16x16xf32>
    "tpu.trace_stop"() : () -> ()
    %cst_32 = arith.constant 2.500000e-01 : f32
    %55 = vector.broadcast %cst_32 : f32 to vector<16x16xf32>
    %56 = arith.mulf %54, %55 : vector<16x16xf32>
    %57 = arith.addf %56, %24 : vector<16x16xf32>
    %cst_33 = arith.constant dense<0xFF800000> : vector<16xf32>
    %58 = vector.multi_reduction <maximumf>, %57, %cst_33 [1] : vector<16x16xf32> to vector<16xf32>
    %59 = vector.shape_cast %58 : vector<16xf32> to vector<16x1xf32>
    %60 = vector.broadcast %59 : vector<16x1xf32> to vector<16x16xf32>
    %61 = arith.subf %57, %60 : vector<16x16xf32>
    %62 = math.exp %61 : vector<16x16xf32>
    %cst_34 = arith.constant dense<0.000000e+00> : vector<16xf32>
    %63 = vector.multi_reduction <add>, %62, %cst_34 [1] : vector<16x16xf32> to vector<16xf32>
    %64 = vector.shape_cast %63 : vector<16xf32> to vector<16x1xf32>
    %65 = tpu.reciprocal %64 {approx = true} : vector<16x1xf32> -> vector<16x1xf32>
    %66 = vector.broadcast %65 : vector<16x1xf32> to vector<16x16xf32>
    %67 = arith.mulf %62, %66 : vector<16x16xf32>
    %cst_35 = arith.constant dense<0.000000e+00> : vector<16x16xf32>
    %68 = tpu.matmul %67, %53, %cst_35 {dimension_numbers = #tpu.dot_dimension_numbers<[1], [0], [0], [1], [0, 0, 1, 1], [], []>} : vector<16x16xf32>, vector<16x16xf32>, vector<16x16xf32> -> vector<16x16xf32>
    %c0_36 = arith.constant 0 : index
    %c0_37 = arith.constant 0 : index
    %c0_38 = arith.constant 0 : index
    %69 = vector.load %arg5[%c0_36, %c0_37, %c0_38] : memref<4x16x32xf32, #tpu.memory_space<vmem>>, vector<1x16x32xf32>
    %70 = vector.shape_cast %69 : vector<1x16x32xf32> to vector<16x32xf32>
    %cst_39 = arith.constant dense<0.000000e+00> : vector<16x32xf32>
    %71 = tpu.matmul %68, %70, %cst_39 {dimension_numbers = #tpu.dot_dimension_numbers<[1], [0], [0], [1], [0, 0, 1, 1], [], []>} : vector<16x16xf32>, vector<16x32xf32>, vector<16x32xf32> -> vector<16x32xf32>
    %c1 = arith.constant 1 : index
    %c0_40 = arith.constant 0 : index
    %c0_41 = arith.constant 0 : index
    %72 = vector.load %arg3[%c1, %c0_40, %c0_41] : memref<12x32x16xf32, #tpu.memory_space<vmem>>, vector<1x32x16xf32>
    %73 = vector.shape_cast %72 : vector<1x32x16xf32> to vector<32x16xf32>
    %cst_42 = arith.constant dense<0.000000e+00> : vector<16x16xf32>
    %74 = tpu.matmul %23, %73, %cst_42 {dimension_numbers = #tpu.dot_dimension_numbers<[1], [0], [0], [1], [0, 0, 1, 1], [], []>} : vector<16x32xf32>, vector<32x16xf32>, vector<16x16xf32> -> vector<16x16xf32>
    %c1_43 = arith.constant 1 : index
    %c0_44 = arith.constant 0 : index
    %c0_45 = arith.constant 0 : index
    %75 = vector.load %arg4[%c1_43, %c0_44, %c0_45] : memref<12x1x16xf32, #tpu.memory_space<vmem>>, vector<1x1x16xf32>
    %76 = vector.shape_cast %75 : vector<1x1x16xf32> to vector<1x16xf32>
    %77 = vector.broadcast %76 : vector<1x16xf32> to vector<16x16xf32>
    %78 = arith.addf %74, %77 : vector<16x16xf32>
    %c3 = arith.constant 3 : index
    %c0_46 = arith.constant 0 : index
    %c0_47 = arith.constant 0 : index
    %79 = vector.load %arg3[%c3, %c0_46, %c0_47] : memref<12x32x16xf32, #tpu.memory_space<vmem>>, vector<1x32x16xf32>
    %80 = vector.shape_cast %79 : vector<1x32x16xf32> to vector<32x16xf32>
    %cst_48 = arith.constant dense<0.000000e+00> : vector<16x16xf32>
    %81 = tpu.matmul %23, %80, %cst_48 {dimension_numbers = #tpu.dot_dimension_numbers<[1], [0], [0], [1], [0, 0, 1, 1], [], []>} : vector<16x32xf32>, vector<32x16xf32>, vector<16x16xf32> -> vector<16x16xf32>
    %c3_49 = arith.constant 3 : index
    %c0_50 = arith.constant 0 : index
    %c0_51 = arith.constant 0 : index
    %82 = vector.load %arg4[%c3_49, %c0_50, %c0_51] : memref<12x1x16xf32, #tpu.memory_space<vmem>>, vector<1x1x16xf32>
    %83 = vector.shape_cast %82 : vector<1x1x16xf32> to vector<1x16xf32>
    %84 = vector.broadcast %83 : vector<1x16xf32> to vector<16x16xf32>
    %85 = arith.addf %81, %84 : vector<16x16xf32>
    %c5 = arith.constant 5 : index
    %c0_52 = arith.constant 0 : index
    %c0_53 = arith.constant 0 : index
    %86 = vector.load %arg3[%c5, %c0_52, %c0_53] : memref<12x32x16xf32, #tpu.memory_space<vmem>>, vector<1x32x16xf32>
    %87 = vector.shape_cast %86 : vector<1x32x16xf32> to vector<32x16xf32>
    %cst_54 = arith.constant dense<0.000000e+00> : vector<16x16xf32>
    %88 = tpu.matmul %23, %87, %cst_54 {dimension_numbers = #tpu.dot_dimension_numbers<[1], [0], [0], [1], [0, 0, 1, 1], [], []>} : vector<16x32xf32>, vector<32x16xf32>, vector<16x16xf32> -> vector<16x16xf32>
    %c5_55 = arith.constant 5 : index
    %c0_56 = arith.constant 0 : index
    %c0_57 = arith.constant 0 : index
    %89 = vector.load %arg4[%c5_55, %c0_56, %c0_57] : memref<12x1x16xf32, #tpu.memory_space<vmem>>, vector<1x1x16xf32>
    %90 = vector.shape_cast %89 : vector<1x1x16xf32> to vector<1x16xf32>
    %91 = vector.broadcast %90 : vector<1x16xf32> to vector<16x16xf32>
    %92 = arith.addf %88, %91 : vector<16x16xf32>
    "tpu.trace_start"() <{level = 10 : i32, message = "qd,kd->qk"}> : () -> ()
    %cst_58 = arith.constant dense<0.000000e+00> : vector<16x16xf32>
    %93 = tpu.matmul %78, %85, %cst_58 {dimension_numbers = #tpu.dot_dimension_numbers<[1], [1], [0], [0], [0, 0, 1, 0], [], []>} : vector<16x16xf32>, vector<16x16xf32>, vector<16x16xf32> -> vector<16x16xf32>
    "tpu.trace_stop"() : () -> ()
    %cst_59 = arith.constant 2.500000e-01 : f32
    %94 = vector.broadcast %cst_59 : f32 to vector<16x16xf32>
    %95 = arith.mulf %93, %94 : vector<16x16xf32>
    %96 = arith.addf %95, %24 : vector<16x16xf32>
    %cst_60 = arith.constant dense<0xFF800000> : vector<16xf32>
    %97 = vector.multi_reduction <maximumf>, %96, %cst_60 [1] : vector<16x16xf32> to vector<16xf32>
    %98 = vector.shape_cast %97 : vector<16xf32> to vector<16x1xf32>
    %99 = vector.broadcast %98 : vector<16x1xf32> to vector<16x16xf32>
    %100 = arith.subf %96, %99 : vector<16x16xf32>
    %101 = math.exp %100 : vector<16x16xf32>
    %cst_61 = arith.constant dense<0.000000e+00> : vector<16xf32>
    %102 = vector.multi_reduction <add>, %101, %cst_61 [1] : vector<16x16xf32> to vector<16xf32>
    %103 = vector.shape_cast %102 : vector<16xf32> to vector<16x1xf32>
    %104 = tpu.reciprocal %103 {approx = true} : vector<16x1xf32> -> vector<16x1xf32>
    %105 = vector.broadcast %104 : vector<16x1xf32> to vector<16x16xf32>
    %106 = arith.mulf %101, %105 : vector<16x16xf32>
    %cst_62 = arith.constant dense<0.000000e+00> : vector<16x16xf32>
    %107 = tpu.matmul %106, %92, %cst_62 {dimension_numbers = #tpu.dot_dimension_numbers<[1], [0], [0], [1], [0, 0, 1, 1], [], []>} : vector<16x16xf32>, vector<16x16xf32>, vector<16x16xf32> -> vector<16x16xf32>
    %c1_63 = arith.constant 1 : index
    %c0_64 = arith.constant 0 : index
    %c0_65 = arith.constant 0 : index
    %108 = vector.load %arg5[%c1_63, %c0_64, %c0_65] : memref<4x16x32xf32, #tpu.memory_space<vmem>>, vector<1x16x32xf32>
    %109 = vector.shape_cast %108 : vector<1x16x32xf32> to vector<16x32xf32>
    %cst_66 = arith.constant dense<0.000000e+00> : vector<16x32xf32>
    %110 = tpu.matmul %107, %109, %cst_66 {dimension_numbers = #tpu.dot_dimension_numbers<[1], [0], [0], [1], [0, 0, 1, 1], [], []>} : vector<16x16xf32>, vector<16x32xf32>, vector<16x32xf32> -> vector<16x32xf32>
    %111 = arith.addf %71, %110 : vector<16x32xf32>
    %112 = vector.broadcast %27 : vector<1x32xf32> to vector<16x32xf32>
    %113 = arith.addf %111, %112 : vector<16x32xf32>
    %114 = arith.addf %23, %113 : vector<16x32xf32>
    %cst_67 = arith.constant dense<0.000000e+00> : vector<16xf32>
    %115 = vector.multi_reduction <add>, %114, %cst_67 [1] : vector<16x32xf32> to vector<16xf32>
    %116 = vector.shape_cast %115 : vector<16xf32> to vector<16x1xf32>
    %cst_68 = arith.constant 3.200000e+01 : f32
    %117 = vector.broadcast %cst_68 : f32 to vector<16x1xf32>
    %118 = arith.divf %116, %117 : vector<16x1xf32>
    %119 = vector.broadcast %118 : vector<16x1xf32> to vector<16x32xf32>
    %120 = arith.subf %114, %119 : vector<16x32xf32>
    %121 = arith.mulf %120, %120 : vector<16x32xf32>
    %cst_69 = arith.constant dense<0.000000e+00> : vector<16xf32>
    %122 = vector.multi_reduction <add>, %121, %cst_69 [1] : vector<16x32xf32> to vector<16xf32>
    %123 = vector.shape_cast %122 : vector<16xf32> to vector<16x1xf32>
    %cst_70 = arith.constant 3.200000e+01 : f32
    %124 = vector.broadcast %cst_70 : f32 to vector<16x1xf32>
    %125 = arith.divf %123, %124 : vector<16x1xf32>
    %cst_71 = arith.constant 9.99999996E-13 : f32
    %126 = vector.broadcast %cst_71 : f32 to vector<16x1xf32>
    %127 = arith.addf %125, %126 : vector<16x1xf32>
    %128 = math.rsqrt %127 : vector<16x1xf32>
    %129 = vector.broadcast %128 : vector<16x1xf32> to vector<16x32xf32>
    %130 = arith.mulf %120, %129 : vector<16x32xf32>
    %131 = vector.broadcast %28 : vector<1x32xf32> to vector<16x32xf32>
    %132 = arith.mulf %130, %131 : vector<16x32xf32>
    %133 = vector.broadcast %29 : vector<1x32xf32> to vector<16x32xf32>
    %134 = arith.addf %132, %133 : vector<16x32xf32>
    %c0_72 = arith.constant 0 : index
    %c0_73 = arith.constant 0 : index
    %c0_74 = arith.constant 0 : index
    %135 = vector.load %arg6[%c0_72, %c0_73, %c0_74] : memref<2x32x64xf32, #tpu.memory_space<vmem>>, vector<1x32x64xf32>
    %136 = vector.shape_cast %135 : vector<1x32x64xf32> to vector<32x64xf32>
    %cst_75 = arith.constant dense<0.000000e+00> : vector<16x64xf32>
    %137 = tpu.matmul %134, %136, %cst_75 {dimension_numbers = #tpu.dot_dimension_numbers<[1], [0], [0], [1], [0, 0, 1, 1], [], []>} : vector<16x32xf32>, vector<32x64xf32>, vector<16x64xf32> -> vector<16x64xf32>
    %c0_76 = arith.constant 0 : index
    %c0_77 = arith.constant 0 : index
    %c0_78 = arith.constant 0 : index
    %138 = vector.load %arg7[%c0_76, %c0_77, %c0_78] : memref<2x1x64xf32, #tpu.memory_space<vmem>>, vector<1x1x64xf32>
    %139 = vector.shape_cast %138 : vector<1x1x64xf32> to vector<1x64xf32>
    %140 = vector.broadcast %139 : vector<1x64xf32> to vector<16x64xf32>
    %141 = arith.addf %137, %140 : vector<16x64xf32>
    %cst_79 = arith.constant 5.000000e-01 : f32
    %142 = vector.broadcast %cst_79 : f32 to vector<16x64xf32>
    %143 = arith.mulf %142, %141 : vector<16x64xf32>
    %cst_80 = arith.constant 4.471500e-02 : f32
    %144 = vector.broadcast %cst_80 : f32 to vector<16x64xf32>
    %145 = arith.mulf %144, %141 : vector<16x64xf32>
    %146 = arith.mulf %145, %141 : vector<16x64xf32>
    %147 = arith.mulf %146, %141 : vector<16x64xf32>
    %148 = arith.addf %141, %147 : vector<16x64xf32>
    %cst_81 = arith.constant 0.797884583 : f32
    %149 = vector.broadcast %cst_81 : f32 to vector<16x64xf32>
    %150 = arith.mulf %149, %148 : vector<16x64xf32>
    %151 = math.tanh %150 : vector<16x64xf32>
    %cst_82 = arith.constant 1.000000e+00 : f32
    %152 = vector.broadcast %cst_82 : f32 to vector<16x64xf32>
    %153 = arith.addf %152, %151 : vector<16x64xf32>
    %154 = arith.mulf %143, %153 : vector<16x64xf32>
    %c0_83 = arith.constant 0 : index
    %c0_84 = arith.constant 0 : index
    %c0_85 = arith.constant 0 : index
    %155 = vector.load %arg8[%c0_83, %c0_84, %c0_85] : memref<2x64x32xf32, #tpu.memory_space<vmem>>, vector<1x64x32xf32>
    %156 = vector.shape_cast %155 : vector<1x64x32xf32> to vector<64x32xf32>
    %cst_86 = arith.constant dense<0.000000e+00> : vector<16x32xf32>
    %157 = tpu.matmul %154, %156, %cst_86 {dimension_numbers = #tpu.dot_dimension_numbers<[1], [0], [0], [1], [0, 0, 1, 1], [], []>} : vector<16x64xf32>, vector<64x32xf32>, vector<16x32xf32> -> vector<16x32xf32>
    %158 = vector.broadcast %30 : vector<1x32xf32> to vector<16x32xf32>
    %159 = arith.addf %157, %158 : vector<16x32xf32>
    %160 = arith.addf %134, %159 : vector<16x32xf32>
    %cst_87 = arith.constant dense<0.000000e+00> : vector<16xf32>
    %161 = vector.multi_reduction <add>, %160, %cst_87 [1] : vector<16x32xf32> to vector<16xf32>
    %162 = vector.shape_cast %161 : vector<16xf32> to vector<16x1xf32>
    %cst_88 = arith.constant 3.200000e+01 : f32
    %163 = vector.broadcast %cst_88 : f32 to vector<16x1xf32>
    %164 = arith.divf %162, %163 : vector<16x1xf32>
    %165 = vector.broadcast %164 : vector<16x1xf32> to vector<16x32xf32>
    %166 = arith.subf %160, %165 : vector<16x32xf32>
    %167 = arith.mulf %166, %166 : vector<16x32xf32>
    %cst_89 = arith.constant dense<0.000000e+00> : vector<16xf32>
    %168 = vector.multi_reduction <add>, %167, %cst_89 [1] : vector<16x32xf32> to vector<16xf32>
    %169 = vector.shape_cast %168 : vector<16xf32> to vector<16x1xf32>
    %cst_90 = arith.constant 3.200000e+01 : f32
    %170 = vector.broadcast %cst_90 : f32 to vector<16x1xf32>
    %171 = arith.divf %169, %170 : vector<16x1xf32>
    %cst_91 = arith.constant 9.99999996E-13 : f32
    %172 = vector.broadcast %cst_91 : f32 to vector<16x1xf32>
    %173 = arith.addf %171, %172 : vector<16x1xf32>
    %174 = math.rsqrt %173 : vector<16x1xf32>
    %175 = vector.broadcast %174 : vector<16x1xf32> to vector<16x32xf32>
    %176 = arith.mulf %166, %175 : vector<16x32xf32>
    %177 = vector.broadcast %31 : vector<1x32xf32> to vector<16x32xf32>
    %178 = arith.mulf %176, %177 : vector<16x32xf32>
    %179 = vector.broadcast %32 : vector<1x32xf32> to vector<16x32xf32>
    %180 = arith.addf %178, %179 : vector<16x32xf32>
    %c1_92 = arith.constant 1 : index
    %c0_93 = arith.constant 0 : index
    %c0_94 = arith.constant 0 : index
    %181 = vector.load %arg9[%c1_92, %c0_93, %c0_94] : memref<2x8x32xf32, #tpu.memory_space<vmem>>, vector<1x8x32xf32>
    %182 = vector.shape_cast %181 : vector<1x8x32xf32> to vector<8x32xf32>
    %183 = vector.extract_strided_slice %182 {offsets = [0, 0], sizes = [1, 32], strides = [1, 1]} : vector<8x32xf32> to vector<1x32xf32>
    %184 = vector.extract_strided_slice %182 {offsets = [1, 0], sizes = [1, 32], strides = [1, 1]} : vector<8x32xf32> to vector<1x32xf32>
    %185 = vector.extract_strided_slice %182 {offsets = [2, 0], sizes = [1, 32], strides = [1, 1]} : vector<8x32xf32> to vector<1x32xf32>
    %186 = vector.extract_strided_slice %182 {offsets = [3, 0], sizes = [1, 32], strides = [1, 1]} : vector<8x32xf32> to vector<1x32xf32>
    %187 = vector.extract_strided_slice %182 {offsets = [4, 0], sizes = [1, 32], strides = [1, 1]} : vector<8x32xf32> to vector<1x32xf32>
    %188 = vector.extract_strided_slice %182 {offsets = [5, 0], sizes = [1, 32], strides = [1, 1]} : vector<8x32xf32> to vector<1x32xf32>
    %c6 = arith.constant 6 : index
    %c0_95 = arith.constant 0 : index
    %c0_96 = arith.constant 0 : index
    %189 = vector.load %arg3[%c6, %c0_95, %c0_96] : memref<12x32x16xf32, #tpu.memory_space<vmem>>, vector<1x32x16xf32>
    %190 = vector.shape_cast %189 : vector<1x32x16xf32> to vector<32x16xf32>
    %cst_97 = arith.constant dense<0.000000e+00> : vector<16x16xf32>
    %191 = tpu.matmul %180, %190, %cst_97 {dimension_numbers = #tpu.dot_dimension_numbers<[1], [0], [0], [1], [0, 0, 1, 1], [], []>} : vector<16x32xf32>, vector<32x16xf32>, vector<16x16xf32> -> vector<16x16xf32>
    %c6_98 = arith.constant 6 : index
    %c0_99 = arith.constant 0 : index
    %c0_100 = arith.constant 0 : index
    %192 = vector.load %arg4[%c6_98, %c0_99, %c0_100] : memref<12x1x16xf32, #tpu.memory_space<vmem>>, vector<1x1x16xf32>
    %193 = vector.shape_cast %192 : vector<1x1x16xf32> to vector<1x16xf32>
    %194 = vector.broadcast %193 : vector<1x16xf32> to vector<16x16xf32>
    %195 = arith.addf %191, %194 : vector<16x16xf32>
    %c8 = arith.constant 8 : index
    %c0_101 = arith.constant 0 : index
    %c0_102 = arith.constant 0 : index
    %196 = vector.load %arg3[%c8, %c0_101, %c0_102] : memref<12x32x16xf32, #tpu.memory_space<vmem>>, vector<1x32x16xf32>
    %197 = vector.shape_cast %196 : vector<1x32x16xf32> to vector<32x16xf32>
    %cst_103 = arith.constant dense<0.000000e+00> : vector<16x16xf32>
    %198 = tpu.matmul %180, %197, %cst_103 {dimension_numbers = #tpu.dot_dimension_numbers<[1], [0], [0], [1], [0, 0, 1, 1], [], []>} : vector<16x32xf32>, vector<32x16xf32>, vector<16x16xf32> -> vector<16x16xf32>
    %c8_104 = arith.constant 8 : index
    %c0_105 = arith.constant 0 : index
    %c0_106 = arith.constant 0 : index
    %199 = vector.load %arg4[%c8_104, %c0_105, %c0_106] : memref<12x1x16xf32, #tpu.memory_space<vmem>>, vector<1x1x16xf32>
    %200 = vector.shape_cast %199 : vector<1x1x16xf32> to vector<1x16xf32>
    %201 = vector.broadcast %200 : vector<1x16xf32> to vector<16x16xf32>
    %202 = arith.addf %198, %201 : vector<16x16xf32>
    %c10 = arith.constant 10 : index
    %c0_107 = arith.constant 0 : index
    %c0_108 = arith.constant 0 : index
    %203 = vector.load %arg3[%c10, %c0_107, %c0_108] : memref<12x32x16xf32, #tpu.memory_space<vmem>>, vector<1x32x16xf32>
    %204 = vector.shape_cast %203 : vector<1x32x16xf32> to vector<32x16xf32>
    %cst_109 = arith.constant dense<0.000000e+00> : vector<16x16xf32>
    %205 = tpu.matmul %180, %204, %cst_109 {dimension_numbers = #tpu.dot_dimension_numbers<[1], [0], [0], [1], [0, 0, 1, 1], [], []>} : vector<16x32xf32>, vector<32x16xf32>, vector<16x16xf32> -> vector<16x16xf32>
    %c10_110 = arith.constant 10 : index
    %c0_111 = arith.constant 0 : index
    %c0_112 = arith.constant 0 : index
    %206 = vector.load %arg4[%c10_110, %c0_111, %c0_112] : memref<12x1x16xf32, #tpu.memory_space<vmem>>, vector<1x1x16xf32>
    %207 = vector.shape_cast %206 : vector<1x1x16xf32> to vector<1x16xf32>
    %208 = vector.broadcast %207 : vector<1x16xf32> to vector<16x16xf32>
    %209 = arith.addf %205, %208 : vector<16x16xf32>
    "tpu.trace_start"() <{level = 10 : i32, message = "qd,kd->qk"}> : () -> ()
    %cst_113 = arith.constant dense<0.000000e+00> : vector<16x16xf32>
    %210 = tpu.matmul %195, %202, %cst_113 {dimension_numbers = #tpu.dot_dimension_numbers<[1], [1], [0], [0], [0, 0, 1, 0], [], []>} : vector<16x16xf32>, vector<16x16xf32>, vector<16x16xf32> -> vector<16x16xf32>
    "tpu.trace_stop"() : () -> ()
    %cst_114 = arith.constant 2.500000e-01 : f32
    %211 = vector.broadcast %cst_114 : f32 to vector<16x16xf32>
    %212 = arith.mulf %210, %211 : vector<16x16xf32>
    %213 = arith.addf %212, %24 : vector<16x16xf32>
    %cst_115 = arith.constant dense<0xFF800000> : vector<16xf32>
    %214 = vector.multi_reduction <maximumf>, %213, %cst_115 [1] : vector<16x16xf32> to vector<16xf32>
    %215 = vector.shape_cast %214 : vector<16xf32> to vector<16x1xf32>
    %216 = vector.broadcast %215 : vector<16x1xf32> to vector<16x16xf32>
    %217 = arith.subf %213, %216 : vector<16x16xf32>
    %218 = math.exp %217 : vector<16x16xf32>
    %cst_116 = arith.constant dense<0.000000e+00> : vector<16xf32>
    %219 = vector.multi_reduction <add>, %218, %cst_116 [1] : vector<16x16xf32> to vector<16xf32>
    %220 = vector.shape_cast %219 : vector<16xf32> to vector<16x1xf32>
    %221 = tpu.reciprocal %220 {approx = true} : vector<16x1xf32> -> vector<16x1xf32>
    %222 = vector.broadcast %221 : vector<16x1xf32> to vector<16x16xf32>
    %223 = arith.mulf %218, %222 : vector<16x16xf32>
    %cst_117 = arith.constant dense<0.000000e+00> : vector<16x16xf32>
    %224 = tpu.matmul %223, %209, %cst_117 {dimension_numbers = #tpu.dot_dimension_numbers<[1], [0], [0], [1], [0, 0, 1, 1], [], []>} : vector<16x16xf32>, vector<16x16xf32>, vector<16x16xf32> -> vector<16x16xf32>
    %c2_118 = arith.constant 2 : index
    %c0_119 = arith.constant 0 : index
    %c0_120 = arith.constant 0 : index
    %225 = vector.load %arg5[%c2_118, %c0_119, %c0_120] : memref<4x16x32xf32, #tpu.memory_space<vmem>>, vector<1x16x32xf32>
    %226 = vector.shape_cast %225 : vector<1x16x32xf32> to vector<16x32xf32>
    %cst_121 = arith.constant dense<0.000000e+00> : vector<16x32xf32>
    %227 = tpu.matmul %224, %226, %cst_121 {dimension_numbers = #tpu.dot_dimension_numbers<[1], [0], [0], [1], [0, 0, 1, 1], [], []>} : vector<16x16xf32>, vector<16x32xf32>, vector<16x32xf32> -> vector<16x32xf32>
    %c7 = arith.constant 7 : index
    %c0_122 = arith.constant 0 : index
    %c0_123 = arith.constant 0 : index
    %228 = vector.load %arg3[%c7, %c0_122, %c0_123] : memref<12x32x16xf32, #tpu.memory_space<vmem>>, vector<1x32x16xf32>
    %229 = vector.shape_cast %228 : vector<1x32x16xf32> to vector<32x16xf32>
    %cst_124 = arith.constant dense<0.000000e+00> : vector<16x16xf32>
    %230 = tpu.matmul %180, %229, %cst_124 {dimension_numbers = #tpu.dot_dimension_numbers<[1], [0], [0], [1], [0, 0, 1, 1], [], []>} : vector<16x32xf32>, vector<32x16xf32>, vector<16x16xf32> -> vector<16x16xf32>
    %c7_125 = arith.constant 7 : index
    %c0_126 = arith.constant 0 : index
    %c0_127 = arith.constant 0 : index
    %231 = vector.load %arg4[%c7_125, %c0_126, %c0_127] : memref<12x1x16xf32, #tpu.memory_space<vmem>>, vector<1x1x16xf32>
    %232 = vector.shape_cast %231 : vector<1x1x16xf32> to vector<1x16xf32>
    %233 = vector.broadcast %232 : vector<1x16xf32> to vector<16x16xf32>
    %234 = arith.addf %230, %233 : vector<16x16xf32>
    %c9 = arith.constant 9 : index
    %c0_128 = arith.constant 0 : index
    %c0_129 = arith.constant 0 : index
    %235 = vector.load %arg3[%c9, %c0_128, %c0_129] : memref<12x32x16xf32, #tpu.memory_space<vmem>>, vector<1x32x16xf32>
    %236 = vector.shape_cast %235 : vector<1x32x16xf32> to vector<32x16xf32>
    %cst_130 = arith.constant dense<0.000000e+00> : vector<16x16xf32>
    %237 = tpu.matmul %180, %236, %cst_130 {dimension_numbers = #tpu.dot_dimension_numbers<[1], [0], [0], [1], [0, 0, 1, 1], [], []>} : vector<16x32xf32>, vector<32x16xf32>, vector<16x16xf32> -> vector<16x16xf32>
    %c9_131 = arith.constant 9 : index
    %c0_132 = arith.constant 0 : index
    %c0_133 = arith.constant 0 : index
    %238 = vector.load %arg4[%c9_131, %c0_132, %c0_133] : memref<12x1x16xf32, #tpu.memory_space<vmem>>, vector<1x1x16xf32>
    %239 = vector.shape_cast %238 : vector<1x1x16xf32> to vector<1x16xf32>
    %240 = vector.broadcast %239 : vector<1x16xf32> to vector<16x16xf32>
    %241 = arith.addf %237, %240 : vector<16x16xf32>
    %c11 = arith.constant 11 : index
    %c0_134 = arith.constant 0 : index
    %c0_135 = arith.constant 0 : index
    %242 = vector.load %arg3[%c11, %c0_134, %c0_135] : memref<12x32x16xf32, #tpu.memory_space<vmem>>, vector<1x32x16xf32>
    %243 = vector.shape_cast %242 : vector<1x32x16xf32> to vector<32x16xf32>
    %cst_136 = arith.constant dense<0.000000e+00> : vector<16x16xf32>
    %244 = tpu.matmul %180, %243, %cst_136 {dimension_numbers = #tpu.dot_dimension_numbers<[1], [0], [0], [1], [0, 0, 1, 1], [], []>} : vector<16x32xf32>, vector<32x16xf32>, vector<16x16xf32> -> vector<16x16xf32>
    %c11_137 = arith.constant 11 : index
    %c0_138 = arith.constant 0 : index
    %c0_139 = arith.constant 0 : index
    %245 = vector.load %arg4[%c11_137, %c0_138, %c0_139] : memref<12x1x16xf32, #tpu.memory_space<vmem>>, vector<1x1x16xf32>
    %246 = vector.shape_cast %245 : vector<1x1x16xf32> to vector<1x16xf32>
    %247 = vector.broadcast %246 : vector<1x16xf32> to vector<16x16xf32>
    %248 = arith.addf %244, %247 : vector<16x16xf32>
    "tpu.trace_start"() <{level = 10 : i32, message = "qd,kd->qk"}> : () -> ()
    %cst_140 = arith.constant dense<0.000000e+00> : vector<16x16xf32>
    %249 = tpu.matmul %234, %241, %cst_140 {dimension_numbers = #tpu.dot_dimension_numbers<[1], [1], [0], [0], [0, 0, 1, 0], [], []>} : vector<16x16xf32>, vector<16x16xf32>, vector<16x16xf32> -> vector<16x16xf32>
    "tpu.trace_stop"() : () -> ()
    %cst_141 = arith.constant 2.500000e-01 : f32
    %250 = vector.broadcast %cst_141 : f32 to vector<16x16xf32>
    %251 = arith.mulf %249, %250 : vector<16x16xf32>
    %252 = arith.addf %251, %24 : vector<16x16xf32>
    %cst_142 = arith.constant dense<0xFF800000> : vector<16xf32>
    %253 = vector.multi_reduction <maximumf>, %252, %cst_142 [1] : vector<16x16xf32> to vector<16xf32>
    %254 = vector.shape_cast %253 : vector<16xf32> to vector<16x1xf32>
    %255 = vector.broadcast %254 : vector<16x1xf32> to vector<16x16xf32>
    %256 = arith.subf %252, %255 : vector<16x16xf32>
    %257 = math.exp %256 : vector<16x16xf32>
    %cst_143 = arith.constant dense<0.000000e+00> : vector<16xf32>
    %258 = vector.multi_reduction <add>, %257, %cst_143 [1] : vector<16x16xf32> to vector<16xf32>
    %259 = vector.shape_cast %258 : vector<16xf32> to vector<16x1xf32>
    %260 = tpu.reciprocal %259 {approx = true} : vector<16x1xf32> -> vector<16x1xf32>
    %261 = vector.broadcast %260 : vector<16x1xf32> to vector<16x16xf32>
    %262 = arith.mulf %257, %261 : vector<16x16xf32>
    %cst_144 = arith.constant dense<0.000000e+00> : vector<16x16xf32>
    %263 = tpu.matmul %262, %248, %cst_144 {dimension_numbers = #tpu.dot_dimension_numbers<[1], [0], [0], [1], [0, 0, 1, 1], [], []>} : vector<16x16xf32>, vector<16x16xf32>, vector<16x16xf32> -> vector<16x16xf32>
    %c3_145 = arith.constant 3 : index
    %c0_146 = arith.constant 0 : index
    %c0_147 = arith.constant 0 : index
    %264 = vector.load %arg5[%c3_145, %c0_146, %c0_147] : memref<4x16x32xf32, #tpu.memory_space<vmem>>, vector<1x16x32xf32>
    %265 = vector.shape_cast %264 : vector<1x16x32xf32> to vector<16x32xf32>
    %cst_148 = arith.constant dense<0.000000e+00> : vector<16x32xf32>
    %266 = tpu.matmul %263, %265, %cst_148 {dimension_numbers = #tpu.dot_dimension_numbers<[1], [0], [0], [1], [0, 0, 1, 1], [], []>} : vector<16x16xf32>, vector<16x32xf32>, vector<16x32xf32> -> vector<16x32xf32>
    %267 = arith.addf %227, %266 : vector<16x32xf32>
    %268 = vector.broadcast %183 : vector<1x32xf32> to vector<16x32xf32>
    %269 = arith.addf %267, %268 : vector<16x32xf32>
    %270 = arith.addf %180, %269 : vector<16x32xf32>
    %cst_149 = arith.constant dense<0.000000e+00> : vector<16xf32>
    %271 = vector.multi_reduction <add>, %270, %cst_149 [1] : vector<16x32xf32> to vector<16xf32>
    %272 = vector.shape_cast %271 : vector<16xf32> to vector<16x1xf32>
    %cst_150 = arith.constant 3.200000e+01 : f32
    %273 = vector.broadcast %cst_150 : f32 to vector<16x1xf32>
    %274 = arith.divf %272, %273 : vector<16x1xf32>
    %275 = vector.broadcast %274 : vector<16x1xf32> to vector<16x32xf32>
    %276 = arith.subf %270, %275 : vector<16x32xf32>
    %277 = arith.mulf %276, %276 : vector<16x32xf32>
    %cst_151 = arith.constant dense<0.000000e+00> : vector<16xf32>
    %278 = vector.multi_reduction <add>, %277, %cst_151 [1] : vector<16x32xf32> to vector<16xf32>
    %279 = vector.shape_cast %278 : vector<16xf32> to vector<16x1xf32>
    %cst_152 = arith.constant 3.200000e+01 : f32
    %280 = vector.broadcast %cst_152 : f32 to vector<16x1xf32>
    %281 = arith.divf %279, %280 : vector<16x1xf32>
    %cst_153 = arith.constant 9.99999996E-13 : f32
    %282 = vector.broadcast %cst_153 : f32 to vector<16x1xf32>
    %283 = arith.addf %281, %282 : vector<16x1xf32>
    %284 = math.rsqrt %283 : vector<16x1xf32>
    %285 = vector.broadcast %284 : vector<16x1xf32> to vector<16x32xf32>
    %286 = arith.mulf %276, %285 : vector<16x32xf32>
    %287 = vector.broadcast %184 : vector<1x32xf32> to vector<16x32xf32>
    %288 = arith.mulf %286, %287 : vector<16x32xf32>
    %289 = vector.broadcast %185 : vector<1x32xf32> to vector<16x32xf32>
    %290 = arith.addf %288, %289 : vector<16x32xf32>
    %c1_154 = arith.constant 1 : index
    %c0_155 = arith.constant 0 : index
    %c0_156 = arith.constant 0 : index
    %291 = vector.load %arg6[%c1_154, %c0_155, %c0_156] : memref<2x32x64xf32, #tpu.memory_space<vmem>>, vector<1x32x64xf32>
    %292 = vector.shape_cast %291 : vector<1x32x64xf32> to vector<32x64xf32>
    %cst_157 = arith.constant dense<0.000000e+00> : vector<16x64xf32>
    %293 = tpu.matmul %290, %292, %cst_157 {dimension_numbers = #tpu.dot_dimension_numbers<[1], [0], [0], [1], [0, 0, 1, 1], [], []>} : vector<16x32xf32>, vector<32x64xf32>, vector<16x64xf32> -> vector<16x64xf32>
    %c1_158 = arith.constant 1 : index
    %c0_159 = arith.constant 0 : index
    %c0_160 = arith.constant 0 : index
    %294 = vector.load %arg7[%c1_158, %c0_159, %c0_160] : memref<2x1x64xf32, #tpu.memory_space<vmem>>, vector<1x1x64xf32>
    %295 = vector.shape_cast %294 : vector<1x1x64xf32> to vector<1x64xf32>
    %296 = vector.broadcast %295 : vector<1x64xf32> to vector<16x64xf32>
    %297 = arith.addf %293, %296 : vector<16x64xf32>
    %cst_161 = arith.constant 5.000000e-01 : f32
    %298 = vector.broadcast %cst_161 : f32 to vector<16x64xf32>
    %299 = arith.mulf %298, %297 : vector<16x64xf32>
    %cst_162 = arith.constant 4.471500e-02 : f32
    %300 = vector.broadcast %cst_162 : f32 to vector<16x64xf32>
    %301 = arith.mulf %300, %297 : vector<16x64xf32>
    %302 = arith.mulf %301, %297 : vector<16x64xf32>
    %303 = arith.mulf %302, %297 : vector<16x64xf32>
    %304 = arith.addf %297, %303 : vector<16x64xf32>
    %cst_163 = arith.constant 0.797884583 : f32
    %305 = vector.broadcast %cst_163 : f32 to vector<16x64xf32>
    %306 = arith.mulf %305, %304 : vector<16x64xf32>
    %307 = math.tanh %306 : vector<16x64xf32>
    %cst_164 = arith.constant 1.000000e+00 : f32
    %308 = vector.broadcast %cst_164 : f32 to vector<16x64xf32>
    %309 = arith.addf %308, %307 : vector<16x64xf32>
    %310 = arith.mulf %299, %309 : vector<16x64xf32>
    %c1_165 = arith.constant 1 : index
    %c0_166 = arith.constant 0 : index
    %c0_167 = arith.constant 0 : index
    %311 = vector.load %arg8[%c1_165, %c0_166, %c0_167] : memref<2x64x32xf32, #tpu.memory_space<vmem>>, vector<1x64x32xf32>
    %312 = vector.shape_cast %311 : vector<1x64x32xf32> to vector<64x32xf32>
    %cst_168 = arith.constant dense<0.000000e+00> : vector<16x32xf32>
    %313 = tpu.matmul %310, %312, %cst_168 {dimension_numbers = #tpu.dot_dimension_numbers<[1], [0], [0], [1], [0, 0, 1, 1], [], []>} : vector<16x64xf32>, vector<64x32xf32>, vector<16x32xf32> -> vector<16x32xf32>
    %314 = vector.broadcast %186 : vector<1x32xf32> to vector<16x32xf32>
    %315 = arith.addf %313, %314 : vector<16x32xf32>
    %316 = arith.addf %290, %315 : vector<16x32xf32>
    %cst_169 = arith.constant dense<0.000000e+00> : vector<16xf32>
    %317 = vector.multi_reduction <add>, %316, %cst_169 [1] : vector<16x32xf32> to vector<16xf32>
    %318 = vector.shape_cast %317 : vector<16xf32> to vector<16x1xf32>
    %cst_170 = arith.constant 3.200000e+01 : f32
    %319 = vector.broadcast %cst_170 : f32 to vector<16x1xf32>
    %320 = arith.divf %318, %319 : vector<16x1xf32>
    %321 = vector.broadcast %320 : vector<16x1xf32> to vector<16x32xf32>
    %322 = arith.subf %316, %321 : vector<16x32xf32>
    %323 = arith.mulf %322, %322 : vector<16x32xf32>
    %cst_171 = arith.constant dense<0.000000e+00> : vector<16xf32>
    %324 = vector.multi_reduction <add>, %323, %cst_171 [1] : vector<16x32xf32> to vector<16xf32>
    %325 = vector.shape_cast %324 : vector<16xf32> to vector<16x1xf32>
    %cst_172 = arith.constant 3.200000e+01 : f32
    %326 = vector.broadcast %cst_172 : f32 to vector<16x1xf32>
    %327 = arith.divf %325, %326 : vector<16x1xf32>
    %cst_173 = arith.constant 9.99999996E-13 : f32
    %328 = vector.broadcast %cst_173 : f32 to vector<16x1xf32>
    %329 = arith.addf %327, %328 : vector<16x1xf32>
    %330 = math.rsqrt %329 : vector<16x1xf32>
    %331 = vector.broadcast %330 : vector<16x1xf32> to vector<16x32xf32>
    %332 = arith.mulf %322, %331 : vector<16x32xf32>
    %333 = vector.broadcast %187 : vector<1x32xf32> to vector<16x32xf32>
    %334 = arith.mulf %332, %333 : vector<16x32xf32>
    %335 = vector.broadcast %188 : vector<1x32xf32> to vector<16x32xf32>
    %336 = arith.addf %334, %335 : vector<16x32xf32>
    %c0_174 = arith.constant 0 : index
    %c0_175 = arith.constant 0 : index
    %337 = vector.load %arg10[%c0_174, %c0_175] : memref<32x32xf32, #tpu.memory_space<vmem>>, vector<32x32xf32>
    %cst_176 = arith.constant dense<0.000000e+00> : vector<16x32xf32>
    %338 = tpu.matmul %336, %337, %cst_176 {dimension_numbers = #tpu.dot_dimension_numbers<[1], [0], [0], [1], [0, 0, 1, 1], [], []>} : vector<16x32xf32>, vector<32x32xf32>, vector<16x32xf32> -> vector<16x32xf32>
    %c0_177 = arith.constant 0 : index
    %c0_178 = arith.constant 0 : index
    %339 = vector.load %arg11[%c0_177, %c0_178] : memref<1x32xf32, #tpu.memory_space<vmem>>, vector<1x32xf32>
    %340 = vector.broadcast %339 : vector<1x32xf32> to vector<16x32xf32>
    %341 = arith.addf %338, %340 : vector<16x32xf32>
    %342 = math.tanh %341 : vector<16x32xf32>
    %c0_179 = arith.constant 0 : index
    %c0_180 = arith.constant 0 : index
    %343 = vector.load %arg12[%c0_179, %c0_180] : memref<32x1xf32, #tpu.memory_space<vmem>>, vector<32x1xf32>
    %cst_181 = arith.constant dense<0.000000e+00> : vector<16x1xf32>
    %344 = tpu.matmul %342, %343, %cst_181 {dimension_numbers = #tpu.dot_dimension_numbers<[1], [0], [0], [1], [0, 0, 1, 1], [], []>} : vector<16x32xf32>, vector<32x1xf32>, vector<16x1xf32> -> vector<16x1xf32>
    %c0_182 = arith.constant 0 : index
    %c0_183 = arith.constant 0 : index
    %345 = vector.load %arg13[%c0_182, %c0_183] : memref<1x1xf32, #tpu.memory_space<vmem>>, vector<1x1xf32>
    %346 = vector.broadcast %345 : vector<1x1xf32> to vector<16x1xf32>
    %347 = arith.addf %344, %346 : vector<16x1xf32>
    %348 = vector.extract_strided_slice %347 {offsets = [0, 0], sizes = [1, 1], strides = [1, 1]} : vector<16x1xf32> to vector<1x1xf32>
    %c0_184 = arith.constant 0 : index
    %c0_185 = arith.constant 0 : index
    %349 = vector.load %arg14[%c0_184, %c0_185] : memref<2x1xf32, #tpu.memory_space<vmem>>, vector<1x1xf32>
    tpu.vector_store %arg14[%c0_184, %c0_185], %348 {strides = array<i32>} : memref<2x1xf32, #tpu.memory_space<vmem>>, vector<1x1xf32>,
    %350 = vector.extract_strided_slice %347 {offsets = [8, 0], sizes = [1, 1], strides = [1, 1]} : vector<16x1xf32> to vector<1x1xf32>
    %c1_186 = arith.constant 1 : index
    %c0_187 = arith.constant 0 : index
    %351 = vector.load %arg14[%c1_186, %c0_187] : memref<2x1xf32, #tpu.memory_space<vmem>>, vector<1x1xf32>
    tpu.vector_store %arg14[%c1_186, %c0_187], %350 {strides = array<i32>} : memref<2x1xf32, #tpu.memory_space<vmem>>, vector<1x1xf32>,
    return
  }
}

</mosaic_0001>

<llo_original>
// kernel: sentiment_classifier_forward.1
$region0: #{sentiment_classifier_forward.1}
  #allocation0 [shape = 'u32[]', space=smem, size = 0x4, offset = 0x4, fixed_abs, tag = 'smem constant byte address 0x4 - core index']
  #allocation1 [shape = 'u32[144,128]{1,0:T(1,128)}', space=vmem, size = 0x12000, scoped, tag = 'internal scratch']
  #allocation2 [shape = 'f32[1,1]{1,0:T(1,128)S(1)}', space=vmem, size = 0x200, scoped, tag = 'scoped memory for sentiment_classifier_forward.1']
  %s0 = inlined_call_operand.vmem [shape: f32[16,32], index: 0, kind: input, shape index: {}]
  %s1 = inlined_call_operand.vmem [shape: f32[16,16], index: 1, kind: input, shape index: {}]
  %s2 = inlined_call_operand.vmem [shape: f32[2,32], index: 2, kind: input, shape index: {}]
  %s3 = inlined_call_operand.vmem [shape: f32[12,32,16], index: 3, kind: input, shape index: {}]
  %s4 = inlined_call_operand.vmem [shape: f32[12,1,16], index: 4, kind: input, shape index: {}]
  %s5 = inlined_call_operand.vmem [shape: f32[4,16,32], index: 5, kind: input, shape index: {}]
  %s6 = inlined_call_operand.vmem [shape: f32[2,32,64], index: 6, kind: input, shape index: {}]
  %s7 = inlined_call_operand.vmem [shape: f32[2,1,64], index: 7, kind: input, shape index: {}]
  %s8 = inlined_call_operand.vmem [shape: f32[2,64,32], index: 8, kind: input, shape index: {}]
  %s9 = inlined_call_operand.vmem [shape: f32[2,8,32], index: 9, kind: input, shape index: {}]
  %s10 = inlined_call_operand.vmem [shape: f32[32,32], index: 10, kind: input, shape index: {}]
  %s11 = inlined_call_operand.vmem [shape: f32[1,32], index: 11, kind: input, shape index: {}]
  %s12 = inlined_call_operand.vmem [shape: f32[32,1], index: 12, kind: input, shape index: {}]
  %s13 = inlined_call_operand.<no memory space> [shape: f32[1,1], index: 13, kind: input, shape index: {}]
  %s14 = inlined_call_operand.vmem [shape: f32[2,1], index: 14, kind: output, shape index: {}]
  %s15 = sld [smem:[#allocation0]]
  $region66: #{sentiment_classifier_forward.1} parent=0
    _
  %s17 = ssub.s32 1, %s15
  %s18 = scalar_select 0, %s17, %s15
  %v19 = vstv %s13
  %20 = vst [vmem:[#allocation2] sm:$0x1] %v19
  // Predicated region
  $region2: #{sentiment_classifier_forward.1} parent=0 // pred_check
    _
  $region3: #{sentiment_classifier_forward.1} parent=0 // pred_check_branch
    %22 = sbr.rel (0) target = $region5
  $region4: #{sentiment_classifier_forward.1} parent=0 // pred_region
    _
  $region5: #{sentiment_classifier_forward.1} parent=0 // pred_fallthru
    _
  // Predicated region
  $region6: #{sentiment_classifier_forward.1} parent=0 // pred_check
    _
  $region7: #{sentiment_classifier_forward.1} parent=0 // pred_check_branch
    %24 = sbr.rel (0) target = $region9
  $region8: #{sentiment_classifier_forward.1} parent=0 // pred_region
    _
  $region9: #{sentiment_classifier_forward.1} parent=0 // pred_fallthru
    _
  // Predicated region
  $region10: #{sentiment_classifier_forward.1} parent=0 // pred_check
    _
  $region11: #{sentiment_classifier_forward.1} parent=0 // pred_check_branch
    %26 = sbr.rel (0) target = $region13
  $region12: #{sentiment_classifier_forward.1} parent=0 // pred_region
    _
  $region13: #{sentiment_classifier_forward.1} parent=0 // pred_fallthru
    _
  // Predicated region
  $region14: #{sentiment_classifier_forward.1} parent=0 // pred_check
    _
  $region15: #{sentiment_classifier_forward.1} parent=0 // pred_check_branch
    %28 = sbr.rel (0) target = $region17
  $region16: #{sentiment_classifier_forward.1} parent=0 // pred_region
    _
  $region17: #{sentiment_classifier_forward.1} parent=0 // pred_fallthru
    _
  // Predicated region
  $region18: #{sentiment_classifier_forward.1} parent=0 // pred_check
    _
  $region19: #{sentiment_classifier_forward.1} parent=0 // pred_check_branch
    %30 = sbr.rel (0) target = $region21
  $region20: #{sentiment_classifier_forward.1} parent=0 // pred_region
    _
  $region21: #{sentiment_classifier_forward.1} parent=0 // pred_fallthru
    _
  // Predicated region
  $region22: #{sentiment_classifier_forward.1} parent=0 // pred_check
    _
  $region23: #{sentiment_classifier_forward.1} parent=0 // pred_check_branch
    %32 = sbr.rel (0) target = $region25
  $region24: #{sentiment_classifier_forward.1} parent=0 // pred_region
    _
  $region25: #{sentiment_classifier_forward.1} parent=0 // pred_fallthru
    _
  // Predicated region
  $region26: #{sentiment_classifier_forward.1} parent=0 // pred_check
    _
  $region27: #{sentiment_classifier_forward.1} parent=0 // pred_check_branch
    %34 = sbr.rel (0) target = $region29
  $region28: #{sentiment_classifier_forward.1} parent=0 // pred_region
    _
  $region29: #{sentiment_classifier_forward.1} parent=0 // pred_fallthru
    _
  // Predicated region
  $region30: #{sentiment_classifier_forward.1} parent=0 // pred_check
    _
  $region31: #{sentiment_classifier_forward.1} parent=0 // pred_check_branch
    %36 = sbr.rel (0) target = $region33
  $region32: #{sentiment_classifier_forward.1} parent=0 // pred_region
    _
  $region33: #{sentiment_classifier_forward.1} parent=0 // pred_fallthru
    _
  // Predicated region
  $region34: #{sentiment_classifier_forward.1} parent=0 // pred_check
    _
  $region35: #{sentiment_classifier_forward.1} parent=0 // pred_check_branch
    %38 = sbr.rel (0) target = $region37
  $region36: #{sentiment_classifier_forward.1} parent=0 // pred_region
    _
  $region37: #{sentiment_classifier_forward.1} parent=0 // pred_fallthru
    _
  // Predicated region
  $region38: #{sentiment_classifier_forward.1} parent=0 // pred_check
    _
  $region39: #{sentiment_classifier_forward.1} parent=0 // pred_check_branch
    %40 = sbr.rel (0) target = $region41
  $region40: #{sentiment_classifier_forward.1} parent=0 // pred_region
    _
  $region41: #{sentiment_classifier_forward.1} parent=0 // pred_fallthru
    _
  // Predicated region
  $region42: #{sentiment_classifier_forward.1} parent=0 // pred_check
    _
  $region43: #{sentiment_classifier_forward.1} parent=0 // pred_check_branch
    %42 = sbr.rel (0) target = $region45
  $region44: #{sentiment_classifier_forward.1} parent=0 // pred_region
    _
  $region45: #{sentiment_classifier_forward.1} parent=0 // pred_fallthru
    _
  // Predicated region
  $region46: #{sentiment_classifier_forward.1} parent=0 // pred_check
    _
  $region47: #{sentiment_classifier_forward.1} parent=0 // pred_check_branch
    %44 = sbr.rel (0) target = $region49
  $region48: #{sentiment_classifier_forward.1} parent=0 // pred_region
    _
  $region49: #{sentiment_classifier_forward.1} parent=0 // pred_fallthru
    _
  // Predicated region
  $region50: #{sentiment_classifier_forward.1} parent=0 // pred_check
    _
  $region51: #{sentiment_classifier_forward.1} parent=0 // pred_check_branch
    %46 = sbr.rel (0) target = $region53
  $region52: #{sentiment_classifier_forward.1} parent=0 // pred_region
    _
  $region53: #{sentiment_classifier_forward.1} parent=0 // pred_fallthru
    _
  // Predicated region
  $region54: #{sentiment_classifier_forward.1} parent=0 // pred_check
    _
  $region55: #{sentiment_classifier_forward.1} parent=0 // pred_check_branch
    %48 = sbr.rel (0) target = $region57
  $region56: #{sentiment_classifier_forward.1} parent=0 // pred_region
    _
  $region57: #{sentiment_classifier_forward.1} parent=0 // pred_fallthru
    _
  %v49 = vld [vmem:[%s2] sm:$0x3]
  %v50 = vld [vmem:[%s0] sm:$0xff]
  %v51 = vld [vmem:[%s0 + $0x8] sm:$0xff]
  %vm52 = vcmask 261120
  %v53 = vsel %vm52, %v50, 0.0
  %54 = vadd.xlane.f32.xlu0 %v53
  %v55 = vpop.xlane.xlu0 %54
  %v56 = vsel %vm52, %v51, 0.0
  %57 = vadd.xlane.f32.xlu0 %v56
  %v58 = vpop.xlane.xlu0 %57
  %v59 = vrcp.pop 32.0
  %v60 = vmul.f32 %v55, %v59
  %v61 = vmul.f32 %v58, %v59
  %v62 = vsub.f32 %v50, %v60
  %v63 = vsub.f32 %v51, %v61
  %v64 = vmul.f32 %v62, %v62
  %v65 = vmul.f32 %v63, %v63
  %v66 = vsel %vm52, %v64, 0.0
  %67 = vadd.xlane.f32.xlu0 %v66
  %v68 = vpop.xlane.xlu0 %67
  %v69 = vsel %vm52, %v65, 0.0
  %70 = vadd.xlane.f32.xlu0 %v69
  %v71 = vpop.xlane.xlu0 %70
  %v72 = vmul.f32 %v68, %v59
  %v73 = vmul.f32 %v71, %v59
  %v74 = vadd.f32 %v72, 1e-12
  %v75 = vadd.f32 %v73, 1e-12
  %v76 = vrsqrt.pop %v74
  %v77 = vrsqrt.pop %v75
  %v78 = vmul.f32 %v62, %v76
  %v79 = vmul.f32 %v63, %v77
  %v80 = vlaneseq
  %v81 = vshrl.u32 %v80, 7
  %v82 = vsub.s32 0, %v81
  %v83 = vrot.slane %v49, %v82
  %v84 = vmul.f32 %v78, %v83
  %v85 = vmul.f32 %v79, %v83
  %v86 = vlaneseq
  %v87 = vshrl.u32 %v86, 7
  %v88 = vsub.s32 1, %v87
  %v89 = vrot.slane %v49, %v88
  %v90 = vadd.f32 %v84, %v89
  %v91 = vadd.f32 %v85, %v89
  %v92 = vld [vmem:[%s1] sm:$0xff]
  %v93 = vld [vmem:[%s1 + $0x8] sm:$0xff]
  %v94 = vld [vmem:[%s9] sm:$0xff]
  %v95 = vld [vmem:[%s3] sm:$0xff]
  %v96 = vld [vmem:[%s3 + $0x8] sm:$0xff]
  %v97 = vld [vmem:[%s3 + $0x10] sm:$0xff]
  %v98 = vld [vmem:[%s3 + $0x18] sm:$0xff]
  %v99 = vld [vmem:[%s4] sm:$0x1]
  %v101 = vlaneseq
  %v102 = vshrl.u32 %v101, 7
  %v103 = vsub.s32 0, %v102
  %v104 = vrot.slane %v99, %v103
  %v107 = vsel %vm52, %v90, 0
  %v110 = vsel %vm52, %v91, 0
  %112 = vmatprep.subr.mxu0 0.0
  %113 = vmatpush1.msra.mxu0 %v95
  %114 = vmatprep.subr.mxu0 0.0
  %115 = vmatpush1.msra.mxu0 %v96
  %116 = vmatprep.subr.mxu0 0.0
  %117 = vmatpush1.msra.mxu0 %v97
  %118 = vmatprep.subr.mxu0 0.0
  %119 = vmatpush1.msra.mxu0 %v98
  %120 = vmatprep.subr.mxu0 0.0
  %121 = vmatpush1.msra.mxu0 0.0
  %122 = vmatprep.subr.mxu0 0.0
  %123 = vmatpush1.msra.mxu0 0.0
  %124 = vmatprep.subr.mxu0 0.0
  %125 = vmatpush1.msra.mxu0 0.0
  %126 = vmatprep.subr.mxu0 0.0
  %127 = vmatpush1.msra.mxu0 0.0
  %128 = vmatprep.subr.mxu0 0.0
  %129 = vmatpush1.msra.mxu0 0.0
  %130 = vmatprep.subr.mxu0 0.0
  %131 = vmatpush1.msra.mxu0 0.0
  %132 = vmatprep.subr.mxu0 0.0
  %133 = vmatpush1.msra.mxu0 0.0
  %134 = vmatprep.subr.mxu0 0.0
  %135 = vmatpush1.msra.mxu0 0.0
  %136 = vmatprep.subr.mxu0 0.0
  %137 = vmatpush1.msra.mxu0 0.0
  %138 = vmatprep.subr.mxu0 0.0
  %139 = vmatpush1.msra.mxu0 0.0
  %140 = vmatprep.subr.mxu0 0.0
  %141 = vmatpush1.msra.mxu0 0.0
  %142 = vmatprep.subr.mxu0 0.0
  %143 = vmatpush1.msra.mxu0 0.0
  %144 = vmatprep.subr.mxu0 0.0
  %145 = vmatpush1.msra.mxu0 0.0
  %146 = vmatprep.subr.mxu0 0.0
  %147 = vmatpush1.msra.mxu0 0.0
  %148 = vmatprep.subr.mxu0 0.0
  %149 = vmatpush1.msra.mxu0 0.0
  %150 = vmatprep.subr.mxu0 0.0
  %151 = vmatpush1.msra.mxu0 0.0
  %152 = vmatprep.subr.mxu0 0.0
  %153 = vmatpush1.msra.mxu0 0.0
  %154 = vmatprep.subr.mxu0 0.0
  %155 = vmatpush1.msra.mxu0 0.0
  %156 = vmatprep.subr.mxu0 0.0
  %157 = vmatpush1.msra.mxu0 0.0
  %158 = vmatprep.subr.mxu0 0.0
  %159 = vmatpush1.msra.mxu0 0.0
  %160 = vmatprep.subr.mxu0 0.0
  %161 = vmatpush1.msra.mxu0 0.0
  %162 = vmatprep.subr.mxu0 0.0
  %163 = vmatpush1.msra.mxu0 0.0
  %164 = vmatprep.subr.mxu0 0.0
  %165 = vmatpush1.msra.mxu0 0.0
  %166 = vmatprep.subr.mxu0 0.0
  %167 = vmatpush1.msra.mxu0 0.0
  %168 = vmatprep.subr.mxu0 0.0
  %169 = vmatpush1.msra.mxu0 0.0
  %170 = vmatprep.subr.mxu0 0.0
  %171 = vmatpush1.msra.mxu0 0.0
  %172 = vmatprep.subr.mxu0 0.0
  %173 = vmatpush1.msra.mxu0 0.0
  %174 = vmatprep.subr.mxu0 0.0
  %175 = vmatpush1.msra.mxu0 0.0
  %176 = vmatprep.mubr.f32.mxu0 0.0
  %177 = vmatmul.mubr.f32.gmra.mrb[0].mxu0 %v107
  %v178 = vpop.f32.mrb[0].mxu0
  %v179 = vadd.f32 %v104, %v178
  %v180 = vpop.f32.mrb[0].mxu0
  %181 = vmatprep.mubr.f32.mxu0 0.0
  %182 = vmatmul.mubr.f32.gmra.mrb[0].mxu0 %v110
  %v183 = vpop.f32.mrb[0].mxu0
  %v184 = vadd.f32 %v104, %v183
  %v185 = vpop.f32.mrb[0].mxu0
  %186 = vdwg.mxu0
  %s187 = scalar_lea.vmem %s3, 64
  %v188 = vld [vmem:[%s187] sm:$0xff]
  %v189 = vld [vmem:[%s187 + $0x8] sm:$0xff]
  %v190 = vld [vmem:[%s187 + $0x10] sm:$0xff]
  %v191 = vld [vmem:[%s187 + $0x18] sm:$0xff]
  %s192 = scalar_lea.vmem %s4, 2
  %v193 = vld [vmem:[%s192] sm:$0x1]
  %v195 = vlaneseq
  %v196 = vshrl.u32 %v195, 7
  %v197 = vsub.s32 0, %v196
  %v198 = vrot.slane %v193, %v197
  %200 = vmatprep.subr.mxu0 0.0
  %201 = vmatpush1.msra.mxu0 %v188
  %202 = vmatprep.subr.mxu0 0.0
  %203 = vmatpush1.msra.mxu0 %v189
  %204 = vmatprep.subr.mxu0 0.0
  %205 = vmatpush1.msra.mxu0 %v190
  %206 = vmatprep.subr.mxu0 0.0
  %207 = vmatpush1.msra.mxu0 %v191
  %208 = vmatprep.subr.mxu0 0.0
  %209 = vmatpush1.msra.mxu0 0.0
  %210 = vmatprep.subr.mxu0 0.0
  %211 = vmatpush1.msra.mxu0 0.0
  %212 = vmatprep.subr.mxu0 0.0
  %213 = vmatpush1.msra.mxu0 0.0
  %214 = vmatprep.subr.mxu0 0.0
  %215 = vmatpush1.msra.mxu0 0.0
  %216 = vmatprep.subr.mxu0 0.0
  %217 = vmatpush1.msra.mxu0 0.0
  %218 = vmatprep.subr.mxu0 0.0
  %219 = vmatpush1.msra.mxu0 0.0
  %220 = vmatprep.subr.mxu0 0.0
  %221 = vmatpush1.msra.mxu0 0.0
  %222 = vmatprep.subr.mxu0 0.0
  %223 = vmatpush1.msra.mxu0 0.0
  %224 = vmatprep.subr.mxu0 0.0
  %225 = vmatpush1.msra.mxu0 0.0
  %226 = vmatprep.subr.mxu0 0.0
  %227 = vmatpush1.msra.mxu0 0.0
  %228 = vmatprep.subr.mxu0 0.0
  %229 = vmatpush1.msra.mxu0 0.0
  %230 = vmatprep.subr.mxu0 0.0
  %231 = vmatpush1.msra.mxu0 0.0
  %232 = vmatprep.subr.mxu0 0.0
  %233 = vmatpush1.msra.mxu0 0.0
  %234 = vmatprep.subr.mxu0 0.0
  %235 = vmatpush1.msra.mxu0 0.0
  %236 = vmatprep.subr.mxu0 0.0
  %237 = vmatpush1.msra.mxu0 0.0
  %238 = vmatprep.subr.mxu0 0.0
  %239 = vmatpush1.msra.mxu0 0.0
  %240 = vmatprep.subr.mxu0 0.0
  %241 = vmatpush1.msra.mxu0 0.0
  %242 = vmatprep.subr.mxu0 0.0
  %243 = vmatpush1.msra.mxu0 0.0
  %244 = vmatprep.subr.mxu0 0.0
  %245 = vmatpush1.msra.mxu0 0.0
  %246 = vmatprep.subr.mxu0 0.0
  %247 = vmatpush1.msra.mxu0 0.0
  %248 = vmatprep.subr.mxu0 0.0
  %249 = vmatpush1.msra.mxu0 0.0
  %250 = vmatprep.subr.mxu0 0.0
  %251 = vmatpush1.msra.mxu0 0.0
  %252 = vmatprep.subr.mxu0 0.0
  %253 = vmatpush1.msra.mxu0 0.0
  %254 = vmatprep.subr.mxu0 0.0
  %255 = vmatpush1.msra.mxu0 0.0
  %256 = vmatprep.subr.mxu0 0.0
  %257 = vmatpush1.msra.mxu0 0.0
  %258 = vmatprep.subr.mxu0 0.0
  %259 = vmatpush1.msra.mxu0 0.0
  %260 = vmatprep.subr.mxu0 0.0
  %261 = vmatpush1.msra.mxu0 0.0
  %262 = vmatprep.subr.mxu0 0.0
  %263 = vmatpush1.msra.mxu0 0.0
  %264 = vmatprep.mubr.f32.mxu0 0.0
  %265 = vmatmul.mubr.f32.gmra.mrb[0].mxu0 %v107
  %v266 = vpop.f32.mrb[0].mxu0
  %v267 = vadd.f32 %v198, %v266
  %v268 = vpop.f32.mrb[0].mxu0
  %269 = vmatprep.mubr.f32.mxu0 0.0
  %270 = vmatmul.mubr.f32.gmra.mrb[0].mxu0 %v110
  %v271 = vpop.f32.mrb[0].mxu0
  %v272 = vadd.f32 %v198, %v271
  %v273 = vpop.f32.mrb[0].mxu0
  %274 = vdwg.mxu0
  %s275 = scalar_lea.vmem %s3, 128
  %v276 = vld [vmem:[%s275] sm:$0xff]
  %v277 = vld [vmem:[%s275 + $0x8] sm:$0xff]
  %v278 = vld [vmem:[%s275 + $0x10] sm:$0xff]
  %v279 = vld [vmem:[%s275 + $0x18] sm:$0xff]
  %s280 = scalar_lea.vmem %s4, 4
  %v281 = vld [vmem:[%s280] sm:$0x1]
  %v283 = vlaneseq
  %v284 = vshrl.u32 %v283, 7
  %v285 = vsub.s32 0, %v284
  %v286 = vrot.slane %v281, %v285
  %288 = vmatprep.subr.mxu0 0.0
  %289 = vmatpush1.msra.mxu0 %v276
  %290 = vmatprep.subr.mxu0 0.0
  %291 = vmatpush1.msra.mxu0 %v277
  %292 = vmatprep.subr.mxu0 0.0
  %293 = vmatpush1.msra.mxu0 %v278
  %294 = vmatprep.subr.mxu0 0.0
  %295 = vmatpush1.msra.mxu0 %v279
  %296 = vmatprep.subr.mxu0 0.0
  %297 = vmatpush1.msra.mxu0 0.0
  %298 = vmatprep.subr.mxu0 0.0
  %299 = vmatpush1.msra.mxu0 0.0
  %300 = vmatprep.subr.mxu0 0.0
  %301 = vmatpush1.msra.mxu0 0.0
  %302 = vmatprep.subr.mxu0 0.0
  %303 = vmatpush1.msra.mxu0 0.0
  %304 = vmatprep.subr.mxu0 0.0
  %305 = vmatpush1.msra.mxu0 0.0
  %306 = vmatprep.subr.mxu0 0.0
  %307 = vmatpush1.msra.mxu0 0.0
  %308 = vmatprep.subr.mxu0 0.0
  %309 = vmatpush1.msra.mxu0 0.0
  %310 = vmatprep.subr.mxu0 0.0
  %311 = vmatpush1.msra.mxu0 0.0
  %312 = vmatprep.subr.mxu0 0.0
  %313 = vmatpush1.msra.mxu0 0.0
  %314 = vmatprep.subr.mxu0 0.0
  %315 = vmatpush1.msra.mxu0 0.0
  %316 = vmatprep.subr.mxu0 0.0
  %317 = vmatpush1.msra.mxu0 0.0
  %318 = vmatprep.subr.mxu0 0.0
  %319 = vmatpush1.msra.mxu0 0.0
  %320 = vmatprep.subr.mxu0 0.0
  %321 = vmatpush1.msra.mxu0 0.0
  %322 = vmatprep.subr.mxu0 0.0
  %323 = vmatpush1.msra.mxu0 0.0
  %324 = vmatprep.subr.mxu0 0.0
  %325 = vmatpush1.msra.mxu0 0.0
  %326 = vmatprep.subr.mxu0 0.0
  %327 = vmatpush1.msra.mxu0 0.0
  %328 = vmatprep.subr.mxu0 0.0
  %329 = vmatpush1.msra.mxu0 0.0
  %330 = vmatprep.subr.mxu0 0.0
  %331 = vmatpush1.msra.mxu0 0.0
  %332 = vmatprep.subr.mxu0 0.0
  %333 = vmatpush1.msra.mxu0 0.0
  %334 = vmatprep.subr.mxu0 0.0
  %335 = vmatpush1.msra.mxu0 0.0
  %336 = vmatprep.subr.mxu0 0.0
  %337 = vmatpush1.msra.mxu0 0.0
  %338 = vmatprep.subr.mxu0 0.0
  %339 = vmatpush1.msra.mxu0 0.0
  %340 = vmatprep.subr.mxu0 0.0
  %341 = vmatpush1.msra.mxu0 0.0
  %342 = vmatprep.subr.mxu0 0.0
  %343 = vmatpush1.msra.mxu0 0.0
  %344 = vmatprep.subr.mxu0 0.0
  %345 = vmatpush1.msra.mxu0 0.0
  %346 = vmatprep.subr.mxu0 0.0
  %347 = vmatpush1.msra.mxu0 0.0
  %348 = vmatprep.subr.mxu0 0.0
  %349 = vmatpush1.msra.mxu0 0.0
  %350 = vmatprep.subr.mxu0 0.0
  %351 = vmatpush1.msra.mxu0 0.0
  %352 = vmatprep.mubr.f32.mxu0 0.0
  %353 = vmatmul.mubr.f32.gmra.mrb[0].mxu0 %v107
  %v354 = vpop.f32.mrb[0].mxu0
  %v355 = vadd.f32 %v286, %v354
  %v356 = vpop.f32.mrb[0].mxu0
  %357 = vmatprep.mubr.f32.mxu0 0.0
  %358 = vmatmul.mubr.f32.gmra.mrb[0].mxu0 %v110
  %v359 = vpop.f32.mrb[0].mxu0
  %v360 = vadd.f32 %v286, %v359
  %v361 = vpop.f32.mrb[0].mxu0
  %362 = vdwg.mxu0
  %vm363 = vcmask 130048
  %v365 = vsel %vm363, %v179, 0
  %v368 = vsel %vm363, %v184, 0
  %v371 = vsel %vm363, %v267, 0
  %v374 = vsel %vm363, %v272, 0
  %376 = vmatprep.subr.mxu0 0.0
  %377 = vmatpush1.xpose.msra.mxu0 %v371
  %378 = vmatprep.subr.mxu0 0.0
  %379 = vmatpush1.xpose.msra.mxu0 %v374
  %380 = vmatprep.subr.mxu0 0.0
  %381 = vmatpush1.xpose.msra.mxu0 0.0
  %382 = vmatprep.subr.mxu0 0.0
  %383 = vmatpush1.xpose.msra.mxu0 0.0
  %384 = vmatprep.subr.mxu0 0.0
  %385 = vmatpush1.xpose.msra.mxu0 0.0
  %386 = vmatprep.subr.mxu0 0.0
  %387 = vmatpush1.xpose.msra.mxu0 0.0
  %388 = vmatprep.subr.mxu0 0.0
  %389 = vmatpush1.xpose.msra.mxu0 0.0
  %390 = vmatprep.subr.mxu0 0.0
  %391 = vmatpush1.xpose.msra.mxu0 0.0
  %392 = vmatprep.subr.mxu0 0.0
  %393 = vmatpush1.xpose.msra.mxu0 0.0
  %394 = vmatprep.subr.mxu0 0.0
  %395 = vmatpush1.xpose.msra.mxu0 0.0
  %396 = vmatprep.subr.mxu0 0.0
  %397 = vmatpush1.xpose.msra.mxu0 0.0
  %398 = vmatprep.subr.mxu0 0.0
  %399 = vmatpush1.xpose.msra.mxu0 0.0
  %400 = vmatprep.subr.mxu0 0.0
  %401 = vmatpush1.xpose.msra.mxu0 0.0
  %402 = vmatprep.subr.mxu0 0.0
  %403 = vmatpush1.xpose.msra.mxu0 0.0
  %404 = vmatprep.subr.mxu0 0.0
  %405 = vmatpush1.xpose.msra.mxu0 0.0
  %406 = vmatprep.subr.mxu0 0.0
  %407 = vmatpush1.xpose.msra.mxu0 0.0
  %408 = vmatprep.subr.mxu0 0.0
  %409 = vmatpush1.xpose.msra.mxu0 0.0
  %410 = vmatprep.subr.mxu0 0.0
  %411 = vmatpush1.xpose.msra.mxu0 0.0
  %412 = vmatprep.subr.mxu0 0.0
  %413 = vmatpush1.xpose.msra.mxu0 0.0
  %414 = vmatprep.subr.mxu0 0.0
  %415 = vmatpush1.xpose.msra.mxu0 0.0
  %416 = vmatprep.subr.mxu0 0.0
  %417 = vmatpush1.xpose.msra.mxu0 0.0
  %418 = vmatprep.subr.mxu0 0.0
  %419 = vmatpush1.xpose.msra.mxu0 0.0
  %420 = vmatprep.subr.mxu0 0.0
  %421 = vmatpush1.xpose.msra.mxu0 0.0
  %422 = vmatprep.subr.mxu0 0.0
  %423 = vmatpush1.xpose.msra.mxu0 0.0
  %424 = vmatprep.subr.mxu0 0.0
  %425 = vmatpush1.xpose.msra.mxu0 0.0
  %426 = vmatprep.subr.mxu0 0.0
  %427 = vmatpush1.xpose.msra.mxu0 0.0
  %428 = vmatprep.subr.mxu0 0.0
  %429 = vmatpush1.xpose.msra.mxu0 0.0
  %430 = vmatprep.subr.mxu0 0.0
  %431 = vmatpush1.xpose.msra.mxu0 0.0
  %432 = vmatprep.subr.mxu0 0.0
  %433 = vmatpush1.xpose.msra.mxu0 0.0
  %434 = vmatprep.subr.mxu0 0.0
  %435 = vmatpush1.xpose.msra.mxu0 0.0
  %436 = vmatprep.subr.mxu0 0.0
  %437 = vmatpush1.xpose.msra.mxu0 0.0
  %438 = vmatprep.subr.mxu0 0.0
  %439 = vmatpush1.xpose.msra.mxu0 0.0
  %440 = vmatprep.mubr.f32.mxu0 0.0
  %441 = vmatmul.mubr.f32.gmra.mrb[0].mxu0 %v365
  %v442 = vpop.f32.mrb[0].mxu0
  %v443 = vadd.f32 0.0, %v442
  %v444 = vpop.f32.mrb[0].mxu0
  %445 = vmatprep.mubr.f32.mxu0 0.0
  %446 = vmatmul.mubr.f32.gmra.mrb[0].mxu0 %v368
  %v447 = vpop.f32.mrb[0].mxu0
  %v448 = vadd.f32 0.0, %v447
  %v449 = vpop.f32.mrb[0].mxu0
  %450 = vdwg.mxu0
  %v451 = vmul.f32 %v443, 0.25
  %v452 = vmul.f32 %v448, 0.25
  %v453 = vadd.f32 %v451, %v92
  %v454 = vadd.f32 %v452, %v93
  %v455 = vsel %vm363, %v453, -inf
  %456 = vmax.xlane.f32.xlu0 %v455
  %v457 = vpop.xlane.xlu0 %456
  %v458 = vsel %vm363, %v454, -inf
  %459 = vmax.xlane.f32.xlu0 %v458
  %v460 = vpop.xlane.xlu0 %459
  %v461 = vsub.f32 %v453, %v457
  %v462 = vsub.f32 %v454, %v460
  %v463 = vmul.f32 %v461, 1.442695
  %v464 = vpow.pop %v463
  %v465 = vmul.f32 %v462, 1.442695
  %v466 = vpow.pop %v465
  %v467 = vsel %vm363, %v464, 0.0
  %468 = vadd.xlane.f32.xlu0 %v467
  %v469 = vpop.xlane.xlu0 %468
  %v470 = vsel %vm363, %v466, 0.0
  %471 = vadd.xlane.f32.xlu0 %v470
  %v472 = vpop.xlane.xlu0 %471
  %v473 = vrcp.pop %v469
  %v474 = vrcp.pop %v472
  %v475 = vmul.f32 %v464, %v473
  %v476 = vmul.f32 %v466, %v474
  %v478 = vsel %vm363, %v475, 0
  %v481 = vsel %vm363, %v476, 0
  %483 = vmatprep.subr.mxu0 0.0
  %484 = vmatpush1.msra.mxu0 %v355
  %485 = vmatprep.subr.mxu0 0.0
  %486 = vmatpush1.msra.mxu0 %v360
  %487 = vmatprep.subr.mxu0 0.0
  %488 = vmatpush1.msra.mxu0 0.0
  %489 = vmatprep.subr.mxu0 0.0
  %490 = vmatpush1.msra.mxu0 0.0
  %491 = vmatprep.subr.mxu0 0.0
  %492 = vmatpush1.msra.mxu0 0.0
  %493 = vmatprep.subr.mxu0 0.0
  %494 = vmatpush1.msra.mxu0 0.0
  %495 = vmatprep.subr.mxu0 0.0
  %496 = vmatpush1.msra.mxu0 0.0
  %497 = vmatprep.subr.mxu0 0.0
  %498 = vmatpush1.msra.mxu0 0.0
  %499 = vmatprep.subr.mxu0 0.0
  %500 = vmatpush1.msra.mxu0 0.0
  %501 = vmatprep.subr.mxu0 0.0
  %502 = vmatpush1.msra.mxu0 0.0
  %503 = vmatprep.subr.mxu0 0.0
  %504 = vmatpush1.msra.mxu0 0.0
  %505 = vmatprep.subr.mxu0 0.0
  %506 = vmatpush1.msra.mxu0 0.0
  %507 = vmatprep.subr.mxu0 0.0
  %508 = vmatpush1.msra.mxu0 0.0
  %509 = vmatprep.subr.mxu0 0.0
  %510 = vmatpush1.msra.mxu0 0.0
  %511 = vmatprep.subr.mxu0 0.0
  %512 = vmatpush1.msra.mxu0 0.0
  %513 = vmatprep.subr.mxu0 0.0
  %514 = vmatpush1.msra.mxu0 0.0
  %515 = vmatprep.subr.mxu0 0.0
  %516 = vmatpush1.msra.mxu0 0.0
  %517 = vmatprep.subr.mxu0 0.0
  %518 = vmatpush1.msra.mxu0 0.0
  %519 = vmatprep.subr.mxu0 0.0
  %520 = vmatpush1.msra.mxu0 0.0
  %521 = vmatprep.subr.mxu0 0.0
  %522 = vmatpush1.msra.mxu0 0.0
  %523 = vmatprep.subr.mxu0 0.0
  %524 = vmatpush1.msra.mxu0 0.0
  %525 = vmatprep.subr.mxu0 0.0
  %526 = vmatpush1.msra.mxu0 0.0
  %527 = vmatprep.subr.mxu0 0.0
  %528 = vmatpush1.msra.mxu0 0.0
  %529 = vmatprep.subr.mxu0 0.0
  %530 = vmatpush1.msra.mxu0 0.0
  %531 = vmatprep.subr.mxu0 0.0
  %532 = vmatpush1.msra.mxu0 0.0
  %533 = vmatprep.subr.mxu0 0.0
  %534 = vmatpush1.msra.mxu0 0.0
  %535 = vmatprep.subr.mxu0 0.0
  %536 = vmatpush1.msra.mxu0 0.0
  %537 = vmatprep.subr.mxu0 0.0
  %538 = vmatpush1.msra.mxu0 0.0
  %539 = vmatprep.subr.mxu0 0.0
  %540 = vmatpush1.msra.mxu0 0.0
  %541 = vmatprep.subr.mxu0 0.0
  %542 = vmatpush1.msra.mxu0 0.0
  %543 = vmatprep.subr.mxu0 0.0
  %544 = vmatpush1.msra.mxu0 0.0
  %545 = vmatprep.subr.mxu0 0.0
  %546 = vmatpush1.msra.mxu0 0.0
  %547 = vmatprep.mubr.f32.mxu0 0.0
  %548 = vmatmul.mubr.f32.gmra.mrb[0].mxu0 %v478
  %v549 = vpop.f32.mrb[0].mxu0
  %v550 = vadd.f32 0.0, %v549
  %v551 = vpop.f32.mrb[0].mxu0
  %552 = vmatprep.mubr.f32.mxu0 0.0
  %553 = vmatmul.mubr.f32.gmra.mrb[0].mxu0 %v481
  %v554 = vpop.f32.mrb[0].mxu0
  %v555 = vadd.f32 0.0, %v554
  %v556 = vpop.f32.mrb[0].mxu0
  %557 = vdwg.mxu0
  %v558 = vld [vmem:[%s5] sm:$0xff]
  %v559 = vld [vmem:[%s5 + $0x8] sm:$0xff]
  %s560 = scalar_lea.vmem %s3, 32
  %v561 = vld [vmem:[%s560] sm:$0xff]
  %v562 = vld [vmem:[%s560 + $0x8] sm:$0xff]
  %v563 = vld [vmem:[%s560 + $0x10] sm:$0xff]
  %v564 = vld [vmem:[%s560 + $0x18] sm:$0xff]
  %s565 = scalar_lea.vmem %s4, 1
  %v566 = vld [vmem:[%s565] sm:$0x1]
  %v568 = vlaneseq
  %v569 = vshrl.u32 %v568, 7
  %v570 = vsub.s32 0, %v569
  %v571 = vrot.slane %v566, %v570
  %573 = vmatprep.subr.mxu0 0.0
  %574 = vmatpush1.msra.mxu0 %v561
  %575 = vmatprep.subr.mxu0 0.0
  %576 = vmatpush1.msra.mxu0 %v562
  %577 = vmatprep.subr.mxu0 0.0
  %578 = vmatpush1.msra.mxu0 %v563
  %579 = vmatprep.subr.mxu0 0.0
  %580 = vmatpush1.msra.mxu0 %v564
  %581 = vmatprep.subr.mxu0 0.0
  %582 = vmatpush1.msra.mxu0 0.0
  %583 = vmatprep.subr.mxu0 0.0
  %584 = vmatpush1.msra.mxu0 0.0
  %585 = vmatprep.subr.mxu0 0.0
  %586 = vmatpush1.msra.mxu0 0.0
  %587 = vmatprep.subr.mxu0 0.0
  %588 = vmatpush1.msra.mxu0 0.0
  %589 = vmatprep.subr.mxu0 0.0
  %590 = vmatpush1.msra.mxu0 0.0
  %591 = vmatprep.subr.mxu0 0.0
  %592 = vmatpush1.msra.mxu0 0.0
  %593 = vmatprep.subr.mxu0 0.0
  %594 = vmatpush1.msra.mxu0 0.0
  %595 = vmatprep.subr.mxu0 0.0
  %596 = vmatpush1.msra.mxu0 0.0
  %597 = vmatprep.subr.mxu0 0.0
  %598 = vmatpush1.msra.mxu0 0.0
  %599 = vmatprep.subr.mxu0 0.0
  %600 = vmatpush1.msra.mxu0 0.0
  %601 = vmatprep.subr.mxu0 0.0
  %602 = vmatpush1.msra.mxu0 0.0
  %603 = vmatprep.subr.mxu0 0.0
  %604 = vmatpush1.msra.mxu0 0.0
  %605 = vmatprep.subr.mxu0 0.0
  %606 = vmatpush1.msra.mxu0 0.0
  %607 = vmatprep.subr.mxu0 0.0
  %608 = vmatpush1.msra.mxu0 0.0
  %609 = vmatprep.subr.mxu0 0.0
  %610 = vmatpush1.msra.mxu0 0.0
  %611 = vmatprep.subr.mxu0 0.0
  %612 = vmatpush1.msra.mxu0 0.0
  %613 = vmatprep.subr.mxu0 0.0
  %614 = vmatpush1.msra.mxu0 0.0
  %615 = vmatprep.subr.mxu0 0.0
  %616 = vmatpush1.msra.mxu0 0.0
  %617 = vmatprep.subr.mxu0 0.0
  %618 = vmatpush1.msra.mxu0 0.0
  %619 = vmatprep.subr.mxu0 0.0
  %620 = vmatpush1.msra.mxu0 0.0
  %621 = vmatprep.subr.mxu0 0.0
  %622 = vmatpush1.msra.mxu0 0.0
  %623 = vmatprep.subr.mxu0 0.0
  %624 = vmatpush1.msra.mxu0 0.0
  %625 = vmatprep.subr.mxu0 0.0
  %626 = vmatpush1.msra.mxu0 0.0
  %627 = vmatprep.subr.mxu0 0.0
  %628 = vmatpush1.msra.mxu0 0.0
  %629 = vmatprep.subr.mxu0 0.0
  %630 = vmatpush1.msra.mxu0 0.0
  %631 = vmatprep.subr.mxu0 0.0
  %632 = vmatpush1.msra.mxu0 0.0
  %633 = vmatprep.subr.mxu0 0.0
  %634 = vmatpush1.msra.mxu0 0.0
  %635 = vmatprep.subr.mxu0 0.0
  %636 = vmatpush1.msra.mxu0 0.0
  %637 = vmatprep.mubr.f32.mxu0 0.0
  %638 = vmatmul.mubr.f32.gmra.mrb[0].mxu0 %v107
  %v639 = vpop.f32.mrb[0].mxu0
  %v640 = vadd.f32 %v571, %v639
  %v641 = vpop.f32.mrb[0].mxu0
  %642 = vmatprep.mubr.f32.mxu0 0.0
  %643 = vmatmul.mubr.f32.gmra.mrb[0].mxu0 %v110
  %v644 = vpop.f32.mrb[0].mxu0
  %v645 = vadd.f32 %v571, %v644
  %v646 = vpop.f32.mrb[0].mxu0
  %647 = vdwg.mxu0
  %s648 = scalar_lea.vmem %s3, 96
  %v649 = vld [vmem:[%s648] sm:$0xff]
  %v650 = vld [vmem:[%s648 + $0x8] sm:$0xff]
  %v651 = vld [vmem:[%s648 + $0x10] sm:$0xff]
  %v652 = vld [vmem:[%s648 + $0x18] sm:$0xff]
  %s653 = scalar_lea.vmem %s4, 3
  %v654 = vld [vmem:[%s653] sm:$0x1]
  %v656 = vlaneseq
  %v657 = vshrl.u32 %v656, 7
  %v658 = vsub.s32 0, %v657
  %v659 = vrot.slane %v654, %v658
  %661 = vmatprep.subr.mxu0 0.0
  %662 = vmatpush1.msra.mxu0 %v649
  %663 = vmatprep.subr.mxu0 0.0
  %664 = vmatpush1.msra.mxu0 %v650
  %665 = vmatprep.subr.mxu0 0.0
  %666 = vmatpush1.msra.mxu0 %v651
  %667 = vmatprep.subr.mxu0 0.0
  %668 = vmatpush1.msra.mxu0 %v652
  %669 = vmatprep.subr.mxu0 0.0
  %670 = vmatpush1.msra.mxu0 0.0
  %671 = vmatprep.subr.mxu0 0.0
  %672 = vmatpush1.msra.mxu0 0.0
  %673 = vmatprep.subr.mxu0 0.0
  %674 = vmatpush1.msra.mxu0 0.0
  %675 = vmatprep.subr.mxu0 0.0
  %676 = vmatpush1.msra.mxu0 0.0
  %677 = vmatprep.subr.mxu0 0.0
  %678 = vmatpush1.msra.mxu0 0.0
  %679 = vmatprep.subr.mxu0 0.0
  %680 = vmatpush1.msra.mxu0 0.0
  %681 = vmatprep.subr.mxu0 0.0
  %682 = vmatpush1.msra.mxu0 0.0
  %683 = vmatprep.subr.mxu0 0.0
  %684 = vmatpush1.msra.mxu0 0.0
  %685 = vmatprep.subr.mxu0 0.0
  %686 = vmatpush1.msra.mxu0 0.0
  %687 = vmatprep.subr.mxu0 0.0
  %688 = vmatpush1.msra.mxu0 0.0
  %689 = vmatprep.subr.mxu0 0.0
  %690 = vmatpush1.msra.mxu0 0.0
  %691 = vmatprep.subr.mxu0 0.0
  %692 = vmatpush1.msra.mxu0 0.0
  %693 = vmatprep.subr.mxu0 0.0
  %694 = vmatpush1.msra.mxu0 0.0
  %695 = vmatprep.subr.mxu0 0.0
  %696 = vmatpush1.msra.mxu0 0.0
  %697 = vmatprep.subr.mxu0 0.0
  %698 = vmatpush1.msra.mxu0 0.0
  %699 = vmatprep.subr.mxu0 0.0
  %700 = vmatpush1.msra.mxu0 0.0
  %701 = vmatprep.subr.mxu0 0.0
  %702 = vmatpush1.msra.mxu0 0.0
  %703 = vmatprep.subr.mxu0 0.0
  %704 = vmatpush1.msra.mxu0 0.0
  %705 = vmatprep.subr.mxu0 0.0
  %706 = vmatpush1.msra.mxu0 0.0
  %707 = vmatprep.subr.mxu0 0.0
  %708 = vmatpush1.msra.mxu0 0.0
  %709 = vmatprep.subr.mxu0 0.0
  %710 = vmatpush1.msra.mxu0 0.0
  %711 = vmatprep.subr.mxu0 0.0
  %712 = vmatpush1.msra.mxu0 0.0
  %713 = vmatprep.subr.mxu0 0.0
  %714 = vmatpush1.msra.mxu0 0.0
  %715 = vmatprep.subr.mxu0 0.0
  %716 = vmatpush1.msra.mxu0 0.0
  %717 = vmatprep.subr.mxu0 0.0
  %718 = vmatpush1.msra.mxu0 0.0
  %719 = vmatprep.subr.mxu0 0.0
  %720 = vmatpush1.msra.mxu0 0.0
  %721 = vmatprep.subr.mxu0 0.0
  %722 = vmatpush1.msra.mxu0 0.0
  %723 = vmatprep.subr.mxu0 0.0
  %724 = vmatpush1.msra.mxu0 0.0
  %725 = vmatprep.mubr.f32.mxu0 0.0
  %726 = vmatmul.mubr.f32.gmra.mrb[0].mxu0 %v107
  %v727 = vpop.f32.mrb[0].mxu0
  %v728 = vadd.f32 %v659, %v727
  %v729 = vpop.f32.mrb[0].mxu0
  %730 = vmatprep.mubr.f32.mxu0 0.0
  %731 = vmatmul.mubr.f32.gmra.mrb[0].mxu0 %v110
  %v732 = vpop.f32.mrb[0].mxu0
  %v733 = vadd.f32 %v659, %v732
  %v734 = vpop.f32.mrb[0].mxu0
  %735 = vdwg.mxu0
  %s736 = scalar_lea.vmem %s3, 160
  %v737 = vld [vmem:[%s736] sm:$0xff]
  %v738 = vld [vmem:[%s736 + $0x8] sm:$0xff]
  %v739 = vld [vmem:[%s736 + $0x10] sm:$0xff]
  %v740 = vld [vmem:[%s736 + $0x18] sm:$0xff]
  %s741 = scalar_lea.vmem %s4, 5
  %v742 = vld [vmem:[%s741] sm:$0x1]
  %v744 = vlaneseq
  %v745 = vshrl.u32 %v744, 7
  %v746 = vsub.s32 0, %v745
  %v747 = vrot.slane %v742, %v746
  %749 = vmatprep.subr.mxu0 0.0
  %750 = vmatpush1.msra.mxu0 %v737
  %751 = vmatprep.subr.mxu0 0.0
  %752 = vmatpush1.msra.mxu0 %v738
  %753 = vmatprep.subr.mxu0 0.0
  %754 = vmatpush1.msra.mxu0 %v739
  %755 = vmatprep.subr.mxu0 0.0
  %756 = vmatpush1.msra.mxu0 %v740
  %757 = vmatprep.subr.mxu0 0.0
  %758 = vmatpush1.msra.mxu0 0.0
  %759 = vmatprep.subr.mxu0 0.0
  %760 = vmatpush1.msra.mxu0 0.0
  %761 = vmatprep.subr.mxu0 0.0
  %762 = vmatpush1.msra.mxu0 0.0
  %763 = vmatprep.subr.mxu0 0.0
  %764 = vmatpush1.msra.mxu0 0.0
  %765 = vmatprep.subr.mxu0 0.0
  %766 = vmatpush1.msra.mxu0 0.0
  %767 = vmatprep.subr.mxu0 0.0
  %768 = vmatpush1.msra.mxu0 0.0
  %769 = vmatprep.subr.mxu0 0.0
  %770 = vmatpush1.msra.mxu0 0.0
  %771 = vmatprep.subr.mxu0 0.0
  %772 = vmatpush1.msra.mxu0 0.0
  %773 = vmatprep.subr.mxu0 0.0
  %774 = vmatpush1.msra.mxu0 0.0
  %775 = vmatprep.subr.mxu0 0.0
  %776 = vmatpush1.msra.mxu0 0.0
  %777 = vmatprep.subr.mxu0 0.0
  %778 = vmatpush1.msra.mxu0 0.0
  %779 = vmatprep.subr.mxu0 0.0
  %780 = vmatpush1.msra.mxu0 0.0
  %781 = vmatprep.subr.mxu0 0.0
  %782 = vmatpush1.msra.mxu0 0.0
  %783 = vmatprep.subr.mxu0 0.0
  %784 = vmatpush1.msra.mxu0 0.0
  %785 = vmatprep.subr.mxu0 0.0
  %786 = vmatpush1.msra.mxu0 0.0
  %787 = vmatprep.subr.mxu0 0.0
  %788 = vmatpush1.msra.mxu0 0.0
  %789 = vmatprep.subr.mxu0 0.0
  %790 = vmatpush1.msra.mxu0 0.0
  %791 = vmatprep.subr.mxu0 0.0
  %792 = vmatpush1.msra.mxu0 0.0
  %793 = vmatprep.subr.mxu0 0.0
  %794 = vmatpush1.msra.mxu0 0.0
  %795 = vmatprep.subr.mxu0 0.0
  %796 = vmatpush1.msra.mxu0 0.0
  %797 = vmatprep.subr.mxu0 0.0
  %798 = vmatpush1.msra.mxu0 0.0
  %799 = vmatprep.subr.mxu0 0.0
  %800 = vmatpush1.msra.mxu0 0.0
  %801 = vmatprep.subr.mxu0 0.0
  %802 = vmatpush1.msra.mxu0 0.0
  %803 = vmatprep.subr.mxu0 0.0
  %804 = vmatpush1.msra.mxu0 0.0
  %805 = vmatprep.subr.mxu0 0.0
  %806 = vmatpush1.msra.mxu0 0.0
  %807 = vmatprep.subr.mxu0 0.0
  %808 = vmatpush1.msra.mxu0 0.0
  %809 = vmatprep.subr.mxu0 0.0
  %810 = vmatpush1.msra.mxu0 0.0
  %811 = vmatprep.subr.mxu0 0.0
  %812 = vmatpush1.msra.mxu0 0.0
  %813 = vmatprep.mubr.f32.mxu0 0.0
  %814 = vmatmul.mubr.f32.gmra.mrb[0].mxu0 %v107
  %v815 = vpop.f32.mrb[0].mxu0
  %v816 = vadd.f32 %v747, %v815
  %v817 = vpop.f32.mrb[0].mxu0
  %818 = vmatprep.mubr.f32.mxu0 0.0
  %819 = vmatmul.mubr.f32.gmra.mrb[0].mxu0 %v110
  %v820 = vpop.f32.mrb[0].mxu0
  %v821 = vadd.f32 %v747, %v820
  %v822 = vpop.f32.mrb[0].mxu0
  %823 = vdwg.mxu0
  %v825 = vsel %vm363, %v640, 0
  %v828 = vsel %vm363, %v645, 0
  %v831 = vsel %vm363, %v728, 0
  %v834 = vsel %vm363, %v733, 0
  %836 = vmatprep.subr.mxu0 0.0
  %837 = vmatpush1.xpose.msra.mxu0 %v831
  %838 = vmatprep.subr.mxu0 0.0
  %839 = vmatpush1.xpose.msra.mxu0 %v834
  %840 = vmatprep.subr.mxu0 0.0
  %841 = vmatpush1.xpose.msra.mxu0 0.0
  %842 = vmatprep.subr.mxu0 0.0
  %843 = vmatpush1.xpose.msra.mxu0 0.0
  %844 = vmatprep.subr.mxu0 0.0
  %845 = vmatpush1.xpose.msra.mxu0 0.0
  %846 = vmatprep.subr.mxu0 0.0
  %847 = vmatpush1.xpose.msra.mxu0 0.0
  %848 = vmatprep.subr.mxu0 0.0
  %849 = vmatpush1.xpose.msra.mxu0 0.0
  %850 = vmatprep.subr.mxu0 0.0
  %851 = vmatpush1.xpose.msra.mxu0 0.0
  %852 = vmatprep.subr.mxu0 0.0
  %853 = vmatpush1.xpose.msra.mxu0 0.0
  %854 = vmatprep.subr.mxu0 0.0
  %855 = vmatpush1.xpose.msra.mxu0 0.0
  %856 = vmatprep.subr.mxu0 0.0
  %857 = vmatpush1.xpose.msra.mxu0 0.0
  %858 = vmatprep.subr.mxu0 0.0
  %859 = vmatpush1.xpose.msra.mxu0 0.0
  %860 = vmatprep.subr.mxu0 0.0
  %861 = vmatpush1.xpose.msra.mxu0 0.0
  %862 = vmatprep.subr.mxu0 0.0
  %863 = vmatpush1.xpose.msra.mxu0 0.0
  %864 = vmatprep.subr.mxu0 0.0
  %865 = vmatpush1.xpose.msra.mxu0 0.0
  %866 = vmatprep.subr.mxu0 0.0
  %867 = vmatpush1.xpose.msra.mxu0 0.0
  %868 = vmatprep.subr.mxu0 0.0
  %869 = vmatpush1.xpose.msra.mxu0 0.0
  %870 = vmatprep.subr.mxu0 0.0
  %871 = vmatpush1.xpose.msra.mxu0 0.0
  %872 = vmatprep.subr.mxu0 0.0
  %873 = vmatpush1.xpose.msra.mxu0 0.0
  %874 = vmatprep.subr.mxu0 0.0
  %875 = vmatpush1.xpose.msra.mxu0 0.0
  %876 = vmatprep.subr.mxu0 0.0
  %877 = vmatpush1.xpose.msra.mxu0 0.0
  %878 = vmatprep.subr.mxu0 0.0
  %879 = vmatpush1.xpose.msra.mxu0 0.0
  %880 = vmatprep.subr.mxu0 0.0
  %881 = vmatpush1.xpose.msra.mxu0 0.0
  %882 = vmatprep.subr.mxu0 0.0
  %883 = vmatpush1.xpose.msra.mxu0 0.0
  %884 = vmatprep.subr.mxu0 0.0
  %885 = vmatpush1.xpose.msra.mxu0 0.0
  %886 = vmatprep.subr.mxu0 0.0
  %887 = vmatpush1.xpose.msra.mxu0 0.0
  %888 = vmatprep.subr.mxu0 0.0
  %889 = vmatpush1.xpose.msra.mxu0 0.0
  %890 = vmatprep.subr.mxu0 0.0
  %891 = vmatpush1.xpose.msra.mxu0 0.0
  %892 = vmatprep.subr.mxu0 0.0
  %893 = vmatpush1.xpose.msra.mxu0 0.0
  %894 = vmatprep.subr.mxu0 0.0
  %895 = vmatpush1.xpose.msra.mxu0 0.0
  %896 = vmatprep.subr.mxu0 0.0
  %897 = vmatpush1.xpose.msra.mxu0 0.0
  %898 = vmatprep.subr.mxu0 0.0
  %899 = vmatpush1.xpose.msra.mxu0 0.0
  %900 = vmatprep.mubr.f32.mxu0 0.0
  %901 = vmatmul.mubr.f32.gmra.mrb[0].mxu0 %v825
  %v902 = vpop.f32.mrb[0].mxu0
  %v903 = vadd.f32 0.0, %v902
  %v904 = vpop.f32.mrb[0].mxu0
  %905 = vmatprep.mubr.f32.mxu0 0.0
  %906 = vmatmul.mubr.f32.gmra.mrb[0].mxu0 %v828
  %v907 = vpop.f32.mrb[0].mxu0
  %v908 = vadd.f32 0.0, %v907
  %v909 = vpop.f32.mrb[0].mxu0
  %910 = vdwg.mxu0
  %v911 = vmul.f32 %v903, 0.25
  %v912 = vmul.f32 %v908, 0.25
  %v913 = vadd.f32 %v911, %v92
  %v914 = vadd.f32 %v912, %v93
  %v915 = vsel %vm363, %v913, -inf
  %916 = vmax.xlane.f32.xlu0 %v915
  %v917 = vpop.xlane.xlu0 %916
  %v918 = vsel %vm363, %v914, -inf
  %919 = vmax.xlane.f32.xlu0 %v918
  %v920 = vpop.xlane.xlu0 %919
  %v921 = vsub.f32 %v913, %v917
  %v922 = vsub.f32 %v914, %v920
  %v923 = vmul.f32 %v921, 1.442695
  %v924 = vpow.pop %v923
  %v925 = vmul.f32 %v922, 1.442695
  %v926 = vpow.pop %v925
  %v927 = vsel %vm363, %v924, 0.0
  %928 = vadd.xlane.f32.xlu0 %v927
  %v929 = vpop.xlane.xlu0 %928
  %v930 = vsel %vm363, %v926, 0.0
  %931 = vadd.xlane.f32.xlu0 %v930
  %v932 = vpop.xlane.xlu0 %931
  %v933 = vrcp.pop %v929
  %v934 = vrcp.pop %v932
  %v935 = vmul.f32 %v924, %v933
  %v936 = vmul.f32 %v926, %v934
  %v938 = vsel %vm363, %v935, 0
  %v941 = vsel %vm363, %v936, 0
  %943 = vmatprep.subr.mxu0 0.0
  %944 = vmatpush1.msra.mxu0 %v816
  %945 = vmatprep.subr.mxu0 0.0
  %946 = vmatpush1.msra.mxu0 %v821
  %947 = vmatprep.subr.mxu0 0.0
  %948 = vmatpush1.msra.mxu0 0.0
  %949 = vmatprep.subr.mxu0 0.0
  %950 = vmatpush1.msra.mxu0 0.0
  %951 = vmatprep.subr.mxu0 0.0
  %952 = vmatpush1.msra.mxu0 0.0
  %953 = vmatprep.subr.mxu0 0.0
  %954 = vmatpush1.msra.mxu0 0.0
  %955 = vmatprep.subr.mxu0 0.0
  %956 = vmatpush1.msra.mxu0 0.0
  %957 = vmatprep.subr.mxu0 0.0
  %958 = vmatpush1.msra.mxu0 0.0
  %959 = vmatprep.subr.mxu0 0.0
  %960 = vmatpush1.msra.mxu0 0.0
  %961 = vmatprep.subr.mxu0 0.0
  %962 = vmatpush1.msra.mxu0 0.0
  %963 = vmatprep.subr.mxu0 0.0
  %964 = vmatpush1.msra.mxu0 0.0
  %965 = vmatprep.subr.mxu0 0.0
  %966 = vmatpush1.msra.mxu0 0.0
  %967 = vmatprep.subr.mxu0 0.0
  %968 = vmatpush1.msra.mxu0 0.0
  %969 = vmatprep.subr.mxu0 0.0
  %970 = vmatpush1.msra.mxu0 0.0
  %971 = vmatprep.subr.mxu0 0.0
  %972 = vmatpush1.msra.mxu0 0.0
  %973 = vmatprep.subr.mxu0 0.0
  %974 = vmatpush1.msra.mxu0 0.0
  %975 = vmatprep.subr.mxu0 0.0
  %976 = vmatpush1.msra.mxu0 0.0
  %977 = vmatprep.subr.mxu0 0.0
  %978 = vmatpush1.msra.mxu0 0.0
  %979 = vmatprep.subr.mxu0 0.0
  %980 = vmatpush1.msra.mxu0 0.0
  %981 = vmatprep.subr.mxu0 0.0
  %982 = vmatpush1.msra.mxu0 0.0
  %983 = vmatprep.subr.mxu0 0.0
  %984 = vmatpush1.msra.mxu0 0.0
  %985 = vmatprep.subr.mxu0 0.0
  %986 = vmatpush1.msra.mxu0 0.0
  %987 = vmatprep.subr.mxu0 0.0
  %988 = vmatpush1.msra.mxu0 0.0
  %989 = vmatprep.subr.mxu0 0.0
  %990 = vmatpush1.msra.mxu0 0.0
  %991 = vmatprep.subr.mxu0 0.0
  %992 = vmatpush1.msra.mxu0 0.0
  %993 = vmatprep.subr.mxu0 0.0
  %994 = vmatpush1.msra.mxu0 0.0
  %995 = vmatprep.subr.mxu0 0.0
  %996 = vmatpush1.msra.mxu0 0.0
  %997 = vmatprep.subr.mxu0 0.0
  %998 = vmatpush1.msra.mxu0 0.0
  %999 = vmatprep.subr.mxu0 0.0
  %1000 = vmatpush1.msra.mxu0 0.0
  %1001 = vmatprep.subr.mxu0 0.0
  %1002 = vmatpush1.msra.mxu0 0.0
  %1003 = vmatprep.subr.mxu0 0.0
  %1004 = vmatpush1.msra.mxu0 0.0
  %1005 = vmatprep.subr.mxu0 0.0
  %1006 = vmatpush1.msra.mxu0 0.0
  %1007 = vmatprep.mubr.f32.mxu0 0.0
  %1008 = vmatmul.mubr.f32.gmra.mrb[0].mxu0 %v938
  %v1009 = vpop.f32.mrb[0].mxu0
  %v1010 = vadd.f32 0.0, %v1009
  %v1011 = vpop.f32.mrb[0].mxu0
  %1012 = vmatprep.mubr.f32.mxu0 0.0
  %1013 = vmatmul.mubr.f32.gmra.mrb[0].mxu0 %v941
  %v1014 = vpop.f32.mrb[0].mxu0
  %v1015 = vadd.f32 0.0, %v1014
  %v1016 = vpop.f32.mrb[0].mxu0
  %1017 = vdwg.mxu0
  %s1018 = scalar_lea.vmem %s5, 16
  %v1019 = vld [vmem:[%s1018] sm:$0xff]
  %v1020 = vld [vmem:[%s1018 + $0x8] sm:$0xff]
  %v1022 = vsel %vm363, %v1010, 0
  %v1025 = vsel %vm363, %v1015, 0
  %1027 = vmatprep.subr.mxu0 0.0
  %1028 = vmatpush1.msra.mxu0 %v1019
  %1029 = vmatprep.subr.mxu0 0.0
  %1030 = vmatpush1.msra.mxu0 %v1020
  %1031 = vmatprep.subr.mxu0 0.0
  %1032 = vmatpush1.msra.mxu0 0.0
  %1033 = vmatprep.subr.mxu0 0.0
  %1034 = vmatpush1.msra.mxu0 0.0
  %1035 = vmatprep.subr.mxu0 0.0
  %1036 = vmatpush1.msra.mxu0 0.0
  %1037 = vmatprep.subr.mxu0 0.0
  %1038 = vmatpush1.msra.mxu0 0.0
  %1039 = vmatprep.subr.mxu0 0.0
  %1040 = vmatpush1.msra.mxu0 0.0
  %1041 = vmatprep.subr.mxu0 0.0
  %1042 = vmatpush1.msra.mxu0 0.0
  %1043 = vmatprep.subr.mxu0 0.0
  %1044 = vmatpush1.msra.mxu0 0.0
  %1045 = vmatprep.subr.mxu0 0.0
  %1046 = vmatpush1.msra.mxu0 0.0
  %1047 = vmatprep.subr.mxu0 0.0
  %1048 = vmatpush1.msra.mxu0 0.0
  %1049 = vmatprep.subr.mxu0 0.0
  %1050 = vmatpush1.msra.mxu0 0.0
  %1051 = vmatprep.subr.mxu0 0.0
  %1052 = vmatpush1.msra.mxu0 0.0
  %1053 = vmatprep.subr.mxu0 0.0
  %1054 = vmatpush1.msra.mxu0 0.0
  %1055 = vmatprep.subr.mxu0 0.0
  %1056 = vmatpush1.msra.mxu0 0.0
  %1057 = vmatprep.subr.mxu0 0.0
  %1058 = vmatpush1.msra.mxu0 0.0
  %1059 = vmatprep.subr.mxu0 0.0
  %1060 = vmatpush1.msra.mxu0 0.0
  %1061 = vmatprep.subr.mxu0 0.0
  %1062 = vmatpush1.msra.mxu0 0.0
  %1063 = vmatprep.subr.mxu0 0.0
  %1064 = vmatpush1.msra.mxu0 0.0
  %1065 = vmatprep.subr.mxu0 0.0
  %1066 = vmatpush1.msra.mxu0 0.0
  %1067 = vmatprep.subr.mxu0 0.0
  %1068 = vmatpush1.msra.mxu0 0.0
  %1069 = vmatprep.subr.mxu0 0.0
  %1070 = vmatpush1.msra.mxu0 0.0
  %1071 = vmatprep.subr.mxu0 0.0
  %1072 = vmatpush1.msra.mxu0 0.0
  %1073 = vmatprep.subr.mxu0 0.0
  %1074 = vmatpush1.msra.mxu0 0.0
  %1075 = vmatprep.subr.mxu0 0.0
  %1076 = vmatpush1.msra.mxu0 0.0
  %1077 = vmatprep.subr.mxu0 0.0
  %1078 = vmatpush1.msra.mxu0 0.0
  %1079 = vmatprep.subr.mxu0 0.0
  %1080 = vmatpush1.msra.mxu0 0.0
  %1081 = vmatprep.subr.mxu0 0.0
  %1082 = vmatpush1.msra.mxu0 0.0
  %1083 = vmatprep.subr.mxu0 0.0
  %1084 = vmatpush1.msra.mxu0 0.0
  %1085 = vmatprep.subr.mxu0 0.0
  %1086 = vmatpush1.msra.mxu0 0.0
  %1087 = vmatprep.subr.mxu0 0.0
  %1088 = vmatpush1.msra.mxu0 0.0
  %1089 = vmatprep.subr.mxu0 0.0
  %1090 = vmatpush1.msra.mxu0 0.0
  %1091 = vmatprep.mubr.f32.mxu0 0.0
  %1092 = vmatmul.mubr.f32.gmra.mrb[0].mxu0 %v1022
  %v1093 = vpop.f32.mrb[0].mxu0
  %v1094 = vadd.f32 0.0, %v1093
  %v1095 = vpop.f32.mrb[0].mxu0
  %1096 = vmatprep.mubr.f32.mxu0 0.0
  %1097 = vmatmul.mubr.f32.gmra.mrb[0].mxu0 %v1025
  %v1098 = vpop.f32.mrb[0].mxu0
  %v1099 = vadd.f32 0.0, %v1098
  %v1100 = vpop.f32.mrb[0].mxu0
  %1101 = vdwg.mxu0
  %v1103 = vsel %vm363, %v550, 0
  %v1106 = vsel %vm363, %v555, 0
  %1108 = vmatprep.subr.mxu0 0.0
  %1109 = vmatpush1.msra.mxu0 %v558
  %1110 = vmatprep.subr.mxu0 0.0
  %1111 = vmatpush1.msra.mxu0 %v559
  %1112 = vmatprep.subr.mxu0 0.0
  %1113 = vmatpush1.msra.mxu0 0.0
  %1114 = vmatprep.subr.mxu0 0.0
  %1115 = vmatpush1.msra.mxu0 0.0
  %1116 = vmatprep.subr.mxu0 0.0
  %1117 = vmatpush1.msra.mxu0 0.0
  %1118 = vmatprep.subr.mxu0 0.0
  %1119 = vmatpush1.msra.mxu0 0.0
  %1120 = vmatprep.subr.mxu0 0.0
  %1121 = vmatpush1.msra.mxu0 0.0
  %1122 = vmatprep.subr.mxu0 0.0
  %1123 = vmatpush1.msra.mxu0 0.0
  %1124 = vmatprep.subr.mxu0 0.0
  %1125 = vmatpush1.msra.mxu0 0.0
  %1126 = vmatprep.subr.mxu0 0.0
  %1127 = vmatpush1.msra.mxu0 0.0
  %1128 = vmatprep.subr.mxu0 0.0
  %1129 = vmatpush1.msra.mxu0 0.0
  %1130 = vmatprep.subr.mxu0 0.0
  %1131 = vmatpush1.msra.mxu0 0.0
  %1132 = vmatprep.subr.mxu0 0.0
  %1133 = vmatpush1.msra.mxu0 0.0
  %1134 = vmatprep.subr.mxu0 0.0
  %1135 = vmatpush1.msra.mxu0 0.0
  %1136 = vmatprep.subr.mxu0 0.0
  %1137 = vmatpush1.msra.mxu0 0.0
  %1138 = vmatprep.subr.mxu0 0.0
  %1139 = vmatpush1.msra.mxu0 0.0
  %1140 = vmatprep.subr.mxu0 0.0
  %1141 = vmatpush1.msra.mxu0 0.0
  %1142 = vmatprep.subr.mxu0 0.0
  %1143 = vmatpush1.msra.mxu0 0.0
  %1144 = vmatprep.subr.mxu0 0.0
  %1145 = vmatpush1.msra.mxu0 0.0
  %1146 = vmatprep.subr.mxu0 0.0
  %1147 = vmatpush1.msra.mxu0 0.0
  %1148 = vmatprep.subr.mxu0 0.0
  %1149 = vmatpush1.msra.mxu0 0.0
  %1150 = vmatprep.subr.mxu0 0.0
  %1151 = vmatpush1.msra.mxu0 0.0
  %1152 = vmatprep.subr.mxu0 0.0
  %1153 = vmatpush1.msra.mxu0 0.0
  %1154 = vmatprep.subr.mxu0 0.0
  %1155 = vmatpush1.msra.mxu0 0.0
  %1156 = vmatprep.subr.mxu0 0.0
  %1157 = vmatpush1.msra.mxu0 0.0
  %1158 = vmatprep.subr.mxu0 0.0
  %1159 = vmatpush1.msra.mxu0 0.0
  %1160 = vmatprep.subr.mxu0 0.0
  %1161 = vmatpush1.msra.mxu0 0.0
  %1162 = vmatprep.subr.mxu0 0.0
  %1163 = vmatpush1.msra.mxu0 0.0
  %1164 = vmatprep.subr.mxu0 0.0
  %1165 = vmatpush1.msra.mxu0 0.0
  %1166 = vmatprep.subr.mxu0 0.0
  %1167 = vmatpush1.msra.mxu0 0.0
  %1168 = vmatprep.subr.mxu0 0.0
  %1169 = vmatpush1.msra.mxu0 0.0
  %1170 = vmatprep.subr.mxu0 0.0
  %1171 = vmatpush1.msra.mxu0 0.0
  %1172 = vmatprep.mubr.f32.mxu0 0.0
  %1173 = vmatmul.mubr.f32.gmra.mrb[0].mxu0 %v1103
  %v1174 = vpop.f32.mrb[0].mxu0
  %v1175 = vadd.f32 %v1094, %v1174
  %v1176 = vpop.f32.mrb[0].mxu0
  %1177 = vmatprep.mubr.f32.mxu0 0.0
  %1178 = vmatmul.mubr.f32.gmra.mrb[0].mxu0 %v1106
  %v1179 = vpop.f32.mrb[0].mxu0
  %v1180 = vadd.f32 %v1099, %v1179
  %v1181 = vpop.f32.mrb[0].mxu0
  %1182 = vdwg.mxu0
  %v1183 = vlaneseq
  %v1184 = vshrl.u32 %v1183, 7
  %v1185 = vsub.s32 0, %v1184
  %v1186 = vrot.slane %v94, %v1185
  %v1187 = vadd.f32 %v1175, %v1186
  %v1188 = vadd.f32 %v1180, %v1186
  %v1189 = vadd.f32 %v90, %v1187
  %v1190 = vadd.f32 %v91, %v1188
  %v1191 = vsel %vm52, %v1189, 0.0
  %1192 = vadd.xlane.f32.xlu0 %v1191
  %v1193 = vpop.xlane.xlu0 %1192
  %v1194 = vsel %vm52, %v1190, 0.0
  %1195 = vadd.xlane.f32.xlu0 %v1194
  %v1196 = vpop.xlane.xlu0 %1195
  %v1197 = vmul.f32 %v1193, %v59
  %v1198 = vmul.f32 %v1196, %v59
  %v1199 = vsub.f32 %v1189, %v1197
  %v1200 = vsub.f32 %v1190, %v1198
  %v1201 = vmul.f32 %v1199, %v1199
  %v1202 = vmul.f32 %v1200, %v1200
  %v1203 = vsel %vm52, %v1201, 0.0
  %1204 = vadd.xlane.f32.xlu0 %v1203
  %v1205 = vpop.xlane.xlu0 %1204
  %v1206 = vsel %vm52, %v1202, 0.0
  %1207 = vadd.xlane.f32.xlu0 %v1206
  %v1208 = vpop.xlane.xlu0 %1207
  %v1209 = vmul.f32 %v1205, %v59
  %v1210 = vmul.f32 %v1208, %v59
  %v1211 = vadd.f32 %v1209, 1e-12
  %v1212 = vadd.f32 %v1210, 1e-12
  %v1213 = vrsqrt.pop %v1211
  %v1214 = vrsqrt.pop %v1212
  %v1215 = vmul.f32 %v1199, %v1213
  %v1216 = vmul.f32 %v1200, %v1214
  %v1217 = vlaneseq
  %v1218 = vshrl.u32 %v1217, 7
  %v1219 = vsub.s32 1, %v1218
  %v1220 = vrot.slane %v94, %v1219
  %v1221 = vmul.f32 %v1215, %v1220
  %v1222 = vmul.f32 %v1216, %v1220
  %v1223 = vlaneseq
  %v1224 = vshrl.u32 %v1223, 7
  %v1225 = vsub.s32 2, %v1224
  %v1226 = vrot.slane %v94, %v1225
  %v1227 = vadd.f32 %v1221, %v1226
  %v1228 = vadd.f32 %v1222, %v1226
  %v1229 = vld [vmem:[%s6] sm:$0xff]
  %v1230 = vld [vmem:[%s6 + $0x8] sm:$0xff]
  %v1231 = vld [vmem:[%s6 + $0x10] sm:$0xff]
  %v1232 = vld [vmem:[%s6 + $0x18] sm:$0xff]
  %v1233 = vld [vmem:[%s7] sm:$0x1]
  %v1235 = vlaneseq
  %v1236 = vshrl.u32 %v1235, 7
  %v1237 = vsub.s32 0, %v1236
  %v1238 = vrot.slane %v1233, %v1237
  %v1241 = vsel %vm52, %v1227, 0
  %v1244 = vsel %vm52, %v1228, 0
  %1246 = vmatprep.subr.mxu0 0.0
  %1247 = vmatpush1.msra.mxu0 %v1229
  %1248 = vmatprep.subr.mxu0 0.0
  %1249 = vmatpush1.msra.mxu0 %v1230
  %1250 = vmatprep.subr.mxu0 0.0
  %1251 = vmatpush1.msra.mxu0 %v1231
  %1252 = vmatprep.subr.mxu0 0.0
  %1253 = vmatpush1.msra.mxu0 %v1232
  %1254 = vmatprep.subr.mxu0 0.0
  %1255 = vmatpush1.msra.mxu0 0.0
  %1256 = vmatprep.subr.mxu0 0.0
  %1257 = vmatpush1.msra.mxu0 0.0
  %1258 = vmatprep.subr.mxu0 0.0
  %1259 = vmatpush1.msra.mxu0 0.0
  %1260 = vmatprep.subr.mxu0 0.0
  %1261 = vmatpush1.msra.mxu0 0.0
  %1262 = vmatprep.subr.mxu0 0.0
  %1263 = vmatpush1.msra.mxu0 0.0
  %1264 = vmatprep.subr.mxu0 0.0
  %1265 = vmatpush1.msra.mxu0 0.0
  %1266 = vmatprep.subr.mxu0 0.0
  %1267 = vmatpush1.msra.mxu0 0.0
  %1268 = vmatprep.subr.mxu0 0.0
  %1269 = vmatpush1.msra.mxu0 0.0
  %1270 = vmatprep.subr.mxu0 0.0
  %1271 = vmatpush1.msra.mxu0 0.0
  %1272 = vmatprep.subr.mxu0 0.0
  %1273 = vmatpush1.msra.mxu0 0.0
  %1274 = vmatprep.subr.mxu0 0.0
  %1275 = vmatpush1.msra.mxu0 0.0
  %1276 = vmatprep.subr.mxu0 0.0
  %1277 = vmatpush1.msra.mxu0 0.0
  %1278 = vmatprep.subr.mxu0 0.0
  %1279 = vmatpush1.msra.mxu0 0.0
  %1280 = vmatprep.subr.mxu0 0.0
  %1281 = vmatpush1.msra.mxu0 0.0
  %1282 = vmatprep.subr.mxu0 0.0
  %1283 = vmatpush1.msra.mxu0 0.0
  %1284 = vmatprep.subr.mxu0 0.0
  %1285 = vmatpush1.msra.mxu0 0.0
  %1286 = vmatprep.subr.mxu0 0.0
  %1287 = vmatpush1.msra.mxu0 0.0
  %1288 = vmatprep.subr.mxu0 0.0
  %1289 = vmatpush1.msra.mxu0 0.0
  %1290 = vmatprep.subr.mxu0 0.0
  %1291 = vmatpush1.msra.mxu0 0.0
  %1292 = vmatprep.subr.mxu0 0.0
  %1293 = vmatpush1.msra.mxu0 0.0
  %1294 = vmatprep.subr.mxu0 0.0
  %1295 = vmatpush1.msra.mxu0 0.0
  %1296 = vmatprep.subr.mxu0 0.0
  %1297 = vmatpush1.msra.mxu0 0.0
  %1298 = vmatprep.subr.mxu0 0.0
  %1299 = vmatpush1.msra.mxu0 0.0
  %1300 = vmatprep.subr.mxu0 0.0
  %1301 = vmatpush1.msra.mxu0 0.0
  %1302 = vmatprep.subr.mxu0 0.0
  %1303 = vmatpush1.msra.mxu0 0.0
  %1304 = vmatprep.subr.mxu0 0.0
  %1305 = vmatpush1.msra.mxu0 0.0
  %1306 = vmatprep.subr.mxu0 0.0
  %1307 = vmatpush1.msra.mxu0 0.0
  %1308 = vmatprep.subr.mxu0 0.0
  %1309 = vmatpush1.msra.mxu0 0.0
  %1310 = vmatprep.mubr.f32.mxu0 0.0
  %1311 = vmatmul.mubr.f32.gmra.mrb[0].mxu0 %v1241
  %v1312 = vpop.f32.mrb[0].mxu0
  %v1313 = vadd.f32 %v1238, %v1312
  %v1314 = vpop.f32.mrb[0].mxu0
  %1315 = vmatprep.mubr.f32.mxu0 0.0
  %1316 = vmatmul.mubr.f32.gmra.mrb[0].mxu0 %v1244
  %v1317 = vpop.f32.mrb[0].mxu0
  %v1318 = vadd.f32 %v1238, %v1317
  %v1319 = vpop.f32.mrb[0].mxu0
  %1320 = vdwg.mxu0
  %v1321 = vmul.f32 %v1313, 0.5
  %v1322 = vmul.f32 %v1318, 0.5
  %v1323 = vmul.f32 %v1313, 0.044715
  %v1324 = vmul.f32 %v1318, 0.044715
  %v1325 = vmul.f32 %v1323, %v1313
  %v1326 = vmul.f32 %v1324, %v1318
  %v1327 = vmul.f32 %v1325, %v1313
  %v1328 = vmul.f32 %v1326, %v1318
  %v1329 = vadd.f32 %v1313, %v1327
  %v1330 = vadd.f32 %v1318, %v1328
  %v1331 = vmul.f32 %v1329, 0.7978846
  %v1332 = vmul.f32 %v1330, 0.7978846
  %v1333 = vtanh.pop %v1331
  %v1334 = vtanh.pop %v1332
  %v1335 = vadd.f32 %v1333, 1.0
  %v1336 = vadd.f32 %v1334, 1.0
  %v1337 = vmul.f32 %v1321, %v1335
  %v1338 = vmul.f32 %v1322, %v1336
  %v1339 = vld [vmem:[%s8] sm:$0xff]
  %v1340 = vld [vmem:[%s8 + $0x8] sm:$0xff]
  %v1341 = vld [vmem:[%s8 + $0x10] sm:$0xff]
  %v1342 = vld [vmem:[%s8 + $0x18] sm:$0xff]
  %v1343 = vld [vmem:[%s8 + $0x20] sm:$0xff]
  %v1344 = vld [vmem:[%s8 + $0x28] sm:$0xff]
  %v1345 = vld [vmem:[%s8 + $0x30] sm:$0xff]
  %v1346 = vld [vmem:[%s8 + $0x38] sm:$0xff]
  %v1347 = vlaneseq
  %v1348 = vshrl.u32 %v1347, 7
  %v1349 = vsub.s32 3, %v1348
  %v1350 = vrot.slane %v94, %v1349
  %vm1351 = vcmask 523264
  %v1353 = vsel %vm1351, %v1337, 0
  %v1356 = vsel %vm1351, %v1338, 0
  %1358 = vmatprep.subr.mxu0 0.0
  %1359 = vmatpush1.msra.mxu0 %v1339
  %1360 = vmatprep.subr.mxu0 0.0
  %1361 = vmatpush1.msra.mxu0 %v1340
  %1362 = vmatprep.subr.mxu0 0.0
  %1363 = vmatpush1.msra.mxu0 %v1341
  %1364 = vmatprep.subr.mxu0 0.0
  %1365 = vmatpush1.msra.mxu0 %v1342
  %1366 = vmatprep.subr.mxu0 0.0
  %1367 = vmatpush1.msra.mxu0 %v1343
  %1368 = vmatprep.subr.mxu0 0.0
  %1369 = vmatpush1.msra.mxu0 %v1344
  %1370 = vmatprep.subr.mxu0 0.0
  %1371 = vmatpush1.msra.mxu0 %v1345
  %1372 = vmatprep.subr.mxu0 0.0
  %1373 = vmatpush1.msra.mxu0 %v1346
  %1374 = vmatprep.subr.mxu0 0.0
  %1375 = vmatpush1.msra.mxu0 0.0
  %1376 = vmatprep.subr.mxu0 0.0
  %1377 = vmatpush1.msra.mxu0 0.0
  %1378 = vmatprep.subr.mxu0 0.0
  %1379 = vmatpush1.msra.mxu0 0.0
  %1380 = vmatprep.subr.mxu0 0.0
  %1381 = vmatpush1.msra.mxu0 0.0
  %1382 = vmatprep.subr.mxu0 0.0
  %1383 = vmatpush1.msra.mxu0 0.0
  %1384 = vmatprep.subr.mxu0 0.0
  %1385 = vmatpush1.msra.mxu0 0.0
  %1386 = vmatprep.subr.mxu0 0.0
  %1387 = vmatpush1.msra.mxu0 0.0
  %1388 = vmatprep.subr.mxu0 0.0
  %1389 = vmatpush1.msra.mxu0 0.0
  %1390 = vmatprep.subr.mxu0 0.0
  %1391 = vmatpush1.msra.mxu0 0.0
  %1392 = vmatprep.subr.mxu0 0.0
  %1393 = vmatpush1.msra.mxu0 0.0
  %1394 = vmatprep.subr.mxu0 0.0
  %1395 = vmatpush1.msra.mxu0 0.0
  %1396 = vmatprep.subr.mxu0 0.0
  %1397 = vmatpush1.msra.mxu0 0.0
  %1398 = vmatprep.subr.mxu0 0.0
  %1399 = vmatpush1.msra.mxu0 0.0
  %1400 = vmatprep.subr.mxu0 0.0
  %1401 = vmatpush1.msra.mxu0 0.0
  %1402 = vmatprep.subr.mxu0 0.0
  %1403 = vmatpush1.msra.mxu0 0.0
  %1404 = vmatprep.subr.mxu0 0.0
  %1405 = vmatpush1.msra.mxu0 0.0
  %1406 = vmatprep.subr.mxu0 0.0
  %1407 = vmatpush1.msra.mxu0 0.0
  %1408 = vmatprep.subr.mxu0 0.0
  %1409 = vmatpush1.msra.mxu0 0.0
  %1410 = vmatprep.subr.mxu0 0.0
  %1411 = vmatpush1.msra.mxu0 0.0
  %1412 = vmatprep.subr.mxu0 0.0
  %1413 = vmatpush1.msra.mxu0 0.0
  %1414 = vmatprep.subr.mxu0 0.0
  %1415 = vmatpush1.msra.mxu0 0.0
  %1416 = vmatprep.subr.mxu0 0.0
  %1417 = vmatpush1.msra.mxu0 0.0
  %1418 = vmatprep.subr.mxu0 0.0
  %1419 = vmatpush1.msra.mxu0 0.0
  %1420 = vmatprep.subr.mxu0 0.0
  %1421 = vmatpush1.msra.mxu0 0.0
  %1422 = vmatprep.mubr.f32.mxu0 0.0
  %1423 = vmatmul.mubr.f32.gmra.mrb[0].mxu0 %v1353
  %v1424 = vpop.f32.mrb[0].mxu0
  %v1425 = vadd.f32 %v1350, %v1424
  %v1426 = vpop.f32.mrb[0].mxu0
  %1427 = vmatprep.mubr.f32.mxu0 0.0
  %1428 = vmatmul.mubr.f32.gmra.mrb[0].mxu0 %v1356
  %v1429 = vpop.f32.mrb[0].mxu0
  %v1430 = vadd.f32 %v1350, %v1429
  %v1431 = vpop.f32.mrb[0].mxu0
  %1432 = vdwg.mxu0
  %v1433 = vadd.f32 %v1227, %v1425
  %v1434 = vadd.f32 %v1228, %v1430
  %v1435 = vsel %vm52, %v1433, 0.0
  %1436 = vadd.xlane.f32.xlu0 %v1435
  %v1437 = vpop.xlane.xlu0 %1436
  %v1438 = vsel %vm52, %v1434, 0.0
  %1439 = vadd.xlane.f32.xlu0 %v1438
  %v1440 = vpop.xlane.xlu0 %1439
  %v1441 = vmul.f32 %v1437, %v59
  %v1442 = vmul.f32 %v1440, %v59
  %v1443 = vsub.f32 %v1433, %v1441
  %v1444 = vsub.f32 %v1434, %v1442
  %v1445 = vmul.f32 %v1443, %v1443
  %v1446 = vmul.f32 %v1444, %v1444
  %v1447 = vsel %vm52, %v1445, 0.0
  %1448 = vadd.xlane.f32.xlu0 %v1447
  %v1449 = vpop.xlane.xlu0 %1448
  %v1450 = vsel %vm52, %v1446, 0.0
  %1451 = vadd.xlane.f32.xlu0 %v1450
  %v1452 = vpop.xlane.xlu0 %1451
  %v1453 = vmul.f32 %v1449, %v59
  %v1454 = vmul.f32 %v1452, %v59
  %v1455 = vadd.f32 %v1453, 1e-12
  %v1456 = vadd.f32 %v1454, 1e-12
  %v1457 = vrsqrt.pop %v1455
  %v1458 = vrsqrt.pop %v1456
  %v1459 = vmul.f32 %v1443, %v1457
  %v1460 = vmul.f32 %v1444, %v1458
  %v1461 = vlaneseq
  %v1462 = vshrl.u32 %v1461, 7
  %v1463 = vsub.s32 4, %v1462
  %v1464 = vrot.slane %v94, %v1463
  %v1465 = vmul.f32 %v1459, %v1464
  %v1466 = vmul.f32 %v1460, %v1464
  %v1467 = vlaneseq
  %v1468 = vshrl.u32 %v1467, 7
  %v1469 = vsub.s32 5, %v1468
  %v1470 = vrot.slane %v94, %v1469
  %v1471 = vadd.f32 %v1465, %v1470
  %v1472 = vadd.f32 %v1466, %v1470
  %s1473 = scalar_lea.vmem %s9, 8
  %v1474 = vld [vmem:[%s1473] sm:$0xff]
  %s1475 = scalar_lea.vmem %s3, 192
  %v1476 = vld [vmem:[%s1475] sm:$0xff]
  %v1477 = vld [vmem:[%s1475 + $0x8] sm:$0xff]
  %v1478 = vld [vmem:[%s1475 + $0x10] sm:$0xff]
  %v1479 = vld [vmem:[%s1475 + $0x18] sm:$0xff]
  %s1480 = scalar_lea.vmem %s4, 6
  %v1481 = vld [vmem:[%s1480] sm:$0x1]
  %v1483 = vlaneseq
  %v1484 = vshrl.u32 %v1483, 7
  %v1485 = vsub.s32 0, %v1484
  %v1486 = vrot.slane %v1481, %v1485
  %v1489 = vsel %vm52, %v1471, 0
  %v1492 = vsel %vm52, %v1472, 0
  %1494 = vmatprep.subr.mxu0 0.0
  %1495 = vmatpush1.msra.mxu0 %v1476
  %1496 = vmatprep.subr.mxu0 0.0
  %1497 = vmatpush1.msra.mxu0 %v1477
  %1498 = vmatprep.subr.mxu0 0.0
  %1499 = vmatpush1.msra.mxu0 %v1478
  %1500 = vmatprep.subr.mxu0 0.0
  %1501 = vmatpush1.msra.mxu0 %v1479
  %1502 = vmatprep.subr.mxu0 0.0
  %1503 = vmatpush1.msra.mxu0 0.0
  %1504 = vmatprep.subr.mxu0 0.0
  %1505 = vmatpush1.msra.mxu0 0.0
  %1506 = vmatprep.subr.mxu0 0.0
  %1507 = vmatpush1.msra.mxu0 0.0
  %1508 = vmatprep.subr.mxu0 0.0
  %1509 = vmatpush1.msra.mxu0 0.0
  %1510 = vmatprep.subr.mxu0 0.0
  %1511 = vmatpush1.msra.mxu0 0.0
  %1512 = vmatprep.subr.mxu0 0.0
  %1513 = vmatpush1.msra.mxu0 0.0
  %1514 = vmatprep.subr.mxu0 0.0
  %1515 = vmatpush1.msra.mxu0 0.0
  %1516 = vmatprep.subr.mxu0 0.0
  %1517 = vmatpush1.msra.mxu0 0.0
  %1518 = vmatprep.subr.mxu0 0.0
  %1519 = vmatpush1.msra.mxu0 0.0
  %1520 = vmatprep.subr.mxu0 0.0
  %1521 = vmatpush1.msra.mxu0 0.0
  %1522 = vmatprep.subr.mxu0 0.0
  %1523 = vmatpush1.msra.mxu0 0.0
  %1524 = vmatprep.subr.mxu0 0.0
  %1525 = vmatpush1.msra.mxu0 0.0
  %1526 = vmatprep.subr.mxu0 0.0
  %1527 = vmatpush1.msra.mxu0 0.0
  %1528 = vmatprep.subr.mxu0 0.0
  %1529 = vmatpush1.msra.mxu0 0.0
  %1530 = vmatprep.subr.mxu0 0.0
  %1531 = vmatpush1.msra.mxu0 0.0
  %1532 = vmatprep.subr.mxu0 0.0
  %1533 = vmatpush1.msra.mxu0 0.0
  %1534 = vmatprep.subr.mxu0 0.0
  %1535 = vmatpush1.msra.mxu0 0.0
  %1536 = vmatprep.subr.mxu0 0.0
  %1537 = vmatpush1.msra.mxu0 0.0
  %1538 = vmatprep.subr.mxu0 0.0
  %1539 = vmatpush1.msra.mxu0 0.0
  %1540 = vmatprep.subr.mxu0 0.0
  %1541 = vmatpush1.msra.mxu0 0.0
  %1542 = vmatprep.subr.mxu0 0.0
  %1543 = vmatpush1.msra.mxu0 0.0
  %1544 = vmatprep.subr.mxu0 0.0
  %1545 = vmatpush1.msra.mxu0 0.0
  %1546 = vmatprep.subr.mxu0 0.0
  %1547 = vmatpush1.msra.mxu0 0.0
  %1548 = vmatprep.subr.mxu0 0.0
  %1549 = vmatpush1.msra.mxu0 0.0
  %1550 = vmatprep.subr.mxu0 0.0
  %1551 = vmatpush1.msra.mxu0 0.0
  %1552 = vmatprep.subr.mxu0 0.0
  %1553 = vmatpush1.msra.mxu0 0.0
  %1554 = vmatprep.subr.mxu0 0.0
  %1555 = vmatpush1.msra.mxu0 0.0
  %1556 = vmatprep.subr.mxu0 0.0
  %1557 = vmatpush1.msra.mxu0 0.0
  %1558 = vmatprep.mubr.f32.mxu0 0.0
  %1559 = vmatmul.mubr.f32.gmra.mrb[0].mxu0 %v1489
  %v1560 = vpop.f32.mrb[0].mxu0
  %v1561 = vadd.f32 %v1486, %v1560
  %v1562 = vpop.f32.mrb[0].mxu0
  %1563 = vmatprep.mubr.f32.mxu0 0.0
  %1564 = vmatmul.mubr.f32.gmra.mrb[0].mxu0 %v1492
  %v1565 = vpop.f32.mrb[0].mxu0
  %v1566 = vadd.f32 %v1486, %v1565
  %v1567 = vpop.f32.mrb[0].mxu0
  %1568 = vdwg.mxu0
  %s1569 = scalar_lea.vmem %s3, 256
  %v1570 = vld [vmem:[%s1569] sm:$0xff]
  %v1571 = vld [vmem:[%s1569 + $0x8] sm:$0xff]
  %v1572 = vld [vmem:[%s1569 + $0x10] sm:$0xff]
  %v1573 = vld [vmem:[%s1569 + $0x18] sm:$0xff]
  %s1574 = scalar_lea.vmem %s4, 8
  %v1575 = vld [vmem:[%s1574] sm:$0x1]
  %v1577 = vlaneseq
  %v1578 = vshrl.u32 %v1577, 7
  %v1579 = vsub.s32 0, %v1578
  %v1580 = vrot.slane %v1575, %v1579
  %1582 = vmatprep.subr.mxu0 0.0
  %1583 = vmatpush1.msra.mxu0 %v1570
  %1584 = vmatprep.subr.mxu0 0.0
  %1585 = vmatpush1.msra.mxu0 %v1571
  %1586 = vmatprep.subr.mxu0 0.0
  %1587 = vmatpush1.msra.mxu0 %v1572
  %1588 = vmatprep.subr.mxu0 0.0
  %1589 = vmatpush1.msra.mxu0 %v1573
  %1590 = vmatprep.subr.mxu0 0.0
  %1591 = vmatpush1.msra.mxu0 0.0
  %1592 = vmatprep.subr.mxu0 0.0
  %1593 = vmatpush1.msra.mxu0 0.0
  %1594 = vmatprep.subr.mxu0 0.0
  %1595 = vmatpush1.msra.mxu0 0.0
  %1596 = vmatprep.subr.mxu0 0.0
  %1597 = vmatpush1.msra.mxu0 0.0
  %1598 = vmatprep.subr.mxu0 0.0
  %1599 = vmatpush1.msra.mxu0 0.0
  %1600 = vmatprep.subr.mxu0 0.0
  %1601 = vmatpush1.msra.mxu0 0.0
  %1602 = vmatprep.subr.mxu0 0.0
  %1603 = vmatpush1.msra.mxu0 0.0
  %1604 = vmatprep.subr.mxu0 0.0
  %1605 = vmatpush1.msra.mxu0 0.0
  %1606 = vmatprep.subr.mxu0 0.0
  %1607 = vmatpush1.msra.mxu0 0.0
  %1608 = vmatprep.subr.mxu0 0.0
  %1609 = vmatpush1.msra.mxu0 0.0
  %1610 = vmatprep.subr.mxu0 0.0
  %1611 = vmatpush1.msra.mxu0 0.0
  %1612 = vmatprep.subr.mxu0 0.0
  %1613 = vmatpush1.msra.mxu0 0.0
  %1614 = vmatprep.subr.mxu0 0.0
  %1615 = vmatpush1.msra.mxu0 0.0
  %1616 = vmatprep.subr.mxu0 0.0
  %1617 = vmatpush1.msra.mxu0 0.0
  %1618 = vmatprep.subr.mxu0 0.0
  %1619 = vmatpush1.msra.mxu0 0.0
  %1620 = vmatprep.subr.mxu0 0.0
  %1621 = vmatpush1.msra.mxu0 0.0
  %1622 = vmatprep.subr.mxu0 0.0
  %1623 = vmatpush1.msra.mxu0 0.0
  %1624 = vmatprep.subr.mxu0 0.0
  %1625 = vmatpush1.msra.mxu0 0.0
  %1626 = vmatprep.subr.mxu0 0.0
  %1627 = vmatpush1.msra.mxu0 0.0
  %1628 = vmatprep.subr.mxu0 0.0
  %1629 = vmatpush1.msra.mxu0 0.0
  %1630 = vmatprep.subr.mxu0 0.0
  %1631 = vmatpush1.msra.mxu0 0.0
  %1632 = vmatprep.subr.mxu0 0.0
  %1633 = vmatpush1.msra.mxu0 0.0
  %1634 = vmatprep.subr.mxu0 0.0
  %1635 = vmatpush1.msra.mxu0 0.0
  %1636 = vmatprep.subr.mxu0 0.0
  %1637 = vmatpush1.msra.mxu0 0.0
  %1638 = vmatprep.subr.mxu0 0.0
  %1639 = vmatpush1.msra.mxu0 0.0
  %1640 = vmatprep.subr.mxu0 0.0
  %1641 = vmatpush1.msra.mxu0 0.0
  %1642 = vmatprep.subr.mxu0 0.0
  %1643 = vmatpush1.msra.mxu0 0.0
  %1644 = vmatprep.subr.mxu0 0.0
  %1645 = vmatpush1.msra.mxu0 0.0
  %1646 = vmatprep.mubr.f32.mxu0 0.0
  %1647 = vmatmul.mubr.f32.gmra.mrb[0].mxu0 %v1489
  %v1648 = vpop.f32.mrb[0].mxu0
  %v1649 = vadd.f32 %v1580, %v1648
  %v1650 = vpop.f32.mrb[0].mxu0
  %1651 = vmatprep.mubr.f32.mxu0 0.0
  %1652 = vmatmul.mubr.f32.gmra.mrb[0].mxu0 %v1492
  %v1653 = vpop.f32.mrb[0].mxu0
  %v1654 = vadd.f32 %v1580, %v1653
  %v1655 = vpop.f32.mrb[0].mxu0
  %1656 = vdwg.mxu0
  %s1657 = scalar_lea.vmem %s3, 320
  %v1658 = vld [vmem:[%s1657] sm:$0xff]
  %v1659 = vld [vmem:[%s1657 + $0x8] sm:$0xff]
  %v1660 = vld [vmem:[%s1657 + $0x10] sm:$0xff]
  %v1661 = vld [vmem:[%s1657 + $0x18] sm:$0xff]
  %s1662 = scalar_lea.vmem %s4, 10
  %v1663 = vld [vmem:[%s1662] sm:$0x1]
  %v1665 = vlaneseq
  %v1666 = vshrl.u32 %v1665, 7
  %v1667 = vsub.s32 0, %v1666
  %v1668 = vrot.slane %v1663, %v1667
  %1670 = vmatprep.subr.mxu0 0.0
  %1671 = vmatpush1.msra.mxu0 %v1658
  %1672 = vmatprep.subr.mxu0 0.0
  %1673 = vmatpush1.msra.mxu0 %v1659
  %1674 = vmatprep.subr.mxu0 0.0
  %1675 = vmatpush1.msra.mxu0 %v1660
  %1676 = vmatprep.subr.mxu0 0.0
  %1677 = vmatpush1.msra.mxu0 %v1661
  %1678 = vmatprep.subr.mxu0 0.0
  %1679 = vmatpush1.msra.mxu0 0.0
  %1680 = vmatprep.subr.mxu0 0.0
  %1681 = vmatpush1.msra.mxu0 0.0
  %1682 = vmatprep.subr.mxu0 0.0
  %1683 = vmatpush1.msra.mxu0 0.0
  %1684 = vmatprep.subr.mxu0 0.0
  %1685 = vmatpush1.msra.mxu0 0.0
  %1686 = vmatprep.subr.mxu0 0.0
  %1687 = vmatpush1.msra.mxu0 0.0
  %1688 = vmatprep.subr.mxu0 0.0
  %1689 = vmatpush1.msra.mxu0 0.0
  %1690 = vmatprep.subr.mxu0 0.0
  %1691 = vmatpush1.msra.mxu0 0.0
  %1692 = vmatprep.subr.mxu0 0.0
  %1693 = vmatpush1.msra.mxu0 0.0
  %1694 = vmatprep.subr.mxu0 0.0
  %1695 = vmatpush1.msra.mxu0 0.0
  %1696 = vmatprep.subr.mxu0 0.0
  %1697 = vmatpush1.msra.mxu0 0.0
  %1698 = vmatprep.subr.mxu0 0.0
  %1699 = vmatpush1.msra.mxu0 0.0
  %1700 = vmatprep.subr.mxu0 0.0
  %1701 = vmatpush1.msra.mxu0 0.0
  %1702 = vmatprep.subr.mxu0 0.0
  %1703 = vmatpush1.msra.mxu0 0.0
  %1704 = vmatprep.subr.mxu0 0.0
  %1705 = vmatpush1.msra.mxu0 0.0
  %1706 = vmatprep.subr.mxu0 0.0
  %1707 = vmatpush1.msra.mxu0 0.0
  %1708 = vmatprep.subr.mxu0 0.0
  %1709 = vmatpush1.msra.mxu0 0.0
  %1710 = vmatprep.subr.mxu0 0.0
  %1711 = vmatpush1.msra.mxu0 0.0
  %1712 = vmatprep.subr.mxu0 0.0
  %1713 = vmatpush1.msra.mxu0 0.0
  %1714 = vmatprep.subr.mxu0 0.0
  %1715 = vmatpush1.msra.mxu0 0.0
  %1716 = vmatprep.subr.mxu0 0.0
  %1717 = vmatpush1.msra.mxu0 0.0
  %1718 = vmatprep.subr.mxu0 0.0
  %1719 = vmatpush1.msra.mxu0 0.0
  %1720 = vmatprep.subr.mxu0 0.0
  %1721 = vmatpush1.msra.mxu0 0.0
  %1722 = vmatprep.subr.mxu0 0.0
  %1723 = vmatpush1.msra.mxu0 0.0
  %1724 = vmatprep.subr.mxu0 0.0
  %1725 = vmatpush1.msra.mxu0 0.0
  %1726 = vmatprep.subr.mxu0 0.0
  %1727 = vmatpush1.msra.mxu0 0.0
  %1728 = vmatprep.subr.mxu0 0.0
  %1729 = vmatpush1.msra.mxu0 0.0
  %1730 = vmatprep.subr.mxu0 0.0
  %1731 = vmatpush1.msra.mxu0 0.0
  %1732 = vmatprep.subr.mxu0 0.0
  %1733 = vmatpush1.msra.mxu0 0.0
  %1734 = vmatprep.mubr.f32.mxu0 0.0
  %1735 = vmatmul.mubr.f32.gmra.mrb[0].mxu0 %v1489
  %v1736 = vpop.f32.mrb[0].mxu0
  %v1737 = vadd.f32 %v1668, %v1736
  %v1738 = vpop.f32.mrb[0].mxu0
  %1739 = vmatprep.mubr.f32.mxu0 0.0
  %1740 = vmatmul.mubr.f32.gmra.mrb[0].mxu0 %v1492
  %v1741 = vpop.f32.mrb[0].mxu0
  %v1742 = vadd.f32 %v1668, %v1741
  %v1743 = vpop.f32.mrb[0].mxu0
  %1744 = vdwg.mxu0
  %v1746 = vsel %vm363, %v1561, 0
  %v1749 = vsel %vm363, %v1566, 0
  %v1752 = vsel %vm363, %v1649, 0
  %v1755 = vsel %vm363, %v1654, 0
  %1757 = vmatprep.subr.mxu0 0.0
  %1758 = vmatpush1.xpose.msra.mxu0 %v1752
  %1759 = vmatprep.subr.mxu0 0.0
  %1760 = vmatpush1.xpose.msra.mxu0 %v1755
  %1761 = vmatprep.subr.mxu0 0.0
  %1762 = vmatpush1.xpose.msra.mxu0 0.0
  %1763 = vmatprep.subr.mxu0 0.0
  %1764 = vmatpush1.xpose.msra.mxu0 0.0
  %1765 = vmatprep.subr.mxu0 0.0
  %1766 = vmatpush1.xpose.msra.mxu0 0.0
  %1767 = vmatprep.subr.mxu0 0.0
  %1768 = vmatpush1.xpose.msra.mxu0 0.0
  %1769 = vmatprep.subr.mxu0 0.0
  %1770 = vmatpush1.xpose.msra.mxu0 0.0
  %1771 = vmatprep.subr.mxu0 0.0
  %1772 = vmatpush1.xpose.msra.mxu0 0.0
  %1773 = vmatprep.subr.mxu0 0.0
  %1774 = vmatpush1.xpose.msra.mxu0 0.0
  %1775 = vmatprep.subr.mxu0 0.0
  %1776 = vmatpush1.xpose.msra.mxu0 0.0
  %1777 = vmatprep.subr.mxu0 0.0
  %1778 = vmatpush1.xpose.msra.mxu0 0.0
  %1779 = vmatprep.subr.mxu0 0.0
  %1780 = vmatpush1.xpose.msra.mxu0 0.0
  %1781 = vmatprep.subr.mxu0 0.0
  %1782 = vmatpush1.xpose.msra.mxu0 0.0
  %1783 = vmatprep.subr.mxu0 0.0
  %1784 = vmatpush1.xpose.msra.mxu0 0.0
  %1785 = vmatprep.subr.mxu0 0.0
  %1786 = vmatpush1.xpose.msra.mxu0 0.0
  %1787 = vmatprep.subr.mxu0 0.0
  %1788 = vmatpush1.xpose.msra.mxu0 0.0
  %1789 = vmatprep.subr.mxu0 0.0
  %1790 = vmatpush1.xpose.msra.mxu0 0.0
  %1791 = vmatprep.subr.mxu0 0.0
  %1792 = vmatpush1.xpose.msra.mxu0 0.0
  %1793 = vmatprep.subr.mxu0 0.0
  %1794 = vmatpush1.xpose.msra.mxu0 0.0
  %1795 = vmatprep.subr.mxu0 0.0
  %1796 = vmatpush1.xpose.msra.mxu0 0.0
  %1797 = vmatprep.subr.mxu0 0.0
  %1798 = vmatpush1.xpose.msra.mxu0 0.0
  %1799 = vmatprep.subr.mxu0 0.0
  %1800 = vmatpush1.xpose.msra.mxu0 0.0
  %1801 = vmatprep.subr.mxu0 0.0
  %1802 = vmatpush1.xpose.msra.mxu0 0.0
  %1803 = vmatprep.subr.mxu0 0.0
  %1804 = vmatpush1.xpose.msra.mxu0 0.0
  %1805 = vmatprep.subr.mxu0 0.0
  %1806 = vmatpush1.xpose.msra.mxu0 0.0
  %1807 = vmatprep.subr.mxu0 0.0
  %1808 = vmatpush1.xpose.msra.mxu0 0.0
  %1809 = vmatprep.subr.mxu0 0.0
  %1810 = vmatpush1.xpose.msra.mxu0 0.0
  %1811 = vmatprep.subr.mxu0 0.0
  %1812 = vmatpush1.xpose.msra.mxu0 0.0
  %1813 = vmatprep.subr.mxu0 0.0
  %1814 = vmatpush1.xpose.msra.mxu0 0.0
  %1815 = vmatprep.subr.mxu0 0.0
  %1816 = vmatpush1.xpose.msra.mxu0 0.0
  %1817 = vmatprep.subr.mxu0 0.0
  %1818 = vmatpush1.xpose.msra.mxu0 0.0
  %1819 = vmatprep.subr.mxu0 0.0
  %1820 = vmatpush1.xpose.msra.mxu0 0.0
  %1821 = vmatprep.mubr.f32.mxu0 0.0
  %1822 = vmatmul.mubr.f32.gmra.mrb[0].mxu0 %v1746
  %v1823 = vpop.f32.mrb[0].mxu0
  %v1824 = vadd.f32 0.0, %v1823
  %v1825 = vpop.f32.mrb[0].mxu0
  %1826 = vmatprep.mubr.f32.mxu0 0.0
  %1827 = vmatmul.mubr.f32.gmra.mrb[0].mxu0 %v1749
  %v1828 = vpop.f32.mrb[0].mxu0
  %v1829 = vadd.f32 0.0, %v1828
  %v1830 = vpop.f32.mrb[0].mxu0
  %1831 = vdwg.mxu0
  %v1832 = vmul.f32 %v1824, 0.25
  %v1833 = vmul.f32 %v1829, 0.25
  %v1834 = vadd.f32 %v1832, %v92
  %v1835 = vadd.f32 %v1833, %v93
  %v1836 = vsel %vm363, %v1834, -inf
  %1837 = vmax.xlane.f32.xlu0 %v1836
  %v1838 = vpop.xlane.xlu0 %1837
  %v1839 = vsel %vm363, %v1835, -inf
  %1840 = vmax.xlane.f32.xlu0 %v1839
  %v1841 = vpop.xlane.xlu0 %1840
  %v1842 = vsub.f32 %v1834, %v1838
  %v1843 = vsub.f32 %v1835, %v1841
  %v1844 = vmul.f32 %v1842, 1.442695
  %v1845 = vpow.pop %v1844
  %v1846 = vmul.f32 %v1843, 1.442695
  %v1847 = vpow.pop %v1846
  %v1848 = vsel %vm363, %v1845, 0.0
  %1849 = vadd.xlane.f32.xlu0 %v1848
  %v1850 = vpop.xlane.xlu0 %1849
  %v1851 = vsel %vm363, %v1847, 0.0
  %1852 = vadd.xlane.f32.xlu0 %v1851
  %v1853 = vpop.xlane.xlu0 %1852
  %v1854 = vrcp.pop %v1850
  %v1855 = vrcp.pop %v1853
  %v1856 = vmul.f32 %v1845, %v1854
  %v1857 = vmul.f32 %v1847, %v1855
  %v1859 = vsel %vm363, %v1856, 0
  %v1862 = vsel %vm363, %v1857, 0
  %1864 = vmatprep.subr.mxu0 0.0
  %1865 = vmatpush1.msra.mxu0 %v1737
  %1866 = vmatprep.subr.mxu0 0.0
  %1867 = vmatpush1.msra.mxu0 %v1742
  %1868 = vmatprep.subr.mxu0 0.0
  %1869 = vmatpush1.msra.mxu0 0.0
  %1870 = vmatprep.subr.mxu0 0.0
  %1871 = vmatpush1.msra.mxu0 0.0
  %1872 = vmatprep.subr.mxu0 0.0
  %1873 = vmatpush1.msra.mxu0 0.0
  %1874 = vmatprep.subr.mxu0 0.0
  %1875 = vmatpush1.msra.mxu0 0.0
  %1876 = vmatprep.subr.mxu0 0.0
  %1877 = vmatpush1.msra.mxu0 0.0
  %1878 = vmatprep.subr.mxu0 0.0
  %1879 = vmatpush1.msra.mxu0 0.0
  %1880 = vmatprep.subr.mxu0 0.0
  %1881 = vmatpush1.msra.mxu0 0.0
  %1882 = vmatprep.subr.mxu0 0.0
  %1883 = vmatpush1.msra.mxu0 0.0
  %1884 = vmatprep.subr.mxu0 0.0
  %1885 = vmatpush1.msra.mxu0 0.0
  %1886 = vmatprep.subr.mxu0 0.0
  %1887 = vmatpush1.msra.mxu0 0.0
  %1888 = vmatprep.subr.mxu0 0.0
  %1889 = vmatpush1.msra.mxu0 0.0
  %1890 = vmatprep.subr.mxu0 0.0
  %1891 = vmatpush1.msra.mxu0 0.0
  %1892 = vmatprep.subr.mxu0 0.0
  %1893 = vmatpush1.msra.mxu0 0.0
  %1894 = vmatprep.subr.mxu0 0.0
  %1895 = vmatpush1.msra.mxu0 0.0
  %1896 = vmatprep.subr.mxu0 0.0
  %1897 = vmatpush1.msra.mxu0 0.0
  %1898 = vmatprep.subr.mxu0 0.0
  %1899 = vmatpush1.msra.mxu0 0.0
  %1900 = vmatprep.subr.mxu0 0.0
  %1901 = vmatpush1.msra.mxu0 0.0
  %1902 = vmatprep.subr.mxu0 0.0
  %1903 = vmatpush1.msra.mxu0 0.0
  %1904 = vmatprep.subr.mxu0 0.0
  %1905 = vmatpush1.msra.mxu0 0.0
  %1906 = vmatprep.subr.mxu0 0.0
  %1907 = vmatpush1.msra.mxu0 0.0
  %1908 = vmatprep.subr.mxu0 0.0
  %1909 = vmatpush1.msra.mxu0 0.0
  %1910 = vmatprep.subr.mxu0 0.0
  %1911 = vmatpush1.msra.mxu0 0.0
  %1912 = vmatprep.subr.mxu0 0.0
  %1913 = vmatpush1.msra.mxu0 0.0
  %1914 = vmatprep.subr.mxu0 0.0
  %1915 = vmatpush1.msra.mxu0 0.0
  %1916 = vmatprep.subr.mxu0 0.0
  %1917 = vmatpush1.msra.mxu0 0.0
  %1918 = vmatprep.subr.mxu0 0.0
  %1919 = vmatpush1.msra.mxu0 0.0
  %1920 = vmatprep.subr.mxu0 0.0
  %1921 = vmatpush1.msra.mxu0 0.0
  %1922 = vmatprep.subr.mxu0 0.0
  %1923 = vmatpush1.msra.mxu0 0.0
  %1924 = vmatprep.subr.mxu0 0.0
  %1925 = vmatpush1.msra.mxu0 0.0
  %1926 = vmatprep.subr.mxu0 0.0
  %1927 = vmatpush1.msra.mxu0 0.0
  %1928 = vmatprep.mubr.f32.mxu0 0.0
  %1929 = vmatmul.mubr.f32.gmra.mrb[0].mxu0 %v1859
  %v1930 = vpop.f32.mrb[0].mxu0
  %v1931 = vadd.f32 0.0, %v1930
  %v1932 = vpop.f32.mrb[0].mxu0
  %1933 = vmatprep.mubr.f32.mxu0 0.0
  %1934 = vmatmul.mubr.f32.gmra.mrb[0].mxu0 %v1862
  %v1935 = vpop.f32.mrb[0].mxu0
  %v1936 = vadd.f32 0.0, %v1935
  %v1937 = vpop.f32.mrb[0].mxu0
  %1938 = vdwg.mxu0
  %s1939 = scalar_lea.vmem %s5, 32
  %v1940 = vld [vmem:[%s1939] sm:$0xff]
  %v1941 = vld [vmem:[%s1939 + $0x8] sm:$0xff]
  %s1942 = scalar_lea.vmem %s3, 224
  %v1943 = vld [vmem:[%s1942] sm:$0xff]
  %v1944 = vld [vmem:[%s1942 + $0x8] sm:$0xff]
  %v1945 = vld [vmem:[%s1942 + $0x10] sm:$0xff]
  %v1946 = vld [vmem:[%s1942 + $0x18] sm:$0xff]
  %s1947 = scalar_lea.vmem %s4, 7
  %v1948 = vld [vmem:[%s1947] sm:$0x1]
  %v1950 = vlaneseq
  %v1951 = vshrl.u32 %v1950, 7
  %v1952 = vsub.s32 0, %v1951
  %v1953 = vrot.slane %v1948, %v1952
  %1955 = vmatprep.subr.mxu0 0.0
  %1956 = vmatpush1.msra.mxu0 %v1943
  %1957 = vmatprep.subr.mxu0 0.0
  %1958 = vmatpush1.msra.mxu0 %v1944
  %1959 = vmatprep.subr.mxu0 0.0
  %1960 = vmatpush1.msra.mxu0 %v1945
  %1961 = vmatprep.subr.mxu0 0.0
  %1962 = vmatpush1.msra.mxu0 %v1946
  %1963 = vmatprep.subr.mxu0 0.0
  %1964 = vmatpush1.msra.mxu0 0.0
  %1965 = vmatprep.subr.mxu0 0.0
  %1966 = vmatpush1.msra.mxu0 0.0
  %1967 = vmatprep.subr.mxu0 0.0
  %1968 = vmatpush1.msra.mxu0 0.0
  %1969 = vmatprep.subr.mxu0 0.0
  %1970 = vmatpush1.msra.mxu0 0.0
  %1971 = vmatprep.subr.mxu0 0.0
  %1972 = vmatpush1.msra.mxu0 0.0
  %1973 = vmatprep.subr.mxu0 0.0
  %1974 = vmatpush1.msra.mxu0 0.0
  %1975 = vmatprep.subr.mxu0 0.0
  %1976 = vmatpush1.msra.mxu0 0.0
  %1977 = vmatprep.subr.mxu0 0.0
  %1978 = vmatpush1.msra.mxu0 0.0
  %1979 = vmatprep.subr.mxu0 0.0
  %1980 = vmatpush1.msra.mxu0 0.0
  %1981 = vmatprep.subr.mxu0 0.0
  %1982 = vmatpush1.msra.mxu0 0.0
  %1983 = vmatprep.subr.mxu0 0.0
  %1984 = vmatpush1.msra.mxu0 0.0
  %1985 = vmatprep.subr.mxu0 0.0
  %1986 = vmatpush1.msra.mxu0 0.0
  %1987 = vmatprep.subr.mxu0 0.0
  %1988 = vmatpush1.msra.mxu0 0.0
  %1989 = vmatprep.subr.mxu0 0.0
  %1990 = vmatpush1.msra.mxu0 0.0
  %1991 = vmatprep.subr.mxu0 0.0
  %1992 = vmatpush1.msra.mxu0 0.0
  %1993 = vmatprep.subr.mxu0 0.0
  %1994 = vmatpush1.msra.mxu0 0.0
  %1995 = vmatprep.subr.mxu0 0.0
  %1996 = vmatpush1.msra.mxu0 0.0
  %1997 = vmatprep.subr.mxu0 0.0
  %1998 = vmatpush1.msra.mxu0 0.0
  %1999 = vmatprep.subr.mxu0 0.0
  %2000 = vmatpush1.msra.mxu0 0.0
  %2001 = vmatprep.subr.mxu0 0.0
  %2002 = vmatpush1.msra.mxu0 0.0
  %2003 = vmatprep.subr.mxu0 0.0
  %2004 = vmatpush1.msra.mxu0 0.0
  %2005 = vmatprep.subr.mxu0 0.0
  %2006 = vmatpush1.msra.mxu0 0.0
  %2007 = vmatprep.subr.mxu0 0.0
  %2008 = vmatpush1.msra.mxu0 0.0
  %2009 = vmatprep.subr.mxu0 0.0
  %2010 = vmatpush1.msra.mxu0 0.0
  %2011 = vmatprep.subr.mxu0 0.0
  %2012 = vmatpush1.msra.mxu0 0.0
  %2013 = vmatprep.subr.mxu0 0.0
  %2014 = vmatpush1.msra.mxu0 0.0
  %2015 = vmatprep.subr.mxu0 0.0
  %2016 = vmatpush1.msra.mxu0 0.0
  %2017 = vmatprep.subr.mxu0 0.0
  %2018 = vmatpush1.msra.mxu0 0.0
  %2019 = vmatprep.mubr.f32.mxu0 0.0
  %2020 = vmatmul.mubr.f32.gmra.mrb[0].mxu0 %v1489
  %v2021 = vpop.f32.mrb[0].mxu0
  %v2022 = vadd.f32 %v1953, %v2021
  %v2023 = vpop.f32.mrb[0].mxu0
  %2024 = vmatprep.mubr.f32.mxu0 0.0
  %2025 = vmatmul.mubr.f32.gmra.mrb[0].mxu0 %v1492
  %v2026 = vpop.f32.mrb[0].mxu0
  %v2027 = vadd.f32 %v1953, %v2026
  %v2028 = vpop.f32.mrb[0].mxu0
  %2029 = vdwg.mxu0
  %s2030 = scalar_lea.vmem %s3, 288
  %v2031 = vld [vmem:[%s2030] sm:$0xff]
  %v2032 = vld [vmem:[%s2030 + $0x8] sm:$0xff]
  %v2033 = vld [vmem:[%s2030 + $0x10] sm:$0xff]
  %v2034 = vld [vmem:[%s2030 + $0x18] sm:$0xff]
  %s2035 = scalar_lea.vmem %s4, 9
  %v2036 = vld [vmem:[%s2035] sm:$0x1]
  %v2038 = vlaneseq
  %v2039 = vshrl.u32 %v2038, 7
  %v2040 = vsub.s32 0, %v2039
  %v2041 = vrot.slane %v2036, %v2040
  %2043 = vmatprep.subr.mxu0 0.0
  %2044 = vmatpush1.msra.mxu0 %v2031
  %2045 = vmatprep.subr.mxu0 0.0
  %2046 = vmatpush1.msra.mxu0 %v2032
  %2047 = vmatprep.subr.mxu0 0.0
  %2048 = vmatpush1.msra.mxu0 %v2033
  %2049 = vmatprep.subr.mxu0 0.0
  %2050 = vmatpush1.msra.mxu0 %v2034
  %2051 = vmatprep.subr.mxu0 0.0
  %2052 = vmatpush1.msra.mxu0 0.0
  %2053 = vmatprep.subr.mxu0 0.0
  %2054 = vmatpush1.msra.mxu0 0.0
  %2055 = vmatprep.subr.mxu0 0.0
  %2056 = vmatpush1.msra.mxu0 0.0
  %2057 = vmatprep.subr.mxu0 0.0
  %2058 = vmatpush1.msra.mxu0 0.0
  %2059 = vmatprep.subr.mxu0 0.0
  %2060 = vmatpush1.msra.mxu0 0.0
  %2061 = vmatprep.subr.mxu0 0.0
  %2062 = vmatpush1.msra.mxu0 0.0
  %2063 = vmatprep.subr.mxu0 0.0
  %2064 = vmatpush1.msra.mxu0 0.0
  %2065 = vmatprep.subr.mxu0 0.0
  %2066 = vmatpush1.msra.mxu0 0.0
  %2067 = vmatprep.subr.mxu0 0.0
  %2068 = vmatpush1.msra.mxu0 0.0
  %2069 = vmatprep.subr.mxu0 0.0
  %2070 = vmatpush1.msra.mxu0 0.0
  %2071 = vmatprep.subr.mxu0 0.0
  %2072 = vmatpush1.msra.mxu0 0.0
  %2073 = vmatprep.subr.mxu0 0.0
  %2074 = vmatpush1.msra.mxu0 0.0
  %2075 = vmatprep.subr.mxu0 0.0
  %2076 = vmatpush1.msra.mxu0 0.0
  %2077 = vmatprep.subr.mxu0 0.0
  %2078 = vmatpush1.msra.mxu0 0.0
  %2079 = vmatprep.subr.mxu0 0.0
  %2080 = vmatpush1.msra.mxu0 0.0
  %2081 = vmatprep.subr.mxu0 0.0
  %2082 = vmatpush1.msra.mxu0 0.0
  %2083 = vmatprep.subr.mxu0 0.0
  %2084 = vmatpush1.msra.mxu0 0.0
  %2085 = vmatprep.subr.mxu0 0.0
  %2086 = vmatpush1.msra.mxu0 0.0
  %2087 = vmatprep.subr.mxu0 0.0
  %2088 = vmatpush1.msra.mxu0 0.0
  %2089 = vmatprep.subr.mxu0 0.0
  %2090 = vmatpush1.msra.mxu0 0.0
  %2091 = vmatprep.subr.mxu0 0.0
  %2092 = vmatpush1.msra.mxu0 0.0
  %2093 = vmatprep.subr.mxu0 0.0
  %2094 = vmatpush1.msra.mxu0 0.0
  %2095 = vmatprep.subr.mxu0 0.0
  %2096 = vmatpush1.msra.mxu0 0.0
  %2097 = vmatprep.subr.mxu0 0.0
  %2098 = vmatpush1.msra.mxu0 0.0
  %2099 = vmatprep.subr.mxu0 0.0
  %2100 = vmatpush1.msra.mxu0 0.0
  %2101 = vmatprep.subr.mxu0 0.0
  %2102 = vmatpush1.msra.mxu0 0.0
  %2103 = vmatprep.subr.mxu0 0.0
  %2104 = vmatpush1.msra.mxu0 0.0
  %2105 = vmatprep.subr.mxu0 0.0
  %2106 = vmatpush1.msra.mxu0 0.0
  %2107 = vmatprep.mubr.f32.mxu0 0.0
  %2108 = vmatmul.mubr.f32.gmra.mrb[0].mxu0 %v1489
  %v2109 = vpop.f32.mrb[0].mxu0
  %v2110 = vadd.f32 %v2041, %v2109
  %v2111 = vpop.f32.mrb[0].mxu0
  %2112 = vmatprep.mubr.f32.mxu0 0.0
  %2113 = vmatmul.mubr.f32.gmra.mrb[0].mxu0 %v1492
  %v2114 = vpop.f32.mrb[0].mxu0
  %v2115 = vadd.f32 %v2041, %v2114
  %v2116 = vpop.f32.mrb[0].mxu0
  %2117 = vdwg.mxu0
  %s2118 = scalar_lea.vmem %s3, 352
  %v2119 = vld [vmem:[%s2118] sm:$0xff]
  %v2120 = vld [vmem:[%s2118 + $0x8] sm:$0xff]
  %v2121 = vld [vmem:[%s2118 + $0x10] sm:$0xff]
  %v2122 = vld [vmem:[%s2118 + $0x18] sm:$0xff]
  %s2123 = scalar_lea.vmem %s4, 11
  %v2124 = vld [vmem:[%s2123] sm:$0x1]
  %v2126 = vlaneseq
  %v2127 = vshrl.u32 %v2126, 7
  %v2128 = vsub.s32 0, %v2127
  %v2129 = vrot.slane %v2124, %v2128
  %2131 = vmatprep.subr.mxu0 0.0
  %2132 = vmatpush1.msra.mxu0 %v2119
  %2133 = vmatprep.subr.mxu0 0.0
  %2134 = vmatpush1.msra.mxu0 %v2120
  %2135 = vmatprep.subr.mxu0 0.0
  %2136 = vmatpush1.msra.mxu0 %v2121
  %2137 = vmatprep.subr.mxu0 0.0
  %2138 = vmatpush1.msra.mxu0 %v2122
  %2139 = vmatprep.subr.mxu0 0.0
  %2140 = vmatpush1.msra.mxu0 0.0
  %2141 = vmatprep.subr.mxu0 0.0
  %2142 = vmatpush1.msra.mxu0 0.0
  %2143 = vmatprep.subr.mxu0 0.0
  %2144 = vmatpush1.msra.mxu0 0.0
  %2145 = vmatprep.subr.mxu0 0.0
  %2146 = vmatpush1.msra.mxu0 0.0
  %2147 = vmatprep.subr.mxu0 0.0
  %2148 = vmatpush1.msra.mxu0 0.0
  %2149 = vmatprep.subr.mxu0 0.0
  %2150 = vmatpush1.msra.mxu0 0.0
  %2151 = vmatprep.subr.mxu0 0.0
  %2152 = vmatpush1.msra.mxu0 0.0
  %2153 = vmatprep.subr.mxu0 0.0
  %2154 = vmatpush1.msra.mxu0 0.0
  %2155 = vmatprep.subr.mxu0 0.0
  %2156 = vmatpush1.msra.mxu0 0.0
  %2157 = vmatprep.subr.mxu0 0.0
  %2158 = vmatpush1.msra.mxu0 0.0
  %2159 = vmatprep.subr.mxu0 0.0
  %2160 = vmatpush1.msra.mxu0 0.0
  %2161 = vmatprep.subr.mxu0 0.0
  %2162 = vmatpush1.msra.mxu0 0.0
  %2163 = vmatprep.subr.mxu0 0.0
  %2164 = vmatpush1.msra.mxu0 0.0
  %2165 = vmatprep.subr.mxu0 0.0
  %2166 = vmatpush1.msra.mxu0 0.0
  %2167 = vmatprep.subr.mxu0 0.0
  %2168 = vmatpush1.msra.mxu0 0.0
  %2169 = vmatprep.subr.mxu0 0.0
  %2170 = vmatpush1.msra.mxu0 0.0
  %2171 = vmatprep.subr.mxu0 0.0
  %2172 = vmatpush1.msra.mxu0 0.0
  %2173 = vmatprep.subr.mxu0 0.0
  %2174 = vmatpush1.msra.mxu0 0.0
  %2175 = vmatprep.subr.mxu0 0.0
  %2176 = vmatpush1.msra.mxu0 0.0
  %2177 = vmatprep.subr.mxu0 0.0
  %2178 = vmatpush1.msra.mxu0 0.0
  %2179 = vmatprep.subr.mxu0 0.0
  %2180 = vmatpush1.msra.mxu0 0.0
  %2181 = vmatprep.subr.mxu0 0.0
  %2182 = vmatpush1.msra.mxu0 0.0
  %2183 = vmatprep.subr.mxu0 0.0
  %2184 = vmatpush1.msra.mxu0 0.0
  %2185 = vmatprep.subr.mxu0 0.0
  %2186 = vmatpush1.msra.mxu0 0.0
  %2187 = vmatprep.subr.mxu0 0.0
  %2188 = vmatpush1.msra.mxu0 0.0
  %2189 = vmatprep.subr.mxu0 0.0
  %2190 = vmatpush1.msra.mxu0 0.0
  %2191 = vmatprep.subr.mxu0 0.0
  %2192 = vmatpush1.msra.mxu0 0.0
  %2193 = vmatprep.subr.mxu0 0.0
  %2194 = vmatpush1.msra.mxu0 0.0
  %2195 = vmatprep.mubr.f32.mxu0 0.0
  %2196 = vmatmul.mubr.f32.gmra.mrb[0].mxu0 %v1489
  %v2197 = vpop.f32.mrb[0].mxu0
  %v2198 = vadd.f32 %v2129, %v2197
  %v2199 = vpop.f32.mrb[0].mxu0
  %2200 = vmatprep.mubr.f32.mxu0 0.0
  %2201 = vmatmul.mubr.f32.gmra.mrb[0].mxu0 %v1492
  %v2202 = vpop.f32.mrb[0].mxu0
  %v2203 = vadd.f32 %v2129, %v2202
  %v2204 = vpop.f32.mrb[0].mxu0
  %2205 = vdwg.mxu0
  %v2207 = vsel %vm363, %v2022, 0
  %v2210 = vsel %vm363, %v2027, 0
  %v2213 = vsel %vm363, %v2110, 0
  %v2216 = vsel %vm363, %v2115, 0
  %2218 = vmatprep.subr.mxu0 0.0
  %2219 = vmatpush1.xpose.msra.mxu0 %v2213
  %2220 = vmatprep.subr.mxu0 0.0
  %2221 = vmatpush1.xpose.msra.mxu0 %v2216
  %2222 = vmatprep.subr.mxu0 0.0
  %2223 = vmatpush1.xpose.msra.mxu0 0.0
  %2224 = vmatprep.subr.mxu0 0.0
  %2225 = vmatpush1.xpose.msra.mxu0 0.0
  %2226 = vmatprep.subr.mxu0 0.0
  %2227 = vmatpush1.xpose.msra.mxu0 0.0
  %2228 = vmatprep.subr.mxu0 0.0
  %2229 = vmatpush1.xpose.msra.mxu0 0.0
  %2230 = vmatprep.subr.mxu0 0.0
  %2231 = vmatpush1.xpose.msra.mxu0 0.0
  %2232 = vmatprep.subr.mxu0 0.0
  %2233 = vmatpush1.xpose.msra.mxu0 0.0
  %2234 = vmatprep.subr.mxu0 0.0
  %2235 = vmatpush1.xpose.msra.mxu0 0.0
  %2236 = vmatprep.subr.mxu0 0.0
  %2237 = vmatpush1.xpose.msra.mxu0 0.0
  %2238 = vmatprep.subr.mxu0 0.0
  %2239 = vmatpush1.xpose.msra.mxu0 0.0
  %2240 = vmatprep.subr.mxu0 0.0
  %2241 = vmatpush1.xpose.msra.mxu0 0.0
  %2242 = vmatprep.subr.mxu0 0.0
  %2243 = vmatpush1.xpose.msra.mxu0 0.0
  %2244 = vmatprep.subr.mxu0 0.0
  %2245 = vmatpush1.xpose.msra.mxu0 0.0
  %2246 = vmatprep.subr.mxu0 0.0
  %2247 = vmatpush1.xpose.msra.mxu0 0.0
  %2248 = vmatprep.subr.mxu0 0.0
  %2249 = vmatpush1.xpose.msra.mxu0 0.0
  %2250 = vmatprep.subr.mxu0 0.0
  %2251 = vmatpush1.xpose.msra.mxu0 0.0
  %2252 = vmatprep.subr.mxu0 0.0
  %2253 = vmatpush1.xpose.msra.mxu0 0.0
  %2254 = vmatprep.subr.mxu0 0.0
  %2255 = vmatpush1.xpose.msra.mxu0 0.0
  %2256 = vmatprep.subr.mxu0 0.0
  %2257 = vmatpush1.xpose.msra.mxu0 0.0
  %2258 = vmatprep.subr.mxu0 0.0
  %2259 = vmatpush1.xpose.msra.mxu0 0.0
  %2260 = vmatprep.subr.mxu0 0.0
  %2261 = vmatpush1.xpose.msra.mxu0 0.0
  %2262 = vmatprep.subr.mxu0 0.0
  %2263 = vmatpush1.xpose.msra.mxu0 0.0
  %2264 = vmatprep.subr.mxu0 0.0
  %2265 = vmatpush1.xpose.msra.mxu0 0.0
  %2266 = vmatprep.subr.mxu0 0.0
  %2267 = vmatpush1.xpose.msra.mxu0 0.0
  %2268 = vmatprep.subr.mxu0 0.0
  %2269 = vmatpush1.xpose.msra.mxu0 0.0
  %2270 = vmatprep.subr.mxu0 0.0
  %2271 = vmatpush1.xpose.msra.mxu0 0.0
  %2272 = vmatprep.subr.mxu0 0.0
  %2273 = vmatpush1.xpose.msra.mxu0 0.0
  %2274 = vmatprep.subr.mxu0 0.0
  %2275 = vmatpush1.xpose.msra.mxu0 0.0
  %2276 = vmatprep.subr.mxu0 0.0
  %2277 = vmatpush1.xpose.msra.mxu0 0.0
  %2278 = vmatprep.subr.mxu0 0.0
  %2279 = vmatpush1.xpose.msra.mxu0 0.0
  %2280 = vmatprep.subr.mxu0 0.0
  %2281 = vmatpush1.xpose.msra.mxu0 0.0
  %2282 = vmatprep.mubr.f32.mxu0 0.0
  %2283 = vmatmul.mubr.f32.gmra.mrb[0].mxu0 %v2207
  %v2284 = vpop.f32.mrb[0].mxu0
  %v2285 = vadd.f32 0.0, %v2284
  %v2286 = vpop.f32.mrb[0].mxu0
  %2287 = vmatprep.mubr.f32.mxu0 0.0
  %2288 = vmatmul.mubr.f32.gmra.mrb[0].mxu0 %v2210
  %v2289 = vpop.f32.mrb[0].mxu0
  %v2290 = vadd.f32 0.0, %v2289
  %v2291 = vpop.f32.mrb[0].mxu0
  %2292 = vdwg.mxu0
  %v2293 = vmul.f32 %v2285, 0.25
  %v2294 = vmul.f32 %v2290, 0.25
  %v2295 = vadd.f32 %v2293, %v92
  %v2296 = vadd.f32 %v2294, %v93
  %v2297 = vsel %vm363, %v2295, -inf
  %2298 = vmax.xlane.f32.xlu0 %v2297
  %v2299 = vpop.xlane.xlu0 %2298
  %v2300 = vsel %vm363, %v2296, -inf
  %2301 = vmax.xlane.f32.xlu0 %v2300
  %v2302 = vpop.xlane.xlu0 %2301
  %v2303 = vsub.f32 %v2295, %v2299
  %v2304 = vsub.f32 %v2296, %v2302
  %v2305 = vmul.f32 %v2303, 1.442695
  %v2306 = vpow.pop %v2305
  %v2307 = vmul.f32 %v2304, 1.442695
  %v2308 = vpow.pop %v2307
  %v2309 = vsel %vm363, %v2306, 0.0
  %2310 = vadd.xlane.f32.xlu0 %v2309
  %v2311 = vpop.xlane.xlu0 %2310
  %v2312 = vsel %vm363, %v2308, 0.0
  %2313 = vadd.xlane.f32.xlu0 %v2312
  %v2314 = vpop.xlane.xlu0 %2313
  %v2315 = vrcp.pop %v2311
  %v2316 = vrcp.pop %v2314
  %v2317 = vmul.f32 %v2306, %v2315
  %v2318 = vmul.f32 %v2308, %v2316
  %v2320 = vsel %vm363, %v2317, 0
  %v2323 = vsel %vm363, %v2318, 0
  %2325 = vmatprep.subr.mxu0 0.0
  %2326 = vmatpush1.msra.mxu0 %v2198
  %2327 = vmatprep.subr.mxu0 0.0
  %2328 = vmatpush1.msra.mxu0 %v2203
  %2329 = vmatprep.subr.mxu0 0.0
  %2330 = vmatpush1.msra.mxu0 0.0
  %2331 = vmatprep.subr.mxu0 0.0
  %2332 = vmatpush1.msra.mxu0 0.0
  %2333 = vmatprep.subr.mxu0 0.0
  %2334 = vmatpush1.msra.mxu0 0.0
  %2335 = vmatprep.subr.mxu0 0.0
  %2336 = vmatpush1.msra.mxu0 0.0
  %2337 = vmatprep.subr.mxu0 0.0
  %2338 = vmatpush1.msra.mxu0 0.0
  %2339 = vmatprep.subr.mxu0 0.0
  %2340 = vmatpush1.msra.mxu0 0.0
  %2341 = vmatprep.subr.mxu0 0.0
  %2342 = vmatpush1.msra.mxu0 0.0
  %2343 = vmatprep.subr.mxu0 0.0
  %2344 = vmatpush1.msra.mxu0 0.0
  %2345 = vmatprep.subr.mxu0 0.0
  %2346 = vmatpush1.msra.mxu0 0.0
  %2347 = vmatprep.subr.mxu0 0.0
  %2348 = vmatpush1.msra.mxu0 0.0
  %2349 = vmatprep.subr.mxu0 0.0
  %2350 = vmatpush1.msra.mxu0 0.0
  %2351 = vmatprep.subr.mxu0 0.0
  %2352 = vmatpush1.msra.mxu0 0.0
  %2353 = vmatprep.subr.mxu0 0.0
  %2354 = vmatpush1.msra.mxu0 0.0
  %2355 = vmatprep.subr.mxu0 0.0
  %2356 = vmatpush1.msra.mxu0 0.0
  %2357 = vmatprep.subr.mxu0 0.0
  %2358 = vmatpush1.msra.mxu0 0.0
  %2359 = vmatprep.subr.mxu0 0.0
  %2360 = vmatpush1.msra.mxu0 0.0
  %2361 = vmatprep.subr.mxu0 0.0
  %2362 = vmatpush1.msra.mxu0 0.0
  %2363 = vmatprep.subr.mxu0 0.0
  %2364 = vmatpush1.msra.mxu0 0.0
  %2365 = vmatprep.subr.mxu0 0.0
  %2366 = vmatpush1.msra.mxu0 0.0
  %2367 = vmatprep.subr.mxu0 0.0
  %2368 = vmatpush1.msra.mxu0 0.0
  %2369 = vmatprep.subr.mxu0 0.0
  %2370 = vmatpush1.msra.mxu0 0.0
  %2371 = vmatprep.subr.mxu0 0.0
  %2372 = vmatpush1.msra.mxu0 0.0
  %2373 = vmatprep.subr.mxu0 0.0
  %2374 = vmatpush1.msra.mxu0 0.0
  %2375 = vmatprep.subr.mxu0 0.0
  %2376 = vmatpush1.msra.mxu0 0.0
  %2377 = vmatprep.subr.mxu0 0.0
  %2378 = vmatpush1.msra.mxu0 0.0
  %2379 = vmatprep.subr.mxu0 0.0
  %2380 = vmatpush1.msra.mxu0 0.0
  %2381 = vmatprep.subr.mxu0 0.0
  %2382 = vmatpush1.msra.mxu0 0.0
  %2383 = vmatprep.subr.mxu0 0.0
  %2384 = vmatpush1.msra.mxu0 0.0
  %2385 = vmatprep.subr.mxu0 0.0
  %2386 = vmatpush1.msra.mxu0 0.0
  %2387 = vmatprep.subr.mxu0 0.0
  %2388 = vmatpush1.msra.mxu0 0.0
  %2389 = vmatprep.mubr.f32.mxu0 0.0
  %2390 = vmatmul.mubr.f32.gmra.mrb[0].mxu0 %v2320
  %v2391 = vpop.f32.mrb[0].mxu0
  %v2392 = vadd.f32 0.0, %v2391
  %v2393 = vpop.f32.mrb[0].mxu0
  %2394 = vmatprep.mubr.f32.mxu0 0.0
  %2395 = vmatmul.mubr.f32.gmra.mrb[0].mxu0 %v2323
  %v2396 = vpop.f32.mrb[0].mxu0
  %v2397 = vadd.f32 0.0, %v2396
  %v2398 = vpop.f32.mrb[0].mxu0
  %2399 = vdwg.mxu0
  %s2400 = scalar_lea.vmem %s5, 48
  %v2401 = vld [vmem:[%s2400] sm:$0xff]
  %v2402 = vld [vmem:[%s2400 + $0x8] sm:$0xff]
  %v2404 = vsel %vm363, %v2392, 0
  %v2407 = vsel %vm363, %v2397, 0
  %2409 = vmatprep.subr.mxu0 0.0
  %2410 = vmatpush1.msra.mxu0 %v2401
  %2411 = vmatprep.subr.mxu0 0.0
  %2412 = vmatpush1.msra.mxu0 %v2402
  %2413 = vmatprep.subr.mxu0 0.0
  %2414 = vmatpush1.msra.mxu0 0.0
  %2415 = vmatprep.subr.mxu0 0.0
  %2416 = vmatpush1.msra.mxu0 0.0
  %2417 = vmatprep.subr.mxu0 0.0
  %2418 = vmatpush1.msra.mxu0 0.0
  %2419 = vmatprep.subr.mxu0 0.0
  %2420 = vmatpush1.msra.mxu0 0.0
  %2421 = vmatprep.subr.mxu0 0.0
  %2422 = vmatpush1.msra.mxu0 0.0
  %2423 = vmatprep.subr.mxu0 0.0
  %2424 = vmatpush1.msra.mxu0 0.0
  %2425 = vmatprep.subr.mxu0 0.0
  %2426 = vmatpush1.msra.mxu0 0.0
  %2427 = vmatprep.subr.mxu0 0.0
  %2428 = vmatpush1.msra.mxu0 0.0
  %2429 = vmatprep.subr.mxu0 0.0
  %2430 = vmatpush1.msra.mxu0 0.0
  %2431 = vmatprep.subr.mxu0 0.0
  %2432 = vmatpush1.msra.mxu0 0.0
  %2433 = vmatprep.subr.mxu0 0.0
  %2434 = vmatpush1.msra.mxu0 0.0
  %2435 = vmatprep.subr.mxu0 0.0
  %2436 = vmatpush1.msra.mxu0 0.0
  %2437 = vmatprep.subr.mxu0 0.0
  %2438 = vmatpush1.msra.mxu0 0.0
  %2439 = vmatprep.subr.mxu0 0.0
  %2440 = vmatpush1.msra.mxu0 0.0
  %2441 = vmatprep.subr.mxu0 0.0
  %2442 = vmatpush1.msra.mxu0 0.0
  %2443 = vmatprep.subr.mxu0 0.0
  %2444 = vmatpush1.msra.mxu0 0.0
  %2445 = vmatprep.subr.mxu0 0.0
  %2446 = vmatpush1.msra.mxu0 0.0
  %2447 = vmatprep.subr.mxu0 0.0
  %2448 = vmatpush1.msra.mxu0 0.0
  %2449 = vmatprep.subr.mxu0 0.0
  %2450 = vmatpush1.msra.mxu0 0.0
  %2451 = vmatprep.subr.mxu0 0.0
  %2452 = vmatpush1.msra.mxu0 0.0
  %2453 = vmatprep.subr.mxu0 0.0
  %2454 = vmatpush1.msra.mxu0 0.0
  %2455 = vmatprep.subr.mxu0 0.0
  %2456 = vmatpush1.msra.mxu0 0.0
  %2457 = vmatprep.subr.mxu0 0.0
  %2458 = vmatpush1.msra.mxu0 0.0
  %2459 = vmatprep.subr.mxu0 0.0
  %2460 = vmatpush1.msra.mxu0 0.0
  %2461 = vmatprep.subr.mxu0 0.0
  %2462 = vmatpush1.msra.mxu0 0.0
  %2463 = vmatprep.subr.mxu0 0.0
  %2464 = vmatpush1.msra.mxu0 0.0
  %2465 = vmatprep.subr.mxu0 0.0
  %2466 = vmatpush1.msra.mxu0 0.0
  %2467 = vmatprep.subr.mxu0 0.0
  %2468 = vmatpush1.msra.mxu0 0.0
  %2469 = vmatprep.subr.mxu0 0.0
  %2470 = vmatpush1.msra.mxu0 0.0
  %2471 = vmatprep.subr.mxu0 0.0
  %2472 = vmatpush1.msra.mxu0 0.0
  %2473 = vmatprep.mubr.f32.mxu0 0.0
  %2474 = vmatmul.mubr.f32.gmra.mrb[0].mxu0 %v2404
  %v2475 = vpop.f32.mrb[0].mxu0
  %v2476 = vadd.f32 0.0, %v2475
  %v2477 = vpop.f32.mrb[0].mxu0
  %2478 = vmatprep.mubr.f32.mxu0 0.0
  %2479 = vmatmul.mubr.f32.gmra.mrb[0].mxu0 %v2407
  %v2480 = vpop.f32.mrb[0].mxu0
  %v2481 = vadd.f32 0.0, %v2480
  %v2482 = vpop.f32.mrb[0].mxu0
  %2483 = vdwg.mxu0
  %v2485 = vsel %vm363, %v1931, 0
  %v2488 = vsel %vm363, %v1936, 0
  %2490 = vmatprep.subr.mxu0 0.0
  %2491 = vmatpush1.msra.mxu0 %v1940
  %2492 = vmatprep.subr.mxu0 0.0
  %2493 = vmatpush1.msra.mxu0 %v1941
  %2494 = vmatprep.subr.mxu0 0.0
  %2495 = vmatpush1.msra.mxu0 0.0
  %2496 = vmatprep.subr.mxu0 0.0
  %2497 = vmatpush1.msra.mxu0 0.0
  %2498 = vmatprep.subr.mxu0 0.0
  %2499 = vmatpush1.msra.mxu0 0.0
  %2500 = vmatprep.subr.mxu0 0.0
  %2501 = vmatpush1.msra.mxu0 0.0
  %2502 = vmatprep.subr.mxu0 0.0
  %2503 = vmatpush1.msra.mxu0 0.0
  %2504 = vmatprep.subr.mxu0 0.0
  %2505 = vmatpush1.msra.mxu0 0.0
  %2506 = vmatprep.subr.mxu0 0.0
  %2507 = vmatpush1.msra.mxu0 0.0
  %2508 = vmatprep.subr.mxu0 0.0
  %2509 = vmatpush1.msra.mxu0 0.0
  %2510 = vmatprep.subr.mxu0 0.0
  %2511 = vmatpush1.msra.mxu0 0.0
  %2512 = vmatprep.subr.mxu0 0.0
  %2513 = vmatpush1.msra.mxu0 0.0
  %2514 = vmatprep.subr.mxu0 0.0
  %2515 = vmatpush1.msra.mxu0 0.0
  %2516 = vmatprep.subr.mxu0 0.0
  %2517 = vmatpush1.msra.mxu0 0.0
  %2518 = vmatprep.subr.mxu0 0.0
  %2519 = vmatpush1.msra.mxu0 0.0
  %2520 = vmatprep.subr.mxu0 0.0
  %2521 = vmatpush1.msra.mxu0 0.0
  %2522 = vmatprep.subr.mxu0 0.0
  %2523 = vmatpush1.msra.mxu0 0.0
  %2524 = vmatprep.subr.mxu0 0.0
  %2525 = vmatpush1.msra.mxu0 0.0
  %2526 = vmatprep.subr.mxu0 0.0
  %2527 = vmatpush1.msra.mxu0 0.0
  %2528 = vmatprep.subr.mxu0 0.0
  %2529 = vmatpush1.msra.mxu0 0.0
  %2530 = vmatprep.subr.mxu0 0.0
  %2531 = vmatpush1.msra.mxu0 0.0
  %2532 = vmatprep.subr.mxu0 0.0
  %2533 = vmatpush1.msra.mxu0 0.0
  %2534 = vmatprep.subr.mxu0 0.0
  %2535 = vmatpush1.msra.mxu0 0.0
  %2536 = vmatprep.subr.mxu0 0.0
  %2537 = vmatpush1.msra.mxu0 0.0
  %2538 = vmatprep.subr.mxu0 0.0
  %2539 = vmatpush1.msra.mxu0 0.0
  %2540 = vmatprep.subr.mxu0 0.0
  %2541 = vmatpush1.msra.mxu0 0.0
  %2542 = vmatprep.subr.mxu0 0.0
  %2543 = vmatpush1.msra.mxu0 0.0
  %2544 = vmatprep.subr.mxu0 0.0
  %2545 = vmatpush1.msra.mxu0 0.0
  %2546 = vmatprep.subr.mxu0 0.0
  %2547 = vmatpush1.msra.mxu0 0.0
  %2548 = vmatprep.subr.mxu0 0.0
  %2549 = vmatpush1.msra.mxu0 0.0
  %2550 = vmatprep.subr.mxu0 0.0
  %2551 = vmatpush1.msra.mxu0 0.0
  %2552 = vmatprep.subr.mxu0 0.0
  %2553 = vmatpush1.msra.mxu0 0.0
  %2554 = vmatprep.mubr.f32.mxu0 0.0
  %2555 = vmatmul.mubr.f32.gmra.mrb[0].mxu0 %v2485
  %v2556 = vpop.f32.mrb[0].mxu0
  %v2557 = vadd.f32 %v2476, %v2556
  %v2558 = vpop.f32.mrb[0].mxu0
  %2559 = vmatprep.mubr.f32.mxu0 0.0
  %2560 = vmatmul.mubr.f32.gmra.mrb[0].mxu0 %v2488
  %v2561 = vpop.f32.mrb[0].mxu0
  %v2562 = vadd.f32 %v2481, %v2561
  %v2563 = vpop.f32.mrb[0].mxu0
  %2564 = vdwg.mxu0
  %v2565 = vlaneseq
  %v2566 = vshrl.u32 %v2565, 7
  %v2567 = vsub.s32 0, %v2566
  %v2568 = vrot.slane %v1474, %v2567
  %v2569 = vadd.f32 %v2557, %v2568
  %v2570 = vadd.f32 %v2562, %v2568
  %v2571 = vadd.f32 %v1471, %v2569
  %v2572 = vadd.f32 %v1472, %v2570
  %v2573 = vsel %vm52, %v2571, 0.0
  %2574 = vadd.xlane.f32.xlu0 %v2573
  %v2575 = vpop.xlane.xlu0 %2574
  %v2576 = vsel %vm52, %v2572, 0.0
  %2577 = vadd.xlane.f32.xlu0 %v2576
  %v2578 = vpop.xlane.xlu0 %2577
  %v2579 = vmul.f32 %v2575, %v59
  %v2580 = vmul.f32 %v2578, %v59
  %v2581 = vsub.f32 %v2571, %v2579
  %v2582 = vsub.f32 %v2572, %v2580
  %v2583 = vmul.f32 %v2581, %v2581
  %v2584 = vmul.f32 %v2582, %v2582
  %v2585 = vsel %vm52, %v2583, 0.0
  %2586 = vadd.xlane.f32.xlu0 %v2585
  %v2587 = vpop.xlane.xlu0 %2586
  %v2588 = vsel %vm52, %v2584, 0.0
  %2589 = vadd.xlane.f32.xlu0 %v2588
  %v2590 = vpop.xlane.xlu0 %2589
  %v2591 = vmul.f32 %v2587, %v59
  %v2592 = vmul.f32 %v2590, %v59
  %v2593 = vadd.f32 %v2591, 1e-12
  %v2594 = vadd.f32 %v2592, 1e-12
  %v2595 = vrsqrt.pop %v2593
  %v2596 = vrsqrt.pop %v2594
  %v2597 = vmul.f32 %v2581, %v2595
  %v2598 = vmul.f32 %v2582, %v2596
  %v2599 = vlaneseq
  %v2600 = vshrl.u32 %v2599, 7
  %v2601 = vsub.s32 1, %v2600
  %v2602 = vrot.slane %v1474, %v2601
  %v2603 = vmul.f32 %v2597, %v2602
  %v2604 = vmul.f32 %v2598, %v2602
  %v2605 = vlaneseq
  %v2606 = vshrl.u32 %v2605, 7
  %v2607 = vsub.s32 2, %v2606
  %v2608 = vrot.slane %v1474, %v2607
  %v2609 = vadd.f32 %v2603, %v2608
  %v2610 = vadd.f32 %v2604, %v2608
  %s2611 = scalar_lea.vmem %s6, 32
  %v2612 = vld [vmem:[%s2611] sm:$0xff]
  %v2613 = vld [vmem:[%s2611 + $0x8] sm:$0xff]
  %v2614 = vld [vmem:[%s2611 + $0x10] sm:$0xff]
  %v2615 = vld [vmem:[%s2611 + $0x18] sm:$0xff]
  %s2616 = scalar_lea.vmem %s7, 1
  %v2617 = vld [vmem:[%s2616] sm:$0x1]
  %v2619 = vlaneseq
  %v2620 = vshrl.u32 %v2619, 7
  %v2621 = vsub.s32 0, %v2620
  %v2622 = vrot.slane %v2617, %v2621
  %v2625 = vsel %vm52, %v2609, 0
  %v2628 = vsel %vm52, %v2610, 0
  %2630 = vmatprep.subr.mxu0 0.0
  %2631 = vmatpush1.msra.mxu0 %v2612
  %2632 = vmatprep.subr.mxu0 0.0
  %2633 = vmatpush1.msra.mxu0 %v2613
  %2634 = vmatprep.subr.mxu0 0.0
  %2635 = vmatpush1.msra.mxu0 %v2614
  %2636 = vmatprep.subr.mxu0 0.0
  %2637 = vmatpush1.msra.mxu0 %v2615
  %2638 = vmatprep.subr.mxu0 0.0
  %2639 = vmatpush1.msra.mxu0 0.0
  %2640 = vmatprep.subr.mxu0 0.0
  %2641 = vmatpush1.msra.mxu0 0.0
  %2642 = vmatprep.subr.mxu0 0.0
  %2643 = vmatpush1.msra.mxu0 0.0
  %2644 = vmatprep.subr.mxu0 0.0
  %2645 = vmatpush1.msra.mxu0 0.0
  %2646 = vmatprep.subr.mxu0 0.0
  %2647 = vmatpush1.msra.mxu0 0.0
  %2648 = vmatprep.subr.mxu0 0.0
  %2649 = vmatpush1.msra.mxu0 0.0
  %2650 = vmatprep.subr.mxu0 0.0
  %2651 = vmatpush1.msra.mxu0 0.0
  %2652 = vmatprep.subr.mxu0 0.0
  %2653 = vmatpush1.msra.mxu0 0.0
  %2654 = vmatprep.subr.mxu0 0.0
  %2655 = vmatpush1.msra.mxu0 0.0
  %2656 = vmatprep.subr.mxu0 0.0
  %2657 = vmatpush1.msra.mxu0 0.0
  %2658 = vmatprep.subr.mxu0 0.0
  %2659 = vmatpush1.msra.mxu0 0.0
  %2660 = vmatprep.subr.mxu0 0.0
  %2661 = vmatpush1.msra.mxu0 0.0
  %2662 = vmatprep.subr.mxu0 0.0
  %2663 = vmatpush1.msra.mxu0 0.0
  %2664 = vmatprep.subr.mxu0 0.0
  %2665 = vmatpush1.msra.mxu0 0.0
  %2666 = vmatprep.subr.mxu0 0.0
  %2667 = vmatpush1.msra.mxu0 0.0
  %2668 = vmatprep.subr.mxu0 0.0
  %2669 = vmatpush1.msra.mxu0 0.0
  %2670 = vmatprep.subr.mxu0 0.0
  %2671 = vmatpush1.msra.mxu0 0.0
  %2672 = vmatprep.subr.mxu0 0.0
  %2673 = vmatpush1.msra.mxu0 0.0
  %2674 = vmatprep.subr.mxu0 0.0
  %2675 = vmatpush1.msra.mxu0 0.0
  %2676 = vmatprep.subr.mxu0 0.0
  %2677 = vmatpush1.msra.mxu0 0.0
  %2678 = vmatprep.subr.mxu0 0.0
  %2679 = vmatpush1.msra.mxu0 0.0
  %2680 = vmatprep.subr.mxu0 0.0
  %2681 = vmatpush1.msra.mxu0 0.0
  %2682 = vmatprep.subr.mxu0 0.0
  %2683 = vmatpush1.msra.mxu0 0.0
  %2684 = vmatprep.subr.mxu0 0.0
  %2685 = vmatpush1.msra.mxu0 0.0
  %2686 = vmatprep.subr.mxu0 0.0
  %2687 = vmatpush1.msra.mxu0 0.0
  %2688 = vmatprep.subr.mxu0 0.0
  %2689 = vmatpush1.msra.mxu0 0.0
  %2690 = vmatprep.subr.mxu0 0.0
  %2691 = vmatpush1.msra.mxu0 0.0
  %2692 = vmatprep.subr.mxu0 0.0
  %2693 = vmatpush1.msra.mxu0 0.0
  %2694 = vmatprep.mubr.f32.mxu0 0.0
  %2695 = vmatmul.mubr.f32.gmra.mrb[0].mxu0 %v2625
  %v2696 = vpop.f32.mrb[0].mxu0
  %v2697 = vadd.f32 %v2622, %v2696
  %v2698 = vpop.f32.mrb[0].mxu0
  %2699 = vmatprep.mubr.f32.mxu0 0.0
  %2700 = vmatmul.mubr.f32.gmra.mrb[0].mxu0 %v2628
  %v2701 = vpop.f32.mrb[0].mxu0
  %v2702 = vadd.f32 %v2622, %v2701
  %v2703 = vpop.f32.mrb[0].mxu0
  %2704 = vdwg.mxu0
  %v2705 = vmul.f32 %v2697, 0.5
  %v2706 = vmul.f32 %v2702, 0.5
  %v2707 = vmul.f32 %v2697, 0.044715
  %v2708 = vmul.f32 %v2702, 0.044715
  %v2709 = vmul.f32 %v2707, %v2697
  %v2710 = vmul.f32 %v2708, %v2702
  %v2711 = vmul.f32 %v2709, %v2697
  %v2712 = vmul.f32 %v2710, %v2702
  %v2713 = vadd.f32 %v2697, %v2711
  %v2714 = vadd.f32 %v2702, %v2712
  %v2715 = vmul.f32 %v2713, 0.7978846
  %v2716 = vmul.f32 %v2714, 0.7978846
  %v2717 = vtanh.pop %v2715
  %v2718 = vtanh.pop %v2716
  %v2719 = vadd.f32 %v2717, 1.0
  %v2720 = vadd.f32 %v2718, 1.0
  %v2721 = vmul.f32 %v2705, %v2719
  %v2722 = vmul.f32 %v2706, %v2720
  %s2723 = scalar_lea.vmem %s8, 64
  %v2724 = vld [vmem:[%s2723] sm:$0xff]
  %v2725 = vld [vmem:[%s2723 + $0x8] sm:$0xff]
  %v2726 = vld [vmem:[%s2723 + $0x10] sm:$0xff]
  %v2727 = vld [vmem:[%s2723 + $0x18] sm:$0xff]
  %v2728 = vld [vmem:[%s2723 + $0x20] sm:$0xff]
  %v2729 = vld [vmem:[%s2723 + $0x28] sm:$0xff]
  %v2730 = vld [vmem:[%s2723 + $0x30] sm:$0xff]
  %v2731 = vld [vmem:[%s2723 + $0x38] sm:$0xff]
  %v2732 = vlaneseq
  %v2733 = vshrl.u32 %v2732, 7
  %v2734 = vsub.s32 3, %v2733
  %v2735 = vrot.slane %v1474, %v2734
  %v2737 = vsel %vm1351, %v2721, 0
  %v2740 = vsel %vm1351, %v2722, 0
  %2742 = vmatprep.subr.mxu0 0.0
  %2743 = vmatpush1.msra.mxu0 %v2724
  %2744 = vmatprep.subr.mxu0 0.0
  %2745 = vmatpush1.msra.mxu0 %v2725
  %2746 = vmatprep.subr.mxu0 0.0
  %2747 = vmatpush1.msra.mxu0 %v2726
  %2748 = vmatprep.subr.mxu0 0.0
  %2749 = vmatpush1.msra.mxu0 %v2727
  %2750 = vmatprep.subr.mxu0 0.0
  %2751 = vmatpush1.msra.mxu0 %v2728
  %2752 = vmatprep.subr.mxu0 0.0
  %2753 = vmatpush1.msra.mxu0 %v2729
  %2754 = vmatprep.subr.mxu0 0.0
  %2755 = vmatpush1.msra.mxu0 %v2730
  %2756 = vmatprep.subr.mxu0 0.0
  %2757 = vmatpush1.msra.mxu0 %v2731
  %2758 = vmatprep.subr.mxu0 0.0
  %2759 = vmatpush1.msra.mxu0 0.0
  %2760 = vmatprep.subr.mxu0 0.0
  %2761 = vmatpush1.msra.mxu0 0.0
  %2762 = vmatprep.subr.mxu0 0.0
  %2763 = vmatpush1.msra.mxu0 0.0
  %2764 = vmatprep.subr.mxu0 0.0
  %2765 = vmatpush1.msra.mxu0 0.0
  %2766 = vmatprep.subr.mxu0 0.0
  %2767 = vmatpush1.msra.mxu0 0.0
  %2768 = vmatprep.subr.mxu0 0.0
  %2769 = vmatpush1.msra.mxu0 0.0
  %2770 = vmatprep.subr.mxu0 0.0
  %2771 = vmatpush1.msra.mxu0 0.0
  %2772 = vmatprep.subr.mxu0 0.0
  %2773 = vmatpush1.msra.mxu0 0.0
  %2774 = vmatprep.subr.mxu0 0.0
  %2775 = vmatpush1.msra.mxu0 0.0
  %2776 = vmatprep.subr.mxu0 0.0
  %2777 = vmatpush1.msra.mxu0 0.0
  %2778 = vmatprep.subr.mxu0 0.0
  %2779 = vmatpush1.msra.mxu0 0.0
  %2780 = vmatprep.subr.mxu0 0.0
  %2781 = vmatpush1.msra.mxu0 0.0
  %2782 = vmatprep.subr.mxu0 0.0
  %2783 = vmatpush1.msra.mxu0 0.0
  %2784 = vmatprep.subr.mxu0 0.0
  %2785 = vmatpush1.msra.mxu0 0.0
  %2786 = vmatprep.subr.mxu0 0.0
  %2787 = vmatpush1.msra.mxu0 0.0
  %2788 = vmatprep.subr.mxu0 0.0
  %2789 = vmatpush1.msra.mxu0 0.0
  %2790 = vmatprep.subr.mxu0 0.0
  %2791 = vmatpush1.msra.mxu0 0.0
  %2792 = vmatprep.subr.mxu0 0.0
  %2793 = vmatpush1.msra.mxu0 0.0
  %2794 = vmatprep.subr.mxu0 0.0
  %2795 = vmatpush1.msra.mxu0 0.0
  %2796 = vmatprep.subr.mxu0 0.0
  %2797 = vmatpush1.msra.mxu0 0.0
  %2798 = vmatprep.subr.mxu0 0.0
  %2799 = vmatpush1.msra.mxu0 0.0
  %2800 = vmatprep.subr.mxu0 0.0
  %2801 = vmatpush1.msra.mxu0 0.0
  %2802 = vmatprep.subr.mxu0 0.0
  %2803 = vmatpush1.msra.mxu0 0.0
  %2804 = vmatprep.subr.mxu0 0.0
  %2805 = vmatpush1.msra.mxu0 0.0
  %2806 = vmatprep.mubr.f32.mxu0 0.0
  %2807 = vmatmul.mubr.f32.gmra.mrb[0].mxu0 %v2737
  %v2808 = vpop.f32.mrb[0].mxu0
  %v2809 = vadd.f32 %v2735, %v2808
  %v2810 = vpop.f32.mrb[0].mxu0
  %2811 = vmatprep.mubr.f32.mxu0 0.0
  %2812 = vmatmul.mubr.f32.gmra.mrb[0].mxu0 %v2740
  %v2813 = vpop.f32.mrb[0].mxu0
  %v2814 = vadd.f32 %v2735, %v2813
  %v2815 = vpop.f32.mrb[0].mxu0
  %2816 = vdwg.mxu0
  %v2817 = vadd.f32 %v2609, %v2809
  %v2818 = vadd.f32 %v2610, %v2814
  %v2819 = vsel %vm52, %v2817, 0.0
  %2820 = vadd.xlane.f32.xlu0 %v2819
  %v2821 = vpop.xlane.xlu0 %2820
  %v2822 = vsel %vm52, %v2818, 0.0
  %2823 = vadd.xlane.f32.xlu0 %v2822
  %v2824 = vpop.xlane.xlu0 %2823
  %v2825 = vmul.f32 %v2821, %v59
  %v2826 = vmul.f32 %v2824, %v59
  %v2827 = vsub.f32 %v2817, %v2825
  %v2828 = vsub.f32 %v2818, %v2826
  %v2829 = vmul.f32 %v2827, %v2827
  %v2830 = vmul.f32 %v2828, %v2828
  %v2831 = vsel %vm52, %v2829, 0.0
  %2832 = vadd.xlane.f32.xlu0 %v2831
  %v2833 = vpop.xlane.xlu0 %2832
  %v2834 = vsel %vm52, %v2830, 0.0
  %2835 = vadd.xlane.f32.xlu0 %v2834
  %v2836 = vpop.xlane.xlu0 %2835
  %v2837 = vmul.f32 %v2833, %v59
  %v2838 = vmul.f32 %v2836, %v59
  %v2839 = vadd.f32 %v2837, 1e-12
  %v2840 = vadd.f32 %v2838, 1e-12
  %v2841 = vrsqrt.pop %v2839
  %v2842 = vrsqrt.pop %v2840
  %v2843 = vmul.f32 %v2827, %v2841
  %v2844 = vmul.f32 %v2828, %v2842
  %v2845 = vlaneseq
  %v2846 = vshrl.u32 %v2845, 7
  %v2847 = vsub.s32 4, %v2846
  %v2848 = vrot.slane %v1474, %v2847
  %v2849 = vmul.f32 %v2843, %v2848
  %v2850 = vmul.f32 %v2844, %v2848
  %v2851 = vlaneseq
  %v2852 = vshrl.u32 %v2851, 7
  %v2853 = vsub.s32 5, %v2852
  %v2854 = vrot.slane %v1474, %v2853
  %v2855 = vadd.f32 %v2849, %v2854
  %v2856 = vadd.f32 %v2850, %v2854
  %v2857 = vld [vmem:[%s10] sm:$0xff]
  %v2858 = vld [vmem:[%s10 + $0x8] sm:$0xff]
  %v2859 = vld [vmem:[%s10 + $0x10] sm:$0xff]
  %v2860 = vld [vmem:[%s10 + $0x18] sm:$0xff]
  %v2861 = vld [vmem:[%s11] sm:$0x1]
  %v2863 = vlaneseq
  %v2864 = vshrl.u32 %v2863, 7
  %v2865 = vsub.s32 0, %v2864
  %v2866 = vrot.slane %v2861, %v2865
  %v2869 = vsel %vm52, %v2855, 0
  %v2872 = vsel %vm52, %v2856, 0
  %2874 = vmatprep.subr.mxu0 0.0
  %2875 = vmatpush1.msra.mxu0 %v2857
  %2876 = vmatprep.subr.mxu0 0.0
  %2877 = vmatpush1.msra.mxu0 %v2858
  %2878 = vmatprep.subr.mxu0 0.0
  %2879 = vmatpush1.msra.mxu0 %v2859
  %2880 = vmatprep.subr.mxu0 0.0
  %2881 = vmatpush1.msra.mxu0 %v2860
  %2882 = vmatprep.subr.mxu0 0.0
  %2883 = vmatpush1.msra.mxu0 0.0
  %2884 = vmatprep.subr.mxu0 0.0
  %2885 = vmatpush1.msra.mxu0 0.0
  %2886 = vmatprep.subr.mxu0 0.0
  %2887 = vmatpush1.msra.mxu0 0.0
  %2888 = vmatprep.subr.mxu0 0.0
  %2889 = vmatpush1.msra.mxu0 0.0
  %2890 = vmatprep.subr.mxu0 0.0
  %2891 = vmatpush1.msra.mxu0 0.0
  %2892 = vmatprep.subr.mxu0 0.0
  %2893 = vmatpush1.msra.mxu0 0.0
  %2894 = vmatprep.subr.mxu0 0.0
  %2895 = vmatpush1.msra.mxu0 0.0
  %2896 = vmatprep.subr.mxu0 0.0
  %2897 = vmatpush1.msra.mxu0 0.0
  %2898 = vmatprep.subr.mxu0 0.0
  %2899 = vmatpush1.msra.mxu0 0.0
  %2900 = vmatprep.subr.mxu0 0.0
  %2901 = vmatpush1.msra.mxu0 0.0
  %2902 = vmatprep.subr.mxu0 0.0
  %2903 = vmatpush1.msra.mxu0 0.0
  %2904 = vmatprep.subr.mxu0 0.0
  %2905 = vmatpush1.msra.mxu0 0.0
  %2906 = vmatprep.subr.mxu0 0.0
  %2907 = vmatpush1.msra.mxu0 0.0
  %2908 = vmatprep.subr.mxu0 0.0
  %2909 = vmatpush1.msra.mxu0 0.0
  %2910 = vmatprep.subr.mxu0 0.0
  %2911 = vmatpush1.msra.mxu0 0.0
  %2912 = vmatprep.subr.mxu0 0.0
  %2913 = vmatpush1.msra.mxu0 0.0
  %2914 = vmatprep.subr.mxu0 0.0
  %2915 = vmatpush1.msra.mxu0 0.0
  %2916 = vmatprep.subr.mxu0 0.0
  %2917 = vmatpush1.msra.mxu0 0.0
  %2918 = vmatprep.subr.mxu0 0.0
  %2919 = vmatpush1.msra.mxu0 0.0
  %2920 = vmatprep.subr.mxu0 0.0
  %2921 = vmatpush1.msra.mxu0 0.0
  %2922 = vmatprep.subr.mxu0 0.0
  %2923 = vmatpush1.msra.mxu0 0.0
  %2924 = vmatprep.subr.mxu0 0.0
  %2925 = vmatpush1.msra.mxu0 0.0
  %2926 = vmatprep.subr.mxu0 0.0
  %2927 = vmatpush1.msra.mxu0 0.0
  %2928 = vmatprep.subr.mxu0 0.0
  %2929 = vmatpush1.msra.mxu0 0.0
  %2930 = vmatprep.subr.mxu0 0.0
  %2931 = vmatpush1.msra.mxu0 0.0
  %2932 = vmatprep.subr.mxu0 0.0
  %2933 = vmatpush1.msra.mxu0 0.0
  %2934 = vmatprep.subr.mxu0 0.0
  %2935 = vmatpush1.msra.mxu0 0.0
  %2936 = vmatprep.subr.mxu0 0.0
  %2937 = vmatpush1.msra.mxu0 0.0
  %2938 = vmatprep.mubr.f32.mxu0 0.0
  %2939 = vmatmul.mubr.f32.gmra.mrb[0].mxu0 %v2869
  %v2940 = vpop.f32.mrb[0].mxu0
  %v2941 = vadd.f32 %v2866, %v2940
  %v2942 = vpop.f32.mrb[0].mxu0
  %2943 = vmatprep.mubr.f32.mxu0 0.0
  %2944 = vmatmul.mubr.f32.gmra.mrb[0].mxu0 %v2872
  %v2945 = vpop.f32.mrb[0].mxu0
  %v2946 = vadd.f32 %v2866, %v2945
  %v2947 = vpop.f32.mrb[0].mxu0
  %2948 = vdwg.mxu0
  %v2949 = vtanh.pop %v2941
  %v2950 = vtanh.pop %v2946
  %v2951 = vld [vmem:[%s12] sm:$0xff]
  %v2952 = vld [vmem:[%s12 + $0x8] sm:$0xff]
  %v2953 = vld [vmem:[%s12 + $0x10] sm:$0xff]
  %v2954 = vld [vmem:[%s12 + $0x18] sm:$0xff]
  %v2955 = vld [vmem:[#allocation2] sm:$0x1]
  %v2957 = vlaneseq
  %v2958 = vshrl.u32 %v2957, 7
  %v2959 = vsub.s32 0, %v2958
  %v2960 = vrot.slane %v2955, %v2959
  %v2963 = vsel %vm52, %v2949, 0
  %v2966 = vsel %vm52, %v2950, 0
  %2968 = vmatprep.subr.mxu0 0.0
  %2969 = vmatpush1.msra.mxu0 %v2951
  %2970 = vmatprep.subr.mxu0 0.0
  %2971 = vmatpush1.msra.mxu0 %v2952
  %2972 = vmatprep.subr.mxu0 0.0
  %2973 = vmatpush1.msra.mxu0 %v2953
  %2974 = vmatprep.subr.mxu0 0.0
  %2975 = vmatpush1.msra.mxu0 %v2954
  %2976 = vmatprep.subr.mxu0 0.0
  %2977 = vmatpush1.msra.mxu0 0.0
  %2978 = vmatprep.subr.mxu0 0.0
  %2979 = vmatpush1.msra.mxu0 0.0
  %2980 = vmatprep.subr.mxu0 0.0
  %2981 = vmatpush1.msra.mxu0 0.0
  %2982 = vmatprep.subr.mxu0 0.0
  %2983 = vmatpush1.msra.mxu0 0.0
  %2984 = vmatprep.subr.mxu0 0.0
  %2985 = vmatpush1.msra.mxu0 0.0
  %2986 = vmatprep.subr.mxu0 0.0
  %2987 = vmatpush1.msra.mxu0 0.0
  %2988 = vmatprep.subr.mxu0 0.0
  %2989 = vmatpush1.msra.mxu0 0.0
  %2990 = vmatprep.subr.mxu0 0.0
  %2991 = vmatpush1.msra.mxu0 0.0
  %2992 = vmatprep.subr.mxu0 0.0
  %2993 = vmatpush1.msra.mxu0 0.0
  %2994 = vmatprep.subr.mxu0 0.0
  %2995 = vmatpush1.msra.mxu0 0.0
  %2996 = vmatprep.subr.mxu0 0.0
  %2997 = vmatpush1.msra.mxu0 0.0
  %2998 = vmatprep.subr.mxu0 0.0
  %2999 = vmatpush1.msra.mxu0 0.0
  %3000 = vmatprep.subr.mxu0 0.0
  %3001 = vmatpush1.msra.mxu0 0.0
  %3002 = vmatprep.subr.mxu0 0.0
  %3003 = vmatpush1.msra.mxu0 0.0
  %3004 = vmatprep.subr.mxu0 0.0
  %3005 = vmatpush1.msra.mxu0 0.0
  %3006 = vmatprep.subr.mxu0 0.0
  %3007 = vmatpush1.msra.mxu0 0.0
  %3008 = vmatprep.subr.mxu0 0.0
  %3009 = vmatpush1.msra.mxu0 0.0
  %3010 = vmatprep.subr.mxu0 0.0
  %3011 = vmatpush1.msra.mxu0 0.0
  %3012 = vmatprep.subr.mxu0 0.0
  %3013 = vmatpush1.msra.mxu0 0.0
  %3014 = vmatprep.subr.mxu0 0.0
  %3015 = vmatpush1.msra.mxu0 0.0
  %3016 = vmatprep.subr.mxu0 0.0
  %3017 = vmatpush1.msra.mxu0 0.0
  %3018 = vmatprep.subr.mxu0 0.0
  %3019 = vmatpush1.msra.mxu0 0.0
  %3020 = vmatprep.subr.mxu0 0.0
  %3021 = vmatpush1.msra.mxu0 0.0
  %3022 = vmatprep.subr.mxu0 0.0
  %3023 = vmatpush1.msra.mxu0 0.0
  %3024 = vmatprep.subr.mxu0 0.0
  %3025 = vmatpush1.msra.mxu0 0.0
  %3026 = vmatprep.subr.mxu0 0.0
  %3027 = vmatpush1.msra.mxu0 0.0
  %3028 = vmatprep.subr.mxu0 0.0
  %3029 = vmatpush1.msra.mxu0 0.0
  %3030 = vmatprep.subr.mxu0 0.0
  %3031 = vmatpush1.msra.mxu0 0.0
  %3032 = vmatprep.mubr.f32.mxu0 0.0
  %3033 = vmatmul.mubr.f32.gmra.mrb[0].mxu0 %v2963
  %v3034 = vpop.f32.mrb[0].mxu0
  %v3035 = vadd.f32 %v2960, %v3034
  %v3036 = vpop.f32.mrb[0].mxu0
  %3037 = vmatprep.mubr.f32.mxu0 0.0
  %3038 = vmatmul.mubr.f32.gmra.mrb[0].mxu0 %v2966
  %v3039 = vpop.f32.mrb[0].mxu0
  %v3040 = vadd.f32 %v2960, %v3039
  %v3041 = vpop.f32.mrb[0].mxu0
  %3042 = vdwg.mxu0
  %vm3043 = vcmask 0
  %3044 = vst.msk [vmem:[%s14] sm:$0x1] %vm3043, %v3035
  %3045 = vst.msk [vmem:[%s14 + $0x1] sm:$0x1] %vm3043, %v3040
  // Predicated region
  $region58: #{sentiment_classifier_forward.1} parent=0 // pred_check
    _
  $region59: #{sentiment_classifier_forward.1} parent=0 // pred_check_branch
    %3047 = sbr.rel (0) target = $region61
  $region60: #{sentiment_classifier_forward.1} parent=0 // pred_region
    _
  $region61: #{sentiment_classifier_forward.1} parent=0 // pred_fallthru
    _
  // Predicated region
  $region62: #{sentiment_classifier_forward.1} parent=0 // pred_check
    _
  $region63: #{sentiment_classifier_forward.1} parent=0 // pred_check_branch
    %3049 = sbr.rel (0) target = $region65
  $region64: #{sentiment_classifier_forward.1} parent=0 // pred_region
    _
  $region65: #{sentiment_classifier_forward.1} parent=0 // pred_fallthru
    _

</llo_original>
